<compile_context>
chip_gen: v6e
topology: v6e:2x2x1
jax: 0.10.0
libtpu: 0.0.40
codegen_flags: <defaults>
</compile_context>

<pallas_src>
import numpy as np
import jax
import jax.numpy as jnp
from jax import lax
from jax.experimental import pallas as pl
from jax.experimental.pallas import tpu as pltpu

BN_EPS = 1e-5
NUM_CLASSES = 10


# --------------------- wrapper-side O(M) constant builders ------------------

def _build_masks(n, h, w):
    """(4, 10, M) f32.  For block li (stride s=2^li on the full-res grid):
    rows 0..8 = per-tap boundary masks, row 9 = active-column mask."""
    m = n * h * w
    idx = np.arange(m)
    y = (idx // w) % h
    x = idx % w
    out = np.zeros((4, 10, m), np.float32)
    for li in range(4):
        s = 1 << li
        for dy in range(3):
            for dx in range(3):
                yy = y + s * (dy - 1)
                xx = x + s * (dx - 1)
                out[li, dy * 3 + dx] = ((yy >= 0) & (yy < h) &
                                        (xx >= 0) & (xx < w)).astype(np.float32)
        out[li, 9] = ((y % s == 0) & (x % s == 0)).astype(np.float32)
    return out


def _build_avg(n, h, w):
    """(M, N) f32: AdaptiveAvgPool2d(1) over the stride-8 active columns of
    each image, with the 1/((H/8)*(W/8)) weight folded in."""
    s = 8
    m = n * h * w
    idx = np.arange(m)
    img = idx // (h * w)
    y = (idx // w) % h
    x = idx % w
    act = (y % s == 0) & (x % s == 0)
    a = np.zeros((m, n), np.float32)
    a[idx[act], img[act]] = 1.0 / ((h // s) * (w // s))
    return a


# --------------------------------- forward ----------------------------------

@jax.jit
def cnn_cifar_forward(x_nchw, params):
    n, cin0, h, w = x_nchw.shape
    assert h % 8 == 0 and w % 8 == 0, "needs 3 levels of 2x2 pooling"
    blocks = params["blocks"]
    hidden = [b["w_oihw"].shape[0] for b in blocks]          # [4, 8, 16, 32]
    cins = [cin0] + hidden[:-1]
    m = n * h * w
    pad = 8 * (w + 1)                 # max |tap offset| (block 4, stride 8)
    bufw = m + 2 * pad
    brows = max(cins)                 # widest conv input channel count
    kmax = 9 * max(cins)              # widest im2col K

    # ---- 7 packed operands (all O(M) or smaller) ----
    x2d = jnp.transpose(x_nchw, (1, 0, 2, 3)).reshape(cin0, m)          # (3, M)
    wall = jnp.zeros((4, hidden[-1], kmax), jnp.float32)
    for li, blk in enumerate(blocks):
        ci, co = cins[li], hidden[li]
        wk = jnp.transpose(blk["w_oihw"], (2, 3, 1, 0)).reshape(9 * ci, co).T
        wall = wall.at[li, :co, :9 * ci].set(wk)                        # (Cout, 9*Cin)
    bn = jnp.stack([jnp.concatenate([b["gamma"] for b in blocks]),
                    jnp.concatenate([b["beta"] for b in blocks])], axis=1)  # (60, 2)
    masks = jnp.asarray(_build_masks(n, h, w))                          # (4, 10, M)
    avg = jnp.asarray(_build_avg(n, h, w))                              # (M, N)
    wlin_t = params["w_lin"].T                                          # (10, C4)
    blin = params["b_lin"].reshape(-1, 1)                               # (10, 1)

    def kernel(x_ref, w_ref, msk_ref, bn_ref, avg_ref, wlin_ref, blin_ref,
               out_ref, buf_ref, im2_ref):
        # Zero the padded activation buffer once (pad strips stay 0 forever),
        # then load the input into its central region.
        buf_ref[...] = jnp.zeros_like(buf_ref)
        buf_ref[0:cin0, pad:pad + m] = x_ref[...]

        bn_off = 0
        y = None
        for li in range(4):
            ci, co = cins[li], hidden[li]
            s = 1 << li
            kdim = 9 * ci
            mblk = msk_ref[li]                                          # (10, M)

            # --- conv3x3: 9 statically shifted, boundary-masked windows of
            #     the padded buffer -> im2col scratch -> ONE K-dense matmul.
            for dy in range(3):
                for dx in range(3):
                    k = dy * 3 + dx
                    off = s * ((dy - 1) * w + (dx - 1))
                    tap = buf_ref[0:ci, pad + off:pad + off + m]        # (Cin, M)
                    im2_ref[k * ci:(k + 1) * ci, :] = tap * mblk[k:k + 1, :]
            wblk = w_ref[li][0:co, 0:kdim]                              # (Cout, 9Cin)
            z = jnp.dot(wblk, im2_ref[0:kdim, :],
                        preferred_element_type=jnp.float32)             # (Cout, M)

            # --- BatchNorm (batch stats over active columns only), folded to
            #     a single scale/shift, single-pass variance, fused ReLU.
            #     Conv bias is a per-channel constant -> cancels exactly.
            inv_cnt = 1.0 / float(n * (h // s) * (w // s))
            zm = z if li == 0 else z * mblk[9:10, :]
            mean = jnp.sum(zm, axis=1, keepdims=True) * inv_cnt
            ex2 = jnp.sum(zm * z, axis=1, keepdims=True) * inv_cnt
            var = ex2 - mean * mean
            gamma = bn_ref[bn_off:bn_off + co, 0:1]
            beta = bn_ref[bn_off:bn_off + co, 1:2]
            scale = gamma * lax.rsqrt(var + BN_EPS)
            shift = beta - scale * mean
            y = jnp.maximum(scale * z + shift, 0.0)                     # (Cout, M)

            if li < 3:
                # --- fused 2x2 max-pool on the full-resolution sparse grid:
                # write y, read the other 3 window members at static offsets,
                # store the pooled activation as the next block's input.
                buf_ref[0:co, pad:pad + m] = y
                p01 = buf_ref[0:co, pad + s:pad + s + m]
                p10 = buf_ref[0:co, pad + s * w:pad + s * w + m]
                p11 = buf_ref[0:co, pad + s * w + s:pad + s * w + s + m]
                a = jnp.maximum(jnp.maximum(y, p01), jnp.maximum(p10, p11))
                buf_ref[0:co, pad:pad + m] = a
            bn_off += co

        # --- head: AdaptiveAvgPool2d(1) as a masked averaging matmul + Linear.
        feat = jnp.dot(y, avg_ref[...], preferred_element_type=jnp.float32)   # (C4, N)
        out_ref[...] = (jnp.dot(wlin_ref[...], feat,
                                preferred_element_type=jnp.float32)
                        + blin_ref[...])                                       # (10, N)

    out_t = pl.pallas_call(
        kernel,
        out_shape=jax.ShapeDtypeStruct((NUM_CLASSES, n), jnp.float32),
        scratch_shapes=[pltpu.VMEM((brows, bufw), jnp.float32),   # padded activations
                        pltpu.VMEM((kmax, m), jnp.float32)],      # im2col staging
    )(x2d, wall, masks, bn, avg, wlin_t, blin)
    return out_t.T                                                      # (N, 10)


# -------------------------- pure-JAX reference ------------------------------

def reference_forward(x_nchw, params):
    x = x_nchw
    for li, blk in enumerate(params["blocks"]):
        z = lax.conv_general_dilated(
            x, blk["w_oihw"], window_strides=(1, 1), padding=((1, 1), (1, 1)),
            dimension_numbers=("NCHW", "OIHW", "NCHW"),
            precision=lax.Precision.HIGHEST)
        z = z + blk["b"].reshape(1, -1, 1, 1)
        mean = jnp.mean(z, axis=(0, 2, 3), keepdims=True)
        var = jnp.mean(jnp.square(z - mean), axis=(0, 2, 3), keepdims=True)
        z = (blk["gamma"].reshape(1, -1, 1, 1) * (z - mean) * lax.rsqrt(var + BN_EPS)
             + blk["beta"].reshape(1, -1, 1, 1))
        z = jnp.maximum(z, 0.0)
        if li != 3:
            z = lax.reduce_window(z, -jnp.inf, lax.max,
                                  (1, 1, 2, 2), (1, 1, 2, 2), "VALID")
        x = z
    feat = jnp.mean(x, axis=(2, 3))                                     # (N, C)
    return jnp.dot(feat, params["w_lin"],
                   precision=lax.Precision.HIGHEST) + params["b_lin"]


# ------------------------------- parameters ---------------------------------

def init_params(key, hidden_size):
    cins = [3] + hidden_size[:-1]
    blocks = []
    for cin, cout in zip(cins, hidden_size):
        key, k1, k2, k3, k4 = jax.random.split(key, 5)
        blocks.append(dict(
            w_oihw=0.1 * jax.random.normal(k1, (cout, cin, 3, 3), jnp.float32),
            b=0.1 * jax.random.normal(k2, (cout,), jnp.float32),
            gamma=1.0 + 0.1 * jax.random.normal(k3, (cout,), jnp.float32),
            beta=0.1 * jax.random.normal(k4, (cout,), jnp.float32),
        ))
    key, k1, k2 = jax.random.split(key, 3)
    w_lin = 0.1 * jax.random.normal(k1, (hidden_size[-1], NUM_CLASSES), jnp.float32)
    b_lin = 0.1 * jax.random.normal(k2, (NUM_CLASSES,), jnp.float32)
    return dict(blocks=blocks, w_lin=w_lin, b_lin=b_lin)


# ----------------------------------- main ------------------------------------

if __name__ == "__main__":
    model_rate = 1.0 / 16.0
    hidden_size = [int(np.ceil(i * model_rate)) for i in [64, 128, 256, 512]]  # [4,8,16,32]

    key = jax.random.PRNGKey(0)
    key, kx = jax.random.split(key)
    x = jax.random.normal(kx, (2, 3, 16, 16), jnp.float32)   # small NCHW input

    params = init_params(key, hidden_size)

    out = jax.block_until_ready(cnn_cifar_forward(x, params))
    ref = jax.block_until_ready(reference_forward(x, params))

    assert out.shape == (2, NUM_CLASSES), out.shape
    assert bool(jnp.all(jnp.isfinite(out)))
    np.testing.assert_allclose(np.asarray(out), np.asarray(ref), rtol=2e-2, atol=2e-2)

    print("KERNEL_OK")
</pallas_src>

<mosaic_0001>
module attributes {stable_mosaic.version = 11 : i64} {
  func.func @kernel(%arg0: memref<3x512xf32, #tpu.memory_space<vmem>>, %arg1: memref<4x32x144xf32, #tpu.memory_space<vmem>>, %arg2: memref<4x10x512xf32, #tpu.memory_space<vmem>>, %arg3: memref<60x2xf32, #tpu.memory_space<vmem>>, %arg4: memref<512x2xf32, #tpu.memory_space<vmem>>, %arg5: memref<10x32xf32, #tpu.memory_space<vmem>>, %arg6: memref<10x1xf32, #tpu.memory_space<vmem>>, %arg7: memref<10x2xf32, #tpu.memory_space<vmem>>, %arg8: memref<16x784xf32, #tpu.memory_space<vmem>>, %arg9: memref<144x512xf32, #tpu.memory_space<vmem>>) attributes {dimension_semantics = [], scalar_prefetch = 0 : i64, scratch_operands = 2 : i64, tpu.core_type = #tpu.core_type<tc>} {
    %cst = arith.constant 0.000000e+00 : f32
    %0 = vector.broadcast %cst : f32 to vector<16x784xf32>
    %c0 = arith.constant 0 : index
    %c0_0 = arith.constant 0 : index
    %1 = vector.load %arg8[%c0, %c0_0] : memref<16x784xf32, #tpu.memory_space<vmem>>, vector<16x784xf32>
    tpu.vector_store %arg8[%c0, %c0_0], %0 {strides = array<i32>} : memref<16x784xf32, #tpu.memory_space<vmem>>, vector<16x784xf32>,
    %c0_1 = arith.constant 0 : index
    %c0_2 = arith.constant 0 : index
    %2 = vector.load %arg0[%c0_1, %c0_2] : memref<3x512xf32, #tpu.memory_space<vmem>>, vector<3x512xf32>
    %c0_3 = arith.constant 0 : index
    %c136 = arith.constant 136 : index
    %3 = vector.load %arg8[%c0_3, %c136] : memref<16x784xf32, #tpu.memory_space<vmem>>, vector<3x512xf32>
    tpu.vector_store %arg8[%c0_3, %c136], %2 {strides = array<i32>} : memref<16x784xf32, #tpu.memory_space<vmem>>, vector<3x512xf32>,
    %c0_4 = arith.constant 0 : index
    %c0_5 = arith.constant 0 : index
    %c0_6 = arith.constant 0 : index
    %4 = vector.load %arg2[%c0_4, %c0_5, %c0_6] : memref<4x10x512xf32, #tpu.memory_space<vmem>>, vector<1x10x512xf32>
    %5 = vector.shape_cast %4 : vector<1x10x512xf32> to vector<10x512xf32>
    %c0_7 = arith.constant 0 : index
    %c119 = arith.constant 119 : index
    %6 = vector.load %arg8[%c0_7, %c119] : memref<16x784xf32, #tpu.memory_space<vmem>>, vector<3x512xf32>
    %7 = vector.extract_strided_slice %5 {offsets = [0, 0], sizes = [1, 512], strides = [1, 1]} : vector<10x512xf32> to vector<1x512xf32>
    %8 = vector.broadcast %7 : vector<1x512xf32> to vector<3x512xf32>
    %9 = arith.mulf %6, %8 : vector<3x512xf32>
    %c0_8 = arith.constant 0 : index
    %c0_9 = arith.constant 0 : index
    %10 = vector.load %arg9[%c0_8, %c0_9] : memref<144x512xf32, #tpu.memory_space<vmem>>, vector<3x512xf32>
    tpu.vector_store %arg9[%c0_8, %c0_9], %9 {strides = array<i32>} : memref<144x512xf32, #tpu.memory_space<vmem>>, vector<3x512xf32>,
    %c0_10 = arith.constant 0 : index
    %c120 = arith.constant 120 : index
    %11 = vector.load %arg8[%c0_10, %c120] : memref<16x784xf32, #tpu.memory_space<vmem>>, vector<3x512xf32>
    %12 = vector.extract_strided_slice %5 {offsets = [1, 0], sizes = [1, 512], strides = [1, 1]} : vector<10x512xf32> to vector<1x512xf32>
    %13 = vector.broadcast %12 : vector<1x512xf32> to vector<3x512xf32>
    %14 = arith.mulf %11, %13 : vector<3x512xf32>
    %c3 = arith.constant 3 : index
    %c0_11 = arith.constant 0 : index
    %15 = vector.load %arg9[%c3, %c0_11] : memref<144x512xf32, #tpu.memory_space<vmem>>, vector<3x512xf32>
    tpu.vector_store %arg9[%c3, %c0_11], %14 {strides = array<i32>} : memref<144x512xf32, #tpu.memory_space<vmem>>, vector<3x512xf32>,
    %c0_12 = arith.constant 0 : index
    %c121 = arith.constant 121 : index
    %16 = vector.load %arg8[%c0_12, %c121] : memref<16x784xf32, #tpu.memory_space<vmem>>, vector<3x512xf32>
    %17 = vector.extract_strided_slice %5 {offsets = [2, 0], sizes = [1, 512], strides = [1, 1]} : vector<10x512xf32> to vector<1x512xf32>
    %18 = vector.broadcast %17 : vector<1x512xf32> to vector<3x512xf32>
    %19 = arith.mulf %16, %18 : vector<3x512xf32>
    %c6 = arith.constant 6 : index
    %c0_13 = arith.constant 0 : index
    %20 = vector.load %arg9[%c6, %c0_13] : memref<144x512xf32, #tpu.memory_space<vmem>>, vector<3x512xf32>
    tpu.vector_store %arg9[%c6, %c0_13], %19 {strides = array<i32>} : memref<144x512xf32, #tpu.memory_space<vmem>>, vector<3x512xf32>,
    %c0_14 = arith.constant 0 : index
    %c135 = arith.constant 135 : index
    %21 = vector.load %arg8[%c0_14, %c135] : memref<16x784xf32, #tpu.memory_space<vmem>>, vector<3x512xf32>
    %22 = vector.extract_strided_slice %5 {offsets = [3, 0], sizes = [1, 512], strides = [1, 1]} : vector<10x512xf32> to vector<1x512xf32>
    %23 = vector.broadcast %22 : vector<1x512xf32> to vector<3x512xf32>
    %24 = arith.mulf %21, %23 : vector<3x512xf32>
    %c9 = arith.constant 9 : index
    %c0_15 = arith.constant 0 : index
    %25 = vector.load %arg9[%c9, %c0_15] : memref<144x512xf32, #tpu.memory_space<vmem>>, vector<3x512xf32>
    tpu.vector_store %arg9[%c9, %c0_15], %24 {strides = array<i32>} : memref<144x512xf32, #tpu.memory_space<vmem>>, vector<3x512xf32>,
    %c0_16 = arith.constant 0 : index
    %c136_17 = arith.constant 136 : index
    %26 = vector.load %arg8[%c0_16, %c136_17] : memref<16x784xf32, #tpu.memory_space<vmem>>, vector<3x512xf32>
    %27 = vector.extract_strided_slice %5 {offsets = [4, 0], sizes = [1, 512], strides = [1, 1]} : vector<10x512xf32> to vector<1x512xf32>
    %28 = vector.broadcast %27 : vector<1x512xf32> to vector<3x512xf32>
    %29 = arith.mulf %26, %28 : vector<3x512xf32>
    %c12 = arith.constant 12 : index
    %c0_18 = arith.constant 0 : index
    %30 = vector.load %arg9[%c12, %c0_18] : memref<144x512xf32, #tpu.memory_space<vmem>>, vector<3x512xf32>
    tpu.vector_store %arg9[%c12, %c0_18], %29 {strides = array<i32>} : memref<144x512xf32, #tpu.memory_space<vmem>>, vector<3x512xf32>,
    %c0_19 = arith.constant 0 : index
    %c137 = arith.constant 137 : index
    %31 = vector.load %arg8[%c0_19, %c137] : memref<16x784xf32, #tpu.memory_space<vmem>>, vector<3x512xf32>
    %32 = vector.extract_strided_slice %5 {offsets = [5, 0], sizes = [1, 512], strides = [1, 1]} : vector<10x512xf32> to vector<1x512xf32>
    %33 = vector.broadcast %32 : vector<1x512xf32> to vector<3x512xf32>
    %34 = arith.mulf %31, %33 : vector<3x512xf32>
    %c15 = arith.constant 15 : index
    %c0_20 = arith.constant 0 : index
    %35 = vector.load %arg9[%c15, %c0_20] : memref<144x512xf32, #tpu.memory_space<vmem>>, vector<3x512xf32>
    tpu.vector_store %arg9[%c15, %c0_20], %34 {strides = array<i32>} : memref<144x512xf32, #tpu.memory_space<vmem>>, vector<3x512xf32>,
    %c0_21 = arith.constant 0 : index
    %c151 = arith.constant 151 : index
    %36 = vector.load %arg8[%c0_21, %c151] : memref<16x784xf32, #tpu.memory_space<vmem>>, vector<3x512xf32>
    %37 = vector.extract_strided_slice %5 {offsets = [6, 0], sizes = [1, 512], strides = [1, 1]} : vector<10x512xf32> to vector<1x512xf32>
    %38 = vector.broadcast %37 : vector<1x512xf32> to vector<3x512xf32>
    %39 = arith.mulf %36, %38 : vector<3x512xf32>
    %c18 = arith.constant 18 : index
    %c0_22 = arith.constant 0 : index
    %40 = vector.load %arg9[%c18, %c0_22] : memref<144x512xf32, #tpu.memory_space<vmem>>, vector<3x512xf32>
    tpu.vector_store %arg9[%c18, %c0_22], %39 {strides = array<i32>} : memref<144x512xf32, #tpu.memory_space<vmem>>, vector<3x512xf32>,
    %c0_23 = arith.constant 0 : index
    %c152 = arith.constant 152 : index
    %41 = vector.load %arg8[%c0_23, %c152] : memref<16x784xf32, #tpu.memory_space<vmem>>, vector<3x512xf32>
    %42 = vector.extract_strided_slice %5 {offsets = [7, 0], sizes = [1, 512], strides = [1, 1]} : vector<10x512xf32> to vector<1x512xf32>
    %43 = vector.broadcast %42 : vector<1x512xf32> to vector<3x512xf32>
    %44 = arith.mulf %41, %43 : vector<3x512xf32>
    %c21 = arith.constant 21 : index
    %c0_24 = arith.constant 0 : index
    %45 = vector.load %arg9[%c21, %c0_24] : memref<144x512xf32, #tpu.memory_space<vmem>>, vector<3x512xf32>
    tpu.vector_store %arg9[%c21, %c0_24], %44 {strides = array<i32>} : memref<144x512xf32, #tpu.memory_space<vmem>>, vector<3x512xf32>,
    %c0_25 = arith.constant 0 : index
    %c153 = arith.constant 153 : index
    %46 = vector.load %arg8[%c0_25, %c153] : memref<16x784xf32, #tpu.memory_space<vmem>>, vector<3x512xf32>
    %47 = vector.extract_strided_slice %5 {offsets = [8, 0], sizes = [1, 512], strides = [1, 1]} : vector<10x512xf32> to vector<1x512xf32>
    %48 = vector.broadcast %47 : vector<1x512xf32> to vector<3x512xf32>
    %49 = arith.mulf %46, %48 : vector<3x512xf32>
    %c24 = arith.constant 24 : index
    %c0_26 = arith.constant 0 : index
    %50 = vector.load %arg9[%c24, %c0_26] : memref<144x512xf32, #tpu.memory_space<vmem>>, vector<3x512xf32>
    tpu.vector_store %arg9[%c24, %c0_26], %49 {strides = array<i32>} : memref<144x512xf32, #tpu.memory_space<vmem>>, vector<3x512xf32>,
    %c0_27 = arith.constant 0 : index
    %c0_28 = arith.constant 0 : index
    %c0_29 = arith.constant 0 : index
    %51 = vector.load %arg1[%c0_27, %c0_28, %c0_29] : memref<4x32x144xf32, #tpu.memory_space<vmem>>, vector<1x32x144xf32>
    %52 = vector.shape_cast %51 : vector<1x32x144xf32> to vector<32x144xf32>
    %53 = vector.extract_strided_slice %52 {offsets = [0, 0], sizes = [4, 27], strides = [1, 1]} : vector<32x144xf32> to vector<4x27xf32>
    %c0_30 = arith.constant 0 : index
    %c0_31 = arith.constant 0 : index
    %54 = vector.load %arg9[%c0_30, %c0_31] : memref<144x512xf32, #tpu.memory_space<vmem>>, vector<27x512xf32>
    %cst_32 = arith.constant dense<0.000000e+00> : vector<4x512xf32>
    %55 = tpu.matmul %53, %54, %cst_32 {dimension_numbers = #tpu.dot_dimension_numbers<[1], [0], [0], [1], [0, 0, 1, 1], [], []>} : vector<4x27xf32>, vector<27x512xf32>, vector<4x512xf32> -> vector<4x512xf32>
    %cst_33 = arith.constant dense<0.000000e+00> : vector<4xf32>
    %56 = vector.multi_reduction <add>, %55, %cst_33 [1] : vector<4x512xf32> to vector<4xf32>
    %57 = vector.shape_cast %56 : vector<4xf32> to vector<4x1xf32>
    %cst_34 = arith.constant 0.001953125 : f32
    %58 = vector.broadcast %cst_34 : f32 to vector<4x1xf32>
    %59 = arith.mulf %57, %58 : vector<4x1xf32>
    %60 = arith.mulf %55, %55 : vector<4x512xf32>
    %cst_35 = arith.constant dense<0.000000e+00> : vector<4xf32>
    %61 = vector.multi_reduction <add>, %60, %cst_35 [1] : vector<4x512xf32> to vector<4xf32>
    %62 = vector.shape_cast %61 : vector<4xf32> to vector<4x1xf32>
    %cst_36 = arith.constant 0.001953125 : f32
    %63 = vector.broadcast %cst_36 : f32 to vector<4x1xf32>
    %64 = arith.mulf %62, %63 : vector<4x1xf32>
    %65 = arith.mulf %59, %59 : vector<4x1xf32>
    %66 = arith.subf %64, %65 : vector<4x1xf32>
    %c0_37 = arith.constant 0 : index
    %c0_38 = arith.constant 0 : index
    %67 = vector.load %arg3[%c0_37, %c0_38] : memref<60x2xf32, #tpu.memory_space<vmem>>, vector<4x1xf32>
    %c0_39 = arith.constant 0 : index
    %c1 = arith.constant 1 : index
    %68 = vector.load %arg3[%c0_39, %c1] : memref<60x2xf32, #tpu.memory_space<vmem>>, vector<4x1xf32>
    %cst_40 = arith.constant 9.99999974E-6 : f32
    %69 = vector.broadcast %cst_40 : f32 to vector<4x1xf32>
    %70 = arith.addf %66, %69 : vector<4x1xf32>
    %71 = math.rsqrt %70 : vector<4x1xf32>
    %72 = arith.mulf %67, %71 : vector<4x1xf32>
    %73 = arith.mulf %72, %59 : vector<4x1xf32>
    %74 = arith.subf %68, %73 : vector<4x1xf32>
    %75 = vector.broadcast %72 : vector<4x1xf32> to vector<4x512xf32>
    %76 = arith.mulf %75, %55 : vector<4x512xf32>
    %77 = vector.broadcast %74 : vector<4x1xf32> to vector<4x512xf32>
    %78 = arith.addf %76, %77 : vector<4x512xf32>
    %cst_41 = arith.constant 0.000000e+00 : f32
    %79 = vector.broadcast %cst_41 : f32 to vector<4x512xf32>
    %80 = arith.maximumf %78, %79 : vector<4x512xf32>
    %c0_42 = arith.constant 0 : index
    %c136_43 = arith.constant 136 : index
    %81 = vector.load %arg8[%c0_42, %c136_43] : memref<16x784xf32, #tpu.memory_space<vmem>>, vector<4x512xf32>
    tpu.vector_store %arg8[%c0_42, %c136_43], %80 {strides = array<i32>} : memref<16x784xf32, #tpu.memory_space<vmem>>, vector<4x512xf32>,
    %c0_44 = arith.constant 0 : index
    %c137_45 = arith.constant 137 : index
    %82 = vector.load %arg8[%c0_44, %c137_45] : memref<16x784xf32, #tpu.memory_space<vmem>>, vector<4x512xf32>
    %c0_46 = arith.constant 0 : index
    %c152_47 = arith.constant 152 : index
    %83 = vector.load %arg8[%c0_46, %c152_47] : memref<16x784xf32, #tpu.memory_space<vmem>>, vector<4x512xf32>
    %c0_48 = arith.constant 0 : index
    %c153_49 = arith.constant 153 : index
    %84 = vector.load %arg8[%c0_48, %c153_49] : memref<16x784xf32, #tpu.memory_space<vmem>>, vector<4x512xf32>
    %85 = arith.maximumf %80, %82 : vector<4x512xf32>
    %86 = arith.maximumf %83, %84 : vector<4x512xf32>
    %87 = arith.maximumf %85, %86 : vector<4x512xf32>
    %c0_50 = arith.constant 0 : index
    %c136_51 = arith.constant 136 : index
    %88 = vector.load %arg8[%c0_50, %c136_51] : memref<16x784xf32, #tpu.memory_space<vmem>>, vector<4x512xf32>
    tpu.vector_store %arg8[%c0_50, %c136_51], %87 {strides = array<i32>} : memref<16x784xf32, #tpu.memory_space<vmem>>, vector<4x512xf32>,
    %c1_52 = arith.constant 1 : index
    %c0_53 = arith.constant 0 : index
    %c0_54 = arith.constant 0 : index
    %89 = vector.load %arg2[%c1_52, %c0_53, %c0_54] : memref<4x10x512xf32, #tpu.memory_space<vmem>>, vector<1x10x512xf32>
    %90 = vector.shape_cast %89 : vector<1x10x512xf32> to vector<10x512xf32>
    %c0_55 = arith.constant 0 : index
    %c102 = arith.constant 102 : index
    %91 = vector.load %arg8[%c0_55, %c102] : memref<16x784xf32, #tpu.memory_space<vmem>>, vector<4x512xf32>
    %92 = vector.extract_strided_slice %90 {offsets = [0, 0], sizes = [1, 512], strides = [1, 1]} : vector<10x512xf32> to vector<1x512xf32>
    %93 = vector.broadcast %92 : vector<1x512xf32> to vector<4x512xf32>
    %94 = arith.mulf %91, %93 : vector<4x512xf32>
    %c0_56 = arith.constant 0 : index
    %c0_57 = arith.constant 0 : index
    %95 = vector.load %arg9[%c0_56, %c0_57] : memref<144x512xf32, #tpu.memory_space<vmem>>, vector<4x512xf32>
    tpu.vector_store %arg9[%c0_56, %c0_57], %94 {strides = array<i32>} : memref<144x512xf32, #tpu.memory_space<vmem>>, vector<4x512xf32>,
    %c0_58 = arith.constant 0 : index
    %c104 = arith.constant 104 : index
    %96 = vector.load %arg8[%c0_58, %c104] : memref<16x784xf32, #tpu.memory_space<vmem>>, vector<4x512xf32>
    %97 = vector.extract_strided_slice %90 {offsets = [1, 0], sizes = [1, 512], strides = [1, 1]} : vector<10x512xf32> to vector<1x512xf32>
    %98 = vector.broadcast %97 : vector<1x512xf32> to vector<4x512xf32>
    %99 = arith.mulf %96, %98 : vector<4x512xf32>
    %c4 = arith.constant 4 : index
    %c0_59 = arith.constant 0 : index
    %100 = vector.load %arg9[%c4, %c0_59] : memref<144x512xf32, #tpu.memory_space<vmem>>, vector<4x512xf32>
    tpu.vector_store %arg9[%c4, %c0_59], %99 {strides = array<i32>} : memref<144x512xf32, #tpu.memory_space<vmem>>, vector<4x512xf32>,
    %c0_60 = arith.constant 0 : index
    %c106 = arith.constant 106 : index
    %101 = vector.load %arg8[%c0_60, %c106] : memref<16x784xf32, #tpu.memory_space<vmem>>, vector<4x512xf32>
    %102 = vector.extract_strided_slice %90 {offsets = [2, 0], sizes = [1, 512], strides = [1, 1]} : vector<10x512xf32> to vector<1x512xf32>
    %103 = vector.broadcast %102 : vector<1x512xf32> to vector<4x512xf32>
    %104 = arith.mulf %101, %103 : vector<4x512xf32>
    %c8 = arith.constant 8 : index
    %c0_61 = arith.constant 0 : index
    %105 = vector.load %arg9[%c8, %c0_61] : memref<144x512xf32, #tpu.memory_space<vmem>>, vector<4x512xf32>
    tpu.vector_store %arg9[%c8, %c0_61], %104 {strides = array<i32>} : memref<144x512xf32, #tpu.memory_space<vmem>>, vector<4x512xf32>,
    %c0_62 = arith.constant 0 : index
    %c134 = arith.constant 134 : index
    %106 = vector.load %arg8[%c0_62, %c134] : memref<16x784xf32, #tpu.memory_space<vmem>>, vector<4x512xf32>
    %107 = vector.extract_strided_slice %90 {offsets = [3, 0], sizes = [1, 512], strides = [1, 1]} : vector<10x512xf32> to vector<1x512xf32>
    %108 = vector.broadcast %107 : vector<1x512xf32> to vector<4x512xf32>
    %109 = arith.mulf %106, %108 : vector<4x512xf32>
    %c12_63 = arith.constant 12 : index
    %c0_64 = arith.constant 0 : index
    %110 = vector.load %arg9[%c12_63, %c0_64] : memref<144x512xf32, #tpu.memory_space<vmem>>, vector<4x512xf32>
    tpu.vector_store %arg9[%c12_63, %c0_64], %109 {strides = array<i32>} : memref<144x512xf32, #tpu.memory_space<vmem>>, vector<4x512xf32>,
    %c0_65 = arith.constant 0 : index
    %c136_66 = arith.constant 136 : index
    %111 = vector.load %arg8[%c0_65, %c136_66] : memref<16x784xf32, #tpu.memory_space<vmem>>, vector<4x512xf32>
    %112 = vector.extract_strided_slice %90 {offsets = [4, 0], sizes = [1, 512], strides = [1, 1]} : vector<10x512xf32> to vector<1x512xf32>
    %113 = vector.broadcast %112 : vector<1x512xf32> to vector<4x512xf32>
    %114 = arith.mulf %111, %113 : vector<4x512xf32>
    %c16 = arith.constant 16 : index
    %c0_67 = arith.constant 0 : index
    %115 = vector.load %arg9[%c16, %c0_67] : memref<144x512xf32, #tpu.memory_space<vmem>>, vector<4x512xf32>
    tpu.vector_store %arg9[%c16, %c0_67], %114 {strides = array<i32>} : memref<144x512xf32, #tpu.memory_space<vmem>>, vector<4x512xf32>,
    %c0_68 = arith.constant 0 : index
    %c138 = arith.constant 138 : index
    %116 = vector.load %arg8[%c0_68, %c138] : memref<16x784xf32, #tpu.memory_space<vmem>>, vector<4x512xf32>
    %117 = vector.extract_strided_slice %90 {offsets = [5, 0], sizes = [1, 512], strides = [1, 1]} : vector<10x512xf32> to vector<1x512xf32>
    %118 = vector.broadcast %117 : vector<1x512xf32> to vector<4x512xf32>
    %119 = arith.mulf %116, %118 : vector<4x512xf32>
    %c20 = arith.constant 20 : index
    %c0_69 = arith.constant 0 : index
    %120 = vector.load %arg9[%c20, %c0_69] : memref<144x512xf32, #tpu.memory_space<vmem>>, vector<4x512xf32>
    tpu.vector_store %arg9[%c20, %c0_69], %119 {strides = array<i32>} : memref<144x512xf32, #tpu.memory_space<vmem>>, vector<4x512xf32>,
    %c0_70 = arith.constant 0 : index
    %c166 = arith.constant 166 : index
    %121 = vector.load %arg8[%c0_70, %c166] : memref<16x784xf32, #tpu.memory_space<vmem>>, vector<4x512xf32>
    %122 = vector.extract_strided_slice %90 {offsets = [6, 0], sizes = [1, 512], strides = [1, 1]} : vector<10x512xf32> to vector<1x512xf32>
    %123 = vector.broadcast %122 : vector<1x512xf32> to vector<4x512xf32>
    %124 = arith.mulf %121, %123 : vector<4x512xf32>
    %c24_71 = arith.constant 24 : index
    %c0_72 = arith.constant 0 : index
    %125 = vector.load %arg9[%c24_71, %c0_72] : memref<144x512xf32, #tpu.memory_space<vmem>>, vector<4x512xf32>
    tpu.vector_store %arg9[%c24_71, %c0_72], %124 {strides = array<i32>} : memref<144x512xf32, #tpu.memory_space<vmem>>, vector<4x512xf32>,
    %c0_73 = arith.constant 0 : index
    %c168 = arith.constant 168 : index
    %126 = vector.load %arg8[%c0_73, %c168] : memref<16x784xf32, #tpu.memory_space<vmem>>, vector<4x512xf32>
    %127 = vector.extract_strided_slice %90 {offsets = [7, 0], sizes = [1, 512], strides = [1, 1]} : vector<10x512xf32> to vector<1x512xf32>
    %128 = vector.broadcast %127 : vector<1x512xf32> to vector<4x512xf32>
    %129 = arith.mulf %126, %128 : vector<4x512xf32>
    %c28 = arith.constant 28 : index
    %c0_74 = arith.constant 0 : index
    %130 = vector.load %arg9[%c28, %c0_74] : memref<144x512xf32, #tpu.memory_space<vmem>>, vector<4x512xf32>
    tpu.vector_store %arg9[%c28, %c0_74], %129 {strides = array<i32>} : memref<144x512xf32, #tpu.memory_space<vmem>>, vector<4x512xf32>,
    %c0_75 = arith.constant 0 : index
    %c170 = arith.constant 170 : index
    %131 = vector.load %arg8[%c0_75, %c170] : memref<16x784xf32, #tpu.memory_space<vmem>>, vector<4x512xf32>
    %132 = vector.extract_strided_slice %90 {offsets = [8, 0], sizes = [1, 512], strides = [1, 1]} : vector<10x512xf32> to vector<1x512xf32>
    %133 = vector.broadcast %132 : vector<1x512xf32> to vector<4x512xf32>
    %134 = arith.mulf %131, %133 : vector<4x512xf32>
    %c32 = arith.constant 32 : index
    %c0_76 = arith.constant 0 : index
    %135 = vector.load %arg9[%c32, %c0_76] : memref<144x512xf32, #tpu.memory_space<vmem>>, vector<4x512xf32>
    tpu.vector_store %arg9[%c32, %c0_76], %134 {strides = array<i32>} : memref<144x512xf32, #tpu.memory_space<vmem>>, vector<4x512xf32>,
    %c1_77 = arith.constant 1 : index
    %c0_78 = arith.constant 0 : index
    %c0_79 = arith.constant 0 : index
    %136 = vector.load %arg1[%c1_77, %c0_78, %c0_79] : memref<4x32x144xf32, #tpu.memory_space<vmem>>, vector<1x32x144xf32>
    %137 = vector.shape_cast %136 : vector<1x32x144xf32> to vector<32x144xf32>
    %138 = vector.extract_strided_slice %137 {offsets = [0, 0], sizes = [8, 36], strides = [1, 1]} : vector<32x144xf32> to vector<8x36xf32>
    %c0_80 = arith.constant 0 : index
    %c0_81 = arith.constant 0 : index
    %139 = vector.load %arg9[%c0_80, %c0_81] : memref<144x512xf32, #tpu.memory_space<vmem>>, vector<36x512xf32>
    %cst_82 = arith.constant dense<0.000000e+00> : vector<8x512xf32>
    %140 = tpu.matmul %138, %139, %cst_82 {dimension_numbers = #tpu.dot_dimension_numbers<[1], [0], [0], [1], [0, 0, 1, 1], [], []>} : vector<8x36xf32>, vector<36x512xf32>, vector<8x512xf32> -> vector<8x512xf32>
    %141 = vector.extract_strided_slice %90 {offsets = [9, 0], sizes = [1, 512], strides = [1, 1]} : vector<10x512xf32> to vector<1x512xf32>
    %142 = vector.broadcast %141 : vector<1x512xf32> to vector<8x512xf32>
    %143 = arith.mulf %140, %142 : vector<8x512xf32>
    %cst_83 = arith.constant dense<0.000000e+00> : vector<8xf32>
    %144 = vector.multi_reduction <add>, %143, %cst_83 [1] : vector<8x512xf32> to vector<8xf32>
    %145 = vector.shape_cast %144 : vector<8xf32> to vector<8x1xf32>
    %cst_84 = arith.constant 7.812500e-03 : f32
    %146 = vector.broadcast %cst_84 : f32 to vector<8x1xf32>
    %147 = arith.mulf %145, %146 : vector<8x1xf32>
    %148 = arith.mulf %143, %140 : vector<8x512xf32>
    %cst_85 = arith.constant dense<0.000000e+00> : vector<8xf32>
    %149 = vector.multi_reduction <add>, %148, %cst_85 [1] : vector<8x512xf32> to vector<8xf32>
    %150 = vector.shape_cast %149 : vector<8xf32> to vector<8x1xf32>
    %cst_86 = arith.constant 7.812500e-03 : f32
    %151 = vector.broadcast %cst_86 : f32 to vector<8x1xf32>
    %152 = arith.mulf %150, %151 : vector<8x1xf32>
    %153 = arith.mulf %147, %147 : vector<8x1xf32>
    %154 = arith.subf %152, %153 : vector<8x1xf32>
    %c4_87 = arith.constant 4 : index
    %c0_88 = arith.constant 0 : index
    %155 = vector.load %arg3[%c4_87, %c0_88] : memref<60x2xf32, #tpu.memory_space<vmem>>, vector<8x1xf32>
    %c4_89 = arith.constant 4 : index
    %c1_90 = arith.constant 1 : index
    %156 = vector.load %arg3[%c4_89, %c1_90] : memref<60x2xf32, #tpu.memory_space<vmem>>, vector<8x1xf32>
    %cst_91 = arith.constant 9.99999974E-6 : f32
    %157 = vector.broadcast %cst_91 : f32 to vector<8x1xf32>
    %158 = arith.addf %154, %157 : vector<8x1xf32>
    %159 = math.rsqrt %158 : vector<8x1xf32>
    %160 = arith.mulf %155, %159 : vector<8x1xf32>
    %161 = arith.mulf %160, %147 : vector<8x1xf32>
    %162 = arith.subf %156, %161 : vector<8x1xf32>
    %163 = vector.broadcast %160 : vector<8x1xf32> to vector<8x512xf32>
    %164 = arith.mulf %163, %140 : vector<8x512xf32>
    %165 = vector.broadcast %162 : vector<8x1xf32> to vector<8x512xf32>
    %166 = arith.addf %164, %165 : vector<8x512xf32>
    %cst_92 = arith.constant 0.000000e+00 : f32
    %167 = vector.broadcast %cst_92 : f32 to vector<8x512xf32>
    %168 = arith.maximumf %166, %167 : vector<8x512xf32>
    %c0_93 = arith.constant 0 : index
    %c136_94 = arith.constant 136 : index
    %169 = vector.load %arg8[%c0_93, %c136_94] : memref<16x784xf32, #tpu.memory_space<vmem>>, vector<8x512xf32>
    tpu.vector_store %arg8[%c0_93, %c136_94], %168 {strides = array<i32>} : memref<16x784xf32, #tpu.memory_space<vmem>>, vector<8x512xf32>,
    %c0_95 = arith.constant 0 : index
    %c138_96 = arith.constant 138 : index
    %170 = vector.load %arg8[%c0_95, %c138_96] : memref<16x784xf32, #tpu.memory_space<vmem>>, vector<8x512xf32>
    %c0_97 = arith.constant 0 : index
    %c168_98 = arith.constant 168 : index
    %171 = vector.load %arg8[%c0_97, %c168_98] : memref<16x784xf32, #tpu.memory_space<vmem>>, vector<8x512xf32>
    %c0_99 = arith.constant 0 : index
    %c170_100 = arith.constant 170 : index
    %172 = vector.load %arg8[%c0_99, %c170_100] : memref<16x784xf32, #tpu.memory_space<vmem>>, vector<8x512xf32>
    %173 = arith.maximumf %168, %170 : vector<8x512xf32>
    %174 = arith.maximumf %171, %172 : vector<8x512xf32>
    %175 = arith.maximumf %173, %174 : vector<8x512xf32>
    %c0_101 = arith.constant 0 : index
    %c136_102 = arith.constant 136 : index
    %176 = vector.load %arg8[%c0_101, %c136_102] : memref<16x784xf32, #tpu.memory_space<vmem>>, vector<8x512xf32>
    tpu.vector_store %arg8[%c0_101, %c136_102], %175 {strides = array<i32>} : memref<16x784xf32, #tpu.memory_space<vmem>>, vector<8x512xf32>,
    %c2 = arith.constant 2 : index
    %c0_103 = arith.constant 0 : index
    %c0_104 = arith.constant 0 : index
    %177 = vector.load %arg2[%c2, %c0_103, %c0_104] : memref<4x10x512xf32, #tpu.memory_space<vmem>>, vector<1x10x512xf32>
    %178 = vector.shape_cast %177 : vector<1x10x512xf32> to vector<10x512xf32>
    %c0_105 = arith.constant 0 : index
    %c68 = arith.constant 68 : index
    %179 = vector.load %arg8[%c0_105, %c68] : memref<16x784xf32, #tpu.memory_space<vmem>>, vector<8x512xf32>
    %180 = vector.extract_strided_slice %178 {offsets = [0, 0], sizes = [1, 512], strides = [1, 1]} : vector<10x512xf32> to vector<1x512xf32>
    %181 = vector.broadcast %180 : vector<1x512xf32> to vector<8x512xf32>
    %182 = arith.mulf %179, %181 : vector<8x512xf32>
    %c0_106 = arith.constant 0 : index
    %c0_107 = arith.constant 0 : index
    %183 = vector.load %arg9[%c0_106, %c0_107] : memref<144x512xf32, #tpu.memory_space<vmem>>, vector<8x512xf32>
    tpu.vector_store %arg9[%c0_106, %c0_107], %182 {strides = array<i32>} : memref<144x512xf32, #tpu.memory_space<vmem>>, vector<8x512xf32>,
    %c0_108 = arith.constant 0 : index
    %c72 = arith.constant 72 : index
    %184 = vector.load %arg8[%c0_108, %c72] : memref<16x784xf32, #tpu.memory_space<vmem>>, vector<8x512xf32>
    %185 = vector.extract_strided_slice %178 {offsets = [1, 0], sizes = [1, 512], strides = [1, 1]} : vector<10x512xf32> to vector<1x512xf32>
    %186 = vector.broadcast %185 : vector<1x512xf32> to vector<8x512xf32>
    %187 = arith.mulf %184, %186 : vector<8x512xf32>
    %c8_109 = arith.constant 8 : index
    %c0_110 = arith.constant 0 : index
    %188 = vector.load %arg9[%c8_109, %c0_110] : memref<144x512xf32, #tpu.memory_space<vmem>>, vector<8x512xf32>
    tpu.vector_store %arg9[%c8_109, %c0_110], %187 {strides = array<i32>} : memref<144x512xf32, #tpu.memory_space<vmem>>, vector<8x512xf32>,
    %c0_111 = arith.constant 0 : index
    %c76 = arith.constant 76 : index
    %189 = vector.load %arg8[%c0_111, %c76] : memref<16x784xf32, #tpu.memory_space<vmem>>, vector<8x512xf32>
    %190 = vector.extract_strided_slice %178 {offsets = [2, 0], sizes = [1, 512], strides = [1, 1]} : vector<10x512xf32> to vector<1x512xf32>
    %191 = vector.broadcast %190 : vector<1x512xf32> to vector<8x512xf32>
    %192 = arith.mulf %189, %191 : vector<8x512xf32>
    %c16_112 = arith.constant 16 : index
    %c0_113 = arith.constant 0 : index
    %193 = vector.load %arg9[%c16_112, %c0_113] : memref<144x512xf32, #tpu.memory_space<vmem>>, vector<8x512xf32>
    tpu.vector_store %arg9[%c16_112, %c0_113], %192 {strides = array<i32>} : memref<144x512xf32, #tpu.memory_space<vmem>>, vector<8x512xf32>,
    %c0_114 = arith.constant 0 : index
    %c132 = arith.constant 132 : index
    %194 = vector.load %arg8[%c0_114, %c132] : memref<16x784xf32, #tpu.memory_space<vmem>>, vector<8x512xf32>
    %195 = vector.extract_strided_slice %178 {offsets = [3, 0], sizes = [1, 512], strides = [1, 1]} : vector<10x512xf32> to vector<1x512xf32>
    %196 = vector.broadcast %195 : vector<1x512xf32> to vector<8x512xf32>
    %197 = arith.mulf %194, %196 : vector<8x512xf32>
    %c24_115 = arith.constant 24 : index
    %c0_116 = arith.constant 0 : index
    %198 = vector.load %arg9[%c24_115, %c0_116] : memref<144x512xf32, #tpu.memory_space<vmem>>, vector<8x512xf32>
    tpu.vector_store %arg9[%c24_115, %c0_116], %197 {strides = array<i32>} : memref<144x512xf32, #tpu.memory_space<vmem>>, vector<8x512xf32>,
    %c0_117 = arith.constant 0 : index
    %c136_118 = arith.constant 136 : index
    %199 = vector.load %arg8[%c0_117, %c136_118] : memref<16x784xf32, #tpu.memory_space<vmem>>, vector<8x512xf32>
    %200 = vector.extract_strided_slice %178 {offsets = [4, 0], sizes = [1, 512], strides = [1, 1]} : vector<10x512xf32> to vector<1x512xf32>
    %201 = vector.broadcast %200 : vector<1x512xf32> to vector<8x512xf32>
    %202 = arith.mulf %199, %201 : vector<8x512xf32>
    %c32_119 = arith.constant 32 : index
    %c0_120 = arith.constant 0 : index
    %203 = vector.load %arg9[%c32_119, %c0_120] : memref<144x512xf32, #tpu.memory_space<vmem>>, vector<8x512xf32>
    tpu.vector_store %arg9[%c32_119, %c0_120], %202 {strides = array<i32>} : memref<144x512xf32, #tpu.memory_space<vmem>>, vector<8x512xf32>,
    %c0_121 = arith.constant 0 : index
    %c140 = arith.constant 140 : index
    %204 = vector.load %arg8[%c0_121, %c140] : memref<16x784xf32, #tpu.memory_space<vmem>>, vector<8x512xf32>
    %205 = vector.extract_strided_slice %178 {offsets = [5, 0], sizes = [1, 512], strides = [1, 1]} : vector<10x512xf32> to vector<1x512xf32>
    %206 = vector.broadcast %205 : vector<1x512xf32> to vector<8x512xf32>
    %207 = arith.mulf %204, %206 : vector<8x512xf32>
    %c40 = arith.constant 40 : index
    %c0_122 = arith.constant 0 : index
    %208 = vector.load %arg9[%c40, %c0_122] : memref<144x512xf32, #tpu.memory_space<vmem>>, vector<8x512xf32>
    tpu.vector_store %arg9[%c40, %c0_122], %207 {strides = array<i32>} : memref<144x512xf32, #tpu.memory_space<vmem>>, vector<8x512xf32>,
    %c0_123 = arith.constant 0 : index
    %c196 = arith.constant 196 : index
    %209 = vector.load %arg8[%c0_123, %c196] : memref<16x784xf32, #tpu.memory_space<vmem>>, vector<8x512xf32>
    %210 = vector.extract_strided_slice %178 {offsets = [6, 0], sizes = [1, 512], strides = [1, 1]} : vector<10x512xf32> to vector<1x512xf32>
    %211 = vector.broadcast %210 : vector<1x512xf32> to vector<8x512xf32>
    %212 = arith.mulf %209, %211 : vector<8x512xf32>
    %c48 = arith.constant 48 : index
    %c0_124 = arith.constant 0 : index
    %213 = vector.load %arg9[%c48, %c0_124] : memref<144x512xf32, #tpu.memory_space<vmem>>, vector<8x512xf32>
    tpu.vector_store %arg9[%c48, %c0_124], %212 {strides = array<i32>} : memref<144x512xf32, #tpu.memory_space<vmem>>, vector<8x512xf32>,
    %c0_125 = arith.constant 0 : index
    %c200 = arith.constant 200 : index
    %214 = vector.load %arg8[%c0_125, %c200] : memref<16x784xf32, #tpu.memory_space<vmem>>, vector<8x512xf32>
    %215 = vector.extract_strided_slice %178 {offsets = [7, 0], sizes = [1, 512], strides = [1, 1]} : vector<10x512xf32> to vector<1x512xf32>
    %216 = vector.broadcast %215 : vector<1x512xf32> to vector<8x512xf32>
    %217 = arith.mulf %214, %216 : vector<8x512xf32>
    %c56 = arith.constant 56 : index
    %c0_126 = arith.constant 0 : index
    %218 = vector.load %arg9[%c56, %c0_126] : memref<144x512xf32, #tpu.memory_space<vmem>>, vector<8x512xf32>
    tpu.vector_store %arg9[%c56, %c0_126], %217 {strides = array<i32>} : memref<144x512xf32, #tpu.memory_space<vmem>>, vector<8x512xf32>,
    %c0_127 = arith.constant 0 : index
    %c204 = arith.constant 204 : index
    %219 = vector.load %arg8[%c0_127, %c204] : memref<16x784xf32, #tpu.memory_space<vmem>>, vector<8x512xf32>
    %220 = vector.extract_strided_slice %178 {offsets = [8, 0], sizes = [1, 512], strides = [1, 1]} : vector<10x512xf32> to vector<1x512xf32>
    %221 = vector.broadcast %220 : vector<1x512xf32> to vector<8x512xf32>
    %222 = arith.mulf %219, %221 : vector<8x512xf32>
    %c64 = arith.constant 64 : index
    %c0_128 = arith.constant 0 : index
    %223 = vector.load %arg9[%c64, %c0_128] : memref<144x512xf32, #tpu.memory_space<vmem>>, vector<8x512xf32>
    tpu.vector_store %arg9[%c64, %c0_128], %222 {strides = array<i32>} : memref<144x512xf32, #tpu.memory_space<vmem>>, vector<8x512xf32>,
    %c2_129 = arith.constant 2 : index
    %c0_130 = arith.constant 0 : index
    %c0_131 = arith.constant 0 : index
    %224 = vector.load %arg1[%c2_129, %c0_130, %c0_131] : memref<4x32x144xf32, #tpu.memory_space<vmem>>, vector<1x32x144xf32>
    %225 = vector.shape_cast %224 : vector<1x32x144xf32> to vector<32x144xf32>
    %226 = vector.extract_strided_slice %225 {offsets = [0, 0], sizes = [16, 72], strides = [1, 1]} : vector<32x144xf32> to vector<16x72xf32>
    %c0_132 = arith.constant 0 : index
    %c0_133 = arith.constant 0 : index
    %227 = vector.load %arg9[%c0_132, %c0_133] : memref<144x512xf32, #tpu.memory_space<vmem>>, vector<72x512xf32>
    %cst_134 = arith.constant dense<0.000000e+00> : vector<16x512xf32>
    %228 = tpu.matmul %226, %227, %cst_134 {dimension_numbers = #tpu.dot_dimension_numbers<[1], [0], [0], [1], [0, 0, 1, 1], [], []>} : vector<16x72xf32>, vector<72x512xf32>, vector<16x512xf32> -> vector<16x512xf32>
    %229 = vector.extract_strided_slice %178 {offsets = [9, 0], sizes = [1, 512], strides = [1, 1]} : vector<10x512xf32> to vector<1x512xf32>
    %230 = vector.broadcast %229 : vector<1x512xf32> to vector<16x512xf32>
    %231 = arith.mulf %228, %230 : vector<16x512xf32>
    %cst_135 = arith.constant dense<0.000000e+00> : vector<16xf32>
    %232 = vector.multi_reduction <add>, %231, %cst_135 [1] : vector<16x512xf32> to vector<16xf32>
    %233 = vector.shape_cast %232 : vector<16xf32> to vector<16x1xf32>
    %cst_136 = arith.constant 3.125000e-02 : f32
    %234 = vector.broadcast %cst_136 : f32 to vector<16x1xf32>
    %235 = arith.mulf %233, %234 : vector<16x1xf32>
    %236 = arith.mulf %231, %228 : vector<16x512xf32>
    %cst_137 = arith.constant dense<0.000000e+00> : vector<16xf32>
    %237 = vector.multi_reduction <add>, %236, %cst_137 [1] : vector<16x512xf32> to vector<16xf32>
    %238 = vector.shape_cast %237 : vector<16xf32> to vector<16x1xf32>
    %cst_138 = arith.constant 3.125000e-02 : f32
    %239 = vector.broadcast %cst_138 : f32 to vector<16x1xf32>
    %240 = arith.mulf %238, %239 : vector<16x1xf32>
    %241 = arith.mulf %235, %235 : vector<16x1xf32>
    %242 = arith.subf %240, %241 : vector<16x1xf32>
    %c12_139 = arith.constant 12 : index
    %c0_140 = arith.constant 0 : index
    %243 = vector.load %arg3[%c12_139, %c0_140] : memref<60x2xf32, #tpu.memory_space<vmem>>, vector<16x1xf32>
    %c12_141 = arith.constant 12 : index
    %c1_142 = arith.constant 1 : index
    %244 = vector.load %arg3[%c12_141, %c1_142] : memref<60x2xf32, #tpu.memory_space<vmem>>, vector<16x1xf32>
    %cst_143 = arith.constant 9.99999974E-6 : f32
    %245 = vector.broadcast %cst_143 : f32 to vector<16x1xf32>
    %246 = arith.addf %242, %245 : vector<16x1xf32>
    %247 = math.rsqrt %246 : vector<16x1xf32>
    %248 = arith.mulf %243, %247 : vector<16x1xf32>
    %249 = arith.mulf %248, %235 : vector<16x1xf32>
    %250 = arith.subf %244, %249 : vector<16x1xf32>
    %251 = vector.broadcast %248 : vector<16x1xf32> to vector<16x512xf32>
    %252 = arith.mulf %251, %228 : vector<16x512xf32>
    %253 = vector.broadcast %250 : vector<16x1xf32> to vector<16x512xf32>
    %254 = arith.addf %252, %253 : vector<16x512xf32>
    %cst_144 = arith.constant 0.000000e+00 : f32
    %255 = vector.broadcast %cst_144 : f32 to vector<16x512xf32>
    %256 = arith.maximumf %254, %255 : vector<16x512xf32>
    %c0_145 = arith.constant 0 : index
    %c136_146 = arith.constant 136 : index
    %257 = vector.load %arg8[%c0_145, %c136_146] : memref<16x784xf32, #tpu.memory_space<vmem>>, vector<16x512xf32>
    tpu.vector_store %arg8[%c0_145, %c136_146], %256 {strides = array<i32>} : memref<16x784xf32, #tpu.memory_space<vmem>>, vector<16x512xf32>,
    %c0_147 = arith.constant 0 : index
    %c140_148 = arith.constant 140 : index
    %258 = vector.load %arg8[%c0_147, %c140_148] : memref<16x784xf32, #tpu.memory_space<vmem>>, vector<16x512xf32>
    %c0_149 = arith.constant 0 : index
    %c200_150 = arith.constant 200 : index
    %259 = vector.load %arg8[%c0_149, %c200_150] : memref<16x784xf32, #tpu.memory_space<vmem>>, vector<16x512xf32>
    %c0_151 = arith.constant 0 : index
    %c204_152 = arith.constant 204 : index
    %260 = vector.load %arg8[%c0_151, %c204_152] : memref<16x784xf32, #tpu.memory_space<vmem>>, vector<16x512xf32>
    %261 = arith.maximumf %256, %258 : vector<16x512xf32>
    %262 = arith.maximumf %259, %260 : vector<16x512xf32>
    %263 = arith.maximumf %261, %262 : vector<16x512xf32>
    %c0_153 = arith.constant 0 : index
    %c136_154 = arith.constant 136 : index
    %264 = vector.load %arg8[%c0_153, %c136_154] : memref<16x784xf32, #tpu.memory_space<vmem>>, vector<16x512xf32>
    tpu.vector_store %arg8[%c0_153, %c136_154], %263 {strides = array<i32>} : memref<16x784xf32, #tpu.memory_space<vmem>>, vector<16x512xf32>,
    %c3_155 = arith.constant 3 : index
    %c0_156 = arith.constant 0 : index
    %c0_157 = arith.constant 0 : index
    %265 = vector.load %arg2[%c3_155, %c0_156, %c0_157] : memref<4x10x512xf32, #tpu.memory_space<vmem>>, vector<1x10x512xf32>
    %266 = vector.shape_cast %265 : vector<1x10x512xf32> to vector<10x512xf32>
    %c0_158 = arith.constant 0 : index
    %c0_159 = arith.constant 0 : index
    %267 = vector.load %arg8[%c0_158, %c0_159] : memref<16x784xf32, #tpu.memory_space<vmem>>, vector<16x512xf32>
    %268 = vector.extract_strided_slice %266 {offsets = [0, 0], sizes = [1, 512], strides = [1, 1]} : vector<10x512xf32> to vector<1x512xf32>
    %269 = vector.broadcast %268 : vector<1x512xf32> to vector<16x512xf32>
    %270 = arith.mulf %267, %269 : vector<16x512xf32>
    %c0_160 = arith.constant 0 : index
    %c0_161 = arith.constant 0 : index
    %271 = vector.load %arg9[%c0_160, %c0_161] : memref<144x512xf32, #tpu.memory_space<vmem>>, vector<16x512xf32>
    tpu.vector_store %arg9[%c0_160, %c0_161], %270 {strides = array<i32>} : memref<144x512xf32, #tpu.memory_space<vmem>>, vector<16x512xf32>,
    %c0_162 = arith.constant 0 : index
    %c8_163 = arith.constant 8 : index
    %272 = vector.load %arg8[%c0_162, %c8_163] : memref<16x784xf32, #tpu.memory_space<vmem>>, vector<16x512xf32>
    %273 = vector.extract_strided_slice %266 {offsets = [1, 0], sizes = [1, 512], strides = [1, 1]} : vector<10x512xf32> to vector<1x512xf32>
    %274 = vector.broadcast %273 : vector<1x512xf32> to vector<16x512xf32>
    %275 = arith.mulf %272, %274 : vector<16x512xf32>
    %c16_164 = arith.constant 16 : index
    %c0_165 = arith.constant 0 : index
    %276 = vector.load %arg9[%c16_164, %c0_165] : memref<144x512xf32, #tpu.memory_space<vmem>>, vector<16x512xf32>
    tpu.vector_store %arg9[%c16_164, %c0_165], %275 {strides = array<i32>} : memref<144x512xf32, #tpu.memory_space<vmem>>, vector<16x512xf32>,
    %c0_166 = arith.constant 0 : index
    %c16_167 = arith.constant 16 : index
    %277 = vector.load %arg8[%c0_166, %c16_167] : memref<16x784xf32, #tpu.memory_space<vmem>>, vector<16x512xf32>
    %278 = vector.extract_strided_slice %266 {offsets = [2, 0], sizes = [1, 512], strides = [1, 1]} : vector<10x512xf32> to vector<1x512xf32>
    %279 = vector.broadcast %278 : vector<1x512xf32> to vector<16x512xf32>
    %280 = arith.mulf %277, %279 : vector<16x512xf32>
    %c32_168 = arith.constant 32 : index
    %c0_169 = arith.constant 0 : index
    %281 = vector.load %arg9[%c32_168, %c0_169] : memref<144x512xf32, #tpu.memory_space<vmem>>, vector<16x512xf32>
    tpu.vector_store %arg9[%c32_168, %c0_169], %280 {strides = array<i32>} : memref<144x512xf32, #tpu.memory_space<vmem>>, vector<16x512xf32>,
    %c0_170 = arith.constant 0 : index
    %c128 = arith.constant 128 : index
    %282 = vector.load %arg8[%c0_170, %c128] : memref<16x784xf32, #tpu.memory_space<vmem>>, vector<16x512xf32>
    %283 = vector.extract_strided_slice %266 {offsets = [3, 0], sizes = [1, 512], strides = [1, 1]} : vector<10x512xf32> to vector<1x512xf32>
    %284 = vector.broadcast %283 : vector<1x512xf32> to vector<16x512xf32>
    %285 = arith.mulf %282, %284 : vector<16x512xf32>
    %c48_171 = arith.constant 48 : index
    %c0_172 = arith.constant 0 : index
    %286 = vector.load %arg9[%c48_171, %c0_172] : memref<144x512xf32, #tpu.memory_space<vmem>>, vector<16x512xf32>
    tpu.vector_store %arg9[%c48_171, %c0_172], %285 {strides = array<i32>} : memref<144x512xf32, #tpu.memory_space<vmem>>, vector<16x512xf32>,
    %c0_173 = arith.constant 0 : index
    %c136_174 = arith.constant 136 : index
    %287 = vector.load %arg8[%c0_173, %c136_174] : memref<16x784xf32, #tpu.memory_space<vmem>>, vector<16x512xf32>
    %288 = vector.extract_strided_slice %266 {offsets = [4, 0], sizes = [1, 512], strides = [1, 1]} : vector<10x512xf32> to vector<1x512xf32>
    %289 = vector.broadcast %288 : vector<1x512xf32> to vector<16x512xf32>
    %290 = arith.mulf %287, %289 : vector<16x512xf32>
    %c64_175 = arith.constant 64 : index
    %c0_176 = arith.constant 0 : index
    %291 = vector.load %arg9[%c64_175, %c0_176] : memref<144x512xf32, #tpu.memory_space<vmem>>, vector<16x512xf32>
    tpu.vector_store %arg9[%c64_175, %c0_176], %290 {strides = array<i32>} : memref<144x512xf32, #tpu.memory_space<vmem>>, vector<16x512xf32>,
    %c0_177 = arith.constant 0 : index
    %c144 = arith.constant 144 : index
    %292 = vector.load %arg8[%c0_177, %c144] : memref<16x784xf32, #tpu.memory_space<vmem>>, vector<16x512xf32>
    %293 = vector.extract_strided_slice %266 {offsets = [5, 0], sizes = [1, 512], strides = [1, 1]} : vector<10x512xf32> to vector<1x512xf32>
    %294 = vector.broadcast %293 : vector<1x512xf32> to vector<16x512xf32>
    %295 = arith.mulf %292, %294 : vector<16x512xf32>
    %c80 = arith.constant 80 : index
    %c0_178 = arith.constant 0 : index
    %296 = vector.load %arg9[%c80, %c0_178] : memref<144x512xf32, #tpu.memory_space<vmem>>, vector<16x512xf32>
    tpu.vector_store %arg9[%c80, %c0_178], %295 {strides = array<i32>} : memref<144x512xf32, #tpu.memory_space<vmem>>, vector<16x512xf32>,
    %c0_179 = arith.constant 0 : index
    %c256 = arith.constant 256 : index
    %297 = vector.load %arg8[%c0_179, %c256] : memref<16x784xf32, #tpu.memory_space<vmem>>, vector<16x512xf32>
    %298 = vector.extract_strided_slice %266 {offsets = [6, 0], sizes = [1, 512], strides = [1, 1]} : vector<10x512xf32> to vector<1x512xf32>
    %299 = vector.broadcast %298 : vector<1x512xf32> to vector<16x512xf32>
    %300 = arith.mulf %297, %299 : vector<16x512xf32>
    %c96 = arith.constant 96 : index
    %c0_180 = arith.constant 0 : index
    %301 = vector.load %arg9[%c96, %c0_180] : memref<144x512xf32, #tpu.memory_space<vmem>>, vector<16x512xf32>
    tpu.vector_store %arg9[%c96, %c0_180], %300 {strides = array<i32>} : memref<144x512xf32, #tpu.memory_space<vmem>>, vector<16x512xf32>,
    %c0_181 = arith.constant 0 : index
    %c264 = arith.constant 264 : index
    %302 = vector.load %arg8[%c0_181, %c264] : memref<16x784xf32, #tpu.memory_space<vmem>>, vector<16x512xf32>
    %303 = vector.extract_strided_slice %266 {offsets = [7, 0], sizes = [1, 512], strides = [1, 1]} : vector<10x512xf32> to vector<1x512xf32>
    %304 = vector.broadcast %303 : vector<1x512xf32> to vector<16x512xf32>
    %305 = arith.mulf %302, %304 : vector<16x512xf32>
    %c112 = arith.constant 112 : index
    %c0_182 = arith.constant 0 : index
    %306 = vector.load %arg9[%c112, %c0_182] : memref<144x512xf32, #tpu.memory_space<vmem>>, vector<16x512xf32>
    tpu.vector_store %arg9[%c112, %c0_182], %305 {strides = array<i32>} : memref<144x512xf32, #tpu.memory_space<vmem>>, vector<16x512xf32>,
    %c0_183 = arith.constant 0 : index
    %c272 = arith.constant 272 : index
    %307 = vector.load %arg8[%c0_183, %c272] : memref<16x784xf32, #tpu.memory_space<vmem>>, vector<16x512xf32>
    %308 = vector.extract_strided_slice %266 {offsets = [8, 0], sizes = [1, 512], strides = [1, 1]} : vector<10x512xf32> to vector<1x512xf32>
    %309 = vector.broadcast %308 : vector<1x512xf32> to vector<16x512xf32>
    %310 = arith.mulf %307, %309 : vector<16x512xf32>
    %c128_184 = arith.constant 128 : index
    %c0_185 = arith.constant 0 : index
    %311 = vector.load %arg9[%c128_184, %c0_185] : memref<144x512xf32, #tpu.memory_space<vmem>>, vector<16x512xf32>
    tpu.vector_store %arg9[%c128_184, %c0_185], %310 {strides = array<i32>} : memref<144x512xf32, #tpu.memory_space<vmem>>, vector<16x512xf32>,
    %c3_186 = arith.constant 3 : index
    %c0_187 = arith.constant 0 : index
    %c0_188 = arith.constant 0 : index
    %312 = vector.load %arg1[%c3_186, %c0_187, %c0_188] : memref<4x32x144xf32, #tpu.memory_space<vmem>>, vector<1x32x144xf32>
    %313 = vector.shape_cast %312 : vector<1x32x144xf32> to vector<32x144xf32>
    %c0_189 = arith.constant 0 : index
    %c0_190 = arith.constant 0 : index
    %314 = vector.load %arg9[%c0_189, %c0_190] : memref<144x512xf32, #tpu.memory_space<vmem>>, vector<144x512xf32>
    %cst_191 = arith.constant dense<0.000000e+00> : vector<32x512xf32>
    %315 = tpu.matmul %313, %314, %cst_191 {dimension_numbers = #tpu.dot_dimension_numbers<[1], [0], [0], [1], [0, 0, 1, 1], [], []>} : vector<32x144xf32>, vector<144x512xf32>, vector<32x512xf32> -> vector<32x512xf32>
    %316 = vector.extract_strided_slice %266 {offsets = [9, 0], sizes = [1, 512], strides = [1, 1]} : vector<10x512xf32> to vector<1x512xf32>
    %317 = vector.broadcast %316 : vector<1x512xf32> to vector<32x512xf32>
    %318 = arith.mulf %315, %317 : vector<32x512xf32>
    %cst_192 = arith.constant dense<0.000000e+00> : vector<32xf32>
    %319 = vector.multi_reduction <add>, %318, %cst_192 [1] : vector<32x512xf32> to vector<32xf32>
    %320 = vector.shape_cast %319 : vector<32xf32> to vector<32x1xf32>
    %cst_193 = arith.constant 1.250000e-01 : f32
    %321 = vector.broadcast %cst_193 : f32 to vector<32x1xf32>
    %322 = arith.mulf %320, %321 : vector<32x1xf32>
    %323 = arith.mulf %318, %315 : vector<32x512xf32>
    %cst_194 = arith.constant dense<0.000000e+00> : vector<32xf32>
    %324 = vector.multi_reduction <add>, %323, %cst_194 [1] : vector<32x512xf32> to vector<32xf32>
    %325 = vector.shape_cast %324 : vector<32xf32> to vector<32x1xf32>
    %cst_195 = arith.constant 1.250000e-01 : f32
    %326 = vector.broadcast %cst_195 : f32 to vector<32x1xf32>
    %327 = arith.mulf %325, %326 : vector<32x1xf32>
    %328 = arith.mulf %322, %322 : vector<32x1xf32>
    %329 = arith.subf %327, %328 : vector<32x1xf32>
    %c28_196 = arith.constant 28 : index
    %c0_197 = arith.constant 0 : index
    %330 = vector.load %arg3[%c28_196, %c0_197] : memref<60x2xf32, #tpu.memory_space<vmem>>, vector<32x1xf32>
    %c28_198 = arith.constant 28 : index
    %c1_199 = arith.constant 1 : index
    %331 = vector.load %arg3[%c28_198, %c1_199] : memref<60x2xf32, #tpu.memory_space<vmem>>, vector<32x1xf32>
    %cst_200 = arith.constant 9.99999974E-6 : f32
    %332 = vector.broadcast %cst_200 : f32 to vector<32x1xf32>
    %333 = arith.addf %329, %332 : vector<32x1xf32>
    %334 = math.rsqrt %333 : vector<32x1xf32>
    %335 = arith.mulf %330, %334 : vector<32x1xf32>
    %336 = arith.mulf %335, %322 : vector<32x1xf32>
    %337 = arith.subf %331, %336 : vector<32x1xf32>
    %338 = vector.broadcast %335 : vector<32x1xf32> to vector<32x512xf32>
    %339 = arith.mulf %338, %315 : vector<32x512xf32>
    %340 = vector.broadcast %337 : vector<32x1xf32> to vector<32x512xf32>
    %341 = arith.addf %339, %340 : vector<32x512xf32>
    %cst_201 = arith.constant 0.000000e+00 : f32
    %342 = vector.broadcast %cst_201 : f32 to vector<32x512xf32>
    %343 = arith.maximumf %341, %342 : vector<32x512xf32>
    %c0_202 = arith.constant 0 : index
    %c0_203 = arith.constant 0 : index
    %344 = vector.load %arg4[%c0_202, %c0_203] : memref<512x2xf32, #tpu.memory_space<vmem>>, vector<512x2xf32>
    %cst_204 = arith.constant dense<0.000000e+00> : vector<32x2xf32>
    %345 = tpu.matmul %343, %344, %cst_204 {dimension_numbers = #tpu.dot_dimension_numbers<[1], [0], [0], [1], [0, 0, 1, 1], [], []>} : vector<32x512xf32>, vector<512x2xf32>, vector<32x2xf32> -> vector<32x2xf32>
    %c0_205 = arith.constant 0 : index
    %c0_206 = arith.constant 0 : index
    %346 = vector.load %arg5[%c0_205, %c0_206] : memref<10x32xf32, #tpu.memory_space<vmem>>, vector<10x32xf32>
    %cst_207 = arith.constant dense<0.000000e+00> : vector<10x2xf32>
    %347 = tpu.matmul %346, %345, %cst_207 {dimension_numbers = #tpu.dot_dimension_numbers<[1], [0], [0], [1], [0, 0, 1, 1], [], []>} : vector<10x32xf32>, vector<32x2xf32>, vector<10x2xf32> -> vector<10x2xf32>
    %c0_208 = arith.constant 0 : index
    %c0_209 = arith.constant 0 : index
    %348 = vector.load %arg6[%c0_208, %c0_209] : memref<10x1xf32, #tpu.memory_space<vmem>>, vector<10x1xf32>
    %349 = vector.broadcast %348 : vector<10x1xf32> to vector<10x2xf32>
    %350 = arith.addf %347, %349 : vector<10x2xf32>
    %c0_210 = arith.constant 0 : index
    %c0_211 = arith.constant 0 : index
    %351 = vector.load %arg7[%c0_210, %c0_211] : memref<10x2xf32, #tpu.memory_space<vmem>>, vector<10x2xf32>
    tpu.vector_store %arg7[%c0_210, %c0_211], %350 {strides = array<i32>} : memref<10x2xf32, #tpu.memory_space<vmem>>, vector<10x2xf32>,
    return
  }
}

</mosaic_0001>

<llo_original>
// kernel: cnn_cifar_forward.1
$region0: #{cnn_cifar_forward.1}
  #allocation0 [shape = 'u32[]', space=smem, size = 0x4, offset = 0x4, fixed_abs, tag = 'smem constant byte address 0x4 - core index']
  #allocation1 [shape = 'u32[144,128]{1,0:T(1,128)}', space=vmem, size = 0x12000, scoped, tag = 'internal scratch']
  #allocation2 [shape = 'f32[16,784]{1,0:T(8,128)}', space=vmem, size = 0xe000, scoped, tag = 'scratch operand']
  #allocation3 [shape = 'f32[144,512]{1,0:T(8,128)}', space=vmem, size = 0x48000, scoped, tag = 'scratch operand']
  %s0 = inlined_call_operand.vmem [shape: f32[3,512], index: 0, kind: input, shape index: {}]
  %s1 = inlined_call_operand.vmem [shape: f32[4,32,144], index: 1, kind: input, shape index: {}]
  %s2 = inlined_call_operand.vmem [shape: f32[4,10,512], index: 2, kind: input, shape index: {}]
  %s3 = inlined_call_operand.vmem [shape: f32[60,2], index: 3, kind: input, shape index: {}]
  %s4 = inlined_call_operand.vmem [shape: f32[512,2], index: 4, kind: input, shape index: {}]
  %s5 = inlined_call_operand.vmem [shape: f32[10,32], index: 5, kind: input, shape index: {}]
  %s6 = inlined_call_operand.vmem [shape: f32[10,1], index: 6, kind: input, shape index: {}]
  %s7 = inlined_call_operand.vmem [shape: f32[10,2], index: 7, kind: output, shape index: {}]
  %s8 = sld [smem:[#allocation0]]
  $region38: #{cnn_cifar_forward.1} parent=0
    _
  %s10 = ssub.s32 1, %s8
  %s11 = scalar_select 0, %s10, %s8
  // Predicated region
  $region2: #{cnn_cifar_forward.1} parent=0 // pred_check
    _
  $region3: #{cnn_cifar_forward.1} parent=0 // pred_check_branch
    %13 = sbr.rel (0) target = $region5
  $region4: #{cnn_cifar_forward.1} parent=0 // pred_region
    _
  $region5: #{cnn_cifar_forward.1} parent=0 // pred_fallthru
    _
  // Predicated region
  $region6: #{cnn_cifar_forward.1} parent=0 // pred_check
    _
  $region7: #{cnn_cifar_forward.1} parent=0 // pred_check_branch
    %15 = sbr.rel (0) target = $region9
  $region8: #{cnn_cifar_forward.1} parent=0 // pred_region
    _
  $region9: #{cnn_cifar_forward.1} parent=0 // pred_fallthru
    _
  // Predicated region
  $region10: #{cnn_cifar_forward.1} parent=0 // pred_check
    _
  $region11: #{cnn_cifar_forward.1} parent=0 // pred_check_branch
    %17 = sbr.rel (0) target = $region13
  $region12: #{cnn_cifar_forward.1} parent=0 // pred_region
    _
  $region13: #{cnn_cifar_forward.1} parent=0 // pred_fallthru
    _
  // Predicated region
  $region14: #{cnn_cifar_forward.1} parent=0 // pred_check
    _
  $region15: #{cnn_cifar_forward.1} parent=0 // pred_check_branch
    %19 = sbr.rel (0) target = $region17
  $region16: #{cnn_cifar_forward.1} parent=0 // pred_region
    _
  $region17: #{cnn_cifar_forward.1} parent=0 // pred_fallthru
    _
  // Predicated region
  $region18: #{cnn_cifar_forward.1} parent=0 // pred_check
    _
  $region19: #{cnn_cifar_forward.1} parent=0 // pred_check_branch
    %21 = sbr.rel (0) target = $region21
  $region20: #{cnn_cifar_forward.1} parent=0 // pred_region
    _
  $region21: #{cnn_cifar_forward.1} parent=0 // pred_fallthru
    _
  // Predicated region
  $region22: #{cnn_cifar_forward.1} parent=0 // pred_check
    _
  $region23: #{cnn_cifar_forward.1} parent=0 // pred_check_branch
    %23 = sbr.rel (0) target = $region25
  $region24: #{cnn_cifar_forward.1} parent=0 // pred_region
    _
  $region25: #{cnn_cifar_forward.1} parent=0 // pred_fallthru
    _
  // Predicated region
  $region26: #{cnn_cifar_forward.1} parent=0 // pred_check
    _
  $region27: #{cnn_cifar_forward.1} parent=0 // pred_check_branch
    %25 = sbr.rel (0) target = $region29
  $region28: #{cnn_cifar_forward.1} parent=0 // pred_region
    _
  $region29: #{cnn_cifar_forward.1} parent=0 // pred_fallthru
    _
  %26 = vst [vmem:[#allocation2] sm:$0xff] 0.0
  %27 = vst [vmem:[#allocation2 + $0x8] sm:$0xff] 0.0
  %28 = vst [vmem:[#allocation2 + $0x10] sm:$0xff] 0.0
  %29 = vst [vmem:[#allocation2 + $0x18] sm:$0xff] 0.0
  %30 = vst [vmem:[#allocation2 + $0x20] sm:$0xff] 0.0
  %31 = vst [vmem:[#allocation2 + $0x28] sm:$0xff] 0.0
  %vm32 = vcmask 130048
  %33 = vst.msk [vmem:[#allocation2 + $0x30] sm:$0xff] %vm32, 0.0
  %34 = vst [vmem:[#allocation2 + $0x38] sm:$0xff] 0.0
  %35 = vst [vmem:[#allocation2 + $0x40] sm:$0xff] 0.0
  %36 = vst [vmem:[#allocation2 + $0x48] sm:$0xff] 0.0
  %37 = vst [vmem:[#allocation2 + $0x50] sm:$0xff] 0.0
  %38 = vst [vmem:[#allocation2 + $0x58] sm:$0xff] 0.0
  %39 = vst [vmem:[#allocation2 + $0x60] sm:$0xff] 0.0
  %40 = vst.msk [vmem:[#allocation2 + $0x68] sm:$0xff] %vm32, 0.0
  %v41 = vld [vmem:[%s0] sm:$0x77]
  %v42 = vld [vmem:[%s0 + $0x8] sm:$0x77]
  %v45 = vcombine.high %v41, %v41
  %v46 = vcombine.high %v42, %v42
  %47 = vrot.lane.b32.xlu0 %v41, 8
  %v48 = vpop.permute.xlu0 %47
  %49 = vrot.lane.b32.xlu0 %v45, 8
  %v50 = vpop.permute.xlu0 %49
  %51 = vrot.lane.b32.xlu0 %v42, 8
  %v52 = vpop.permute.xlu0 %51
  %53 = vrot.lane.b32.xlu0 %v46, 8
  %v54 = vpop.permute.xlu0 %53
  %vm55 = vcmask 64512
  %v56 = vsel %vm55, %v48, %v50
  %v57 = vsel %vm55, %v50, %v52
  %v58 = vsel %vm55, %v52, %v54
  %vm64 = vcmask 1042496
  %65 = vst.msk [vmem:[#allocation2 + $0x8] sm:$0x7] %vm64, %v48
  %66 = vst [vmem:[#allocation2 + $0x10] sm:$0x7] %v56
  %67 = vst [vmem:[#allocation2 + $0x18] sm:$0x7] %v57
  %68 = vst [vmem:[#allocation2 + $0x20] sm:$0x7] %v58
  %vm69 = vcmask 59392
  %70 = vst.msk [vmem:[#allocation2 + $0x28] sm:$0x7] %vm69, %v54
  %v71 = vld [vmem:[%s2] sm:$0xff]
  %v72 = vld [vmem:[%s2 + $0x8] sm:$0xff]
  %v73 = vld [vmem:[%s2 + $0x10] sm:$0xff]
  %v74 = vld [vmem:[%s2 + $0x18] sm:$0xff]
  %v75 = vld [vmem:[%s2 + $0x20] sm:$0x3]
  %v76 = vld [vmem:[%s2 + $0x28] sm:$0x3]
  %v77 = vld [vmem:[%s2 + $0x30] sm:$0x3]
  %v78 = vld [vmem:[%s2 + $0x38] sm:$0x3]
  %v79 = vld [vmem:[#allocation2] sm:$0x7]
  %v80 = vld [vmem:[#allocation2 + $0x8] sm:$0x7]
  %v81 = vld [vmem:[#allocation2 + $0x10] sm:$0x7]
  %v82 = vld [vmem:[#allocation2 + $0x18] sm:$0x7]
  %v83 = vld [vmem:[#allocation2 + $0x20] sm:$0x7]
  %v84 = vlaneseq
  %v85 = vshrl.u32 %v84, 7
  %v86 = vsub.s32 0, %v85
  %v87 = vrot.slane %v71, %v86
  %v88 = vlaneseq
  %v89 = vshrl.u32 %v88, 7
  %v90 = vsub.s32 0, %v89
  %v91 = vrot.slane %v72, %v90
  %v92 = vlaneseq
  %v93 = vshrl.u32 %v92, 7
  %v94 = vsub.s32 0, %v93
  %v95 = vrot.slane %v73, %v94
  %v96 = vlaneseq
  %v97 = vshrl.u32 %v96, 7
  %v98 = vsub.s32 0, %v97
  %v99 = vrot.slane %v74, %v98
  %104 = vrot.lane.b32.xlu0 %v87, 119
  %v105 = vpop.permute.xlu0 %104
  %106 = vrot.lane.b32.xlu0 %v91, 119
  %v107 = vpop.permute.xlu0 %106
  %108 = vrot.lane.b32.xlu0 %v95, 119
  %v109 = vpop.permute.xlu0 %108
  %110 = vrot.lane.b32.xlu0 %v99, 119
  %v111 = vpop.permute.xlu0 %110
  %vm112 = vcmask 973824
  %v113 = vsel %vm112, %v105, %v107
  %v114 = vsel %vm112, %v107, %v109
  %v115 = vsel %vm112, %v109, %v111
  %v121 = vmul.f32 %v79, %v105
  %v122 = vmul.f32 %v80, %v113
  %v123 = vmul.f32 %v81, %v114
  %v124 = vmul.f32 %v82, %v115
  %v125 = vmul.f32 %v83, %v111
  %131 = vrot.lane.b32.xlu0 %v121, 9
  %v132 = vpop.permute.xlu0 %131
  %133 = vrot.lane.b32.xlu0 %v122, 9
  %v134 = vpop.permute.xlu0 %133
  %135 = vrot.lane.b32.xlu0 %v123, 9
  %v136 = vpop.permute.xlu0 %135
  %137 = vrot.lane.b32.xlu0 %v124, 9
  %v138 = vpop.permute.xlu0 %137
  %139 = vrot.lane.b32.xlu0 %v125, 9
  %v140 = vpop.permute.xlu0 %139
  %vm141 = vcmask 72704
  %v142 = vsel %vm141, %v132, %v134
  %v143 = vsel %vm141, %v134, %v136
  %v144 = vsel %vm141, %v136, %v138
  %v145 = vsel %vm141, %v138, %v140
  %150 = vst [vmem:[#allocation3] sm:$0x7] %v142
  %151 = vst [vmem:[#allocation3 + $0x8] sm:$0x7] %v143
  %152 = vst [vmem:[#allocation3 + $0x10] sm:$0x7] %v144
  %153 = vst [vmem:[#allocation3 + $0x18] sm:$0x7] %v145
  %v154 = vld [vmem:[#allocation2] sm:$0x7]
  %v155 = vld [vmem:[#allocation2 + $0x8] sm:$0x7]
  %v156 = vld [vmem:[#allocation2 + $0x10] sm:$0x7]
  %v157 = vld [vmem:[#allocation2 + $0x18] sm:$0x7]
  %v158 = vld [vmem:[#allocation2 + $0x20] sm:$0x7]
  %v159 = vlaneseq
  %v160 = vshrl.u32 %v159, 7
  %v161 = vsub.s32 1, %v160
  %v162 = vrot.slane %v71, %v161
  %v163 = vlaneseq
  %v164 = vshrl.u32 %v163, 7
  %v165 = vsub.s32 1, %v164
  %v166 = vrot.slane %v72, %v165
  %v167 = vlaneseq
  %v168 = vshrl.u32 %v167, 7
  %v169 = vsub.s32 1, %v168
  %v170 = vrot.slane %v73, %v169
  %v171 = vlaneseq
  %v172 = vshrl.u32 %v171, 7
  %v173 = vsub.s32 1, %v172
  %v174 = vrot.slane %v74, %v173
  %179 = vrot.lane.b32.xlu0 %v162, 120
  %v180 = vpop.permute.xlu0 %179
  %181 = vrot.lane.b32.xlu0 %v166, 120
  %v182 = vpop.permute.xlu0 %181
  %183 = vrot.lane.b32.xlu0 %v170, 120
  %v184 = vpop.permute.xlu0 %183
  %185 = vrot.lane.b32.xlu0 %v174, 120
  %v186 = vpop.permute.xlu0 %185
  %vm187 = vcmask 982016
  %v188 = vsel %vm187, %v180, %v182
  %v189 = vsel %vm187, %v182, %v184
  %v190 = vsel %vm187, %v184, %v186
  %v196 = vmul.f32 %v154, %v180
  %v197 = vmul.f32 %v155, %v188
  %v198 = vmul.f32 %v156, %v189
  %v199 = vmul.f32 %v157, %v190
  %v200 = vmul.f32 %v158, %v186
  %v206 = vrot.slane %v196, 5
  %v207 = vrot.slane %v197, 5
  %v208 = vrot.slane %v198, 5
  %v209 = vrot.slane %v199, 5
  %v210 = vrot.slane %v200, 5
  %211 = vrot.lane.b32.xlu0 %v206, 8
  %v212 = vpop.permute.xlu0 %211
  %213 = vrot.lane.b32.xlu0 %v207, 8
  %v214 = vpop.permute.xlu0 %213
  %215 = vrot.lane.b32.xlu0 %v208, 8
  %v216 = vpop.permute.xlu0 %215
  %217 = vrot.lane.b32.xlu0 %v209, 8
  %v218 = vpop.permute.xlu0 %217
  %219 = vrot.lane.b32.xlu0 %v210, 8
  %v220 = vpop.permute.xlu0 %219
  %v221 = vsel %vm55, %v212, %v214
  %v222 = vsel %vm55, %v214, %v216
  %v223 = vsel %vm55, %v216, %v218
  %v224 = vsel %vm55, %v218, %v220
  %229 = vst [vmem:[#allocation3] sm:$0x38] %v221
  %230 = vst [vmem:[#allocation3 + $0x8] sm:$0x38] %v222
  %231 = vst [vmem:[#allocation3 + $0x10] sm:$0x38] %v223
  %232 = vst [vmem:[#allocation3 + $0x18] sm:$0x38] %v224
  %v233 = vld [vmem:[#allocation2] sm:$0x7]
  %v234 = vld [vmem:[#allocation2 + $0x8] sm:$0x7]
  %v235 = vld [vmem:[#allocation2 + $0x10] sm:$0x7]
  %v236 = vld [vmem:[#allocation2 + $0x18] sm:$0x7]
  %v237 = vld [vmem:[#allocation2 + $0x20] sm:$0x7]
  %v238 = vlaneseq
  %v239 = vshrl.u32 %v238, 7
  %v240 = vsub.s32 2, %v239
  %v241 = vrot.slane %v71, %v240
  %v242 = vlaneseq
  %v243 = vshrl.u32 %v242, 7
  %v244 = vsub.s32 2, %v243
  %v245 = vrot.slane %v72, %v244
  %v246 = vlaneseq
  %v247 = vshrl.u32 %v246, 7
  %v248 = vsub.s32 2, %v247
  %v249 = vrot.slane %v73, %v248
  %v250 = vlaneseq
  %v251 = vshrl.u32 %v250, 7
  %v252 = vsub.s32 2, %v251
  %v253 = vrot.slane %v74, %v252
  %258 = vrot.lane.b32.xlu0 %v241, 121
  %v259 = vpop.permute.xlu0 %258
  %260 = vrot.lane.b32.xlu0 %v245, 121
  %v261 = vpop.permute.xlu0 %260
  %262 = vrot.lane.b32.xlu0 %v249, 121
  %v263 = vpop.permute.xlu0 %262
  %264 = vrot.lane.b32.xlu0 %v253, 121
  %v265 = vpop.permute.xlu0 %264
  %vm266 = vcmask 990208
  %v267 = vsel %vm266, %v259, %v261
  %v268 = vsel %vm266, %v261, %v263
  %v269 = vsel %vm266, %v263, %v265
  %v275 = vmul.f32 %v233, %v259
  %v276 = vmul.f32 %v234, %v267
  %v277 = vmul.f32 %v235, %v268
  %v278 = vmul.f32 %v236, %v269
  %v279 = vmul.f32 %v237, %v265
  %v285 = vrot.slane %v275, 2
  %v286 = vrot.slane %v276, 2
  %v287 = vrot.slane %v277, 2
  %v288 = vrot.slane %v278, 2
  %v289 = vrot.slane %v279, 2
  %290 = vrot.lane.b32.xlu0 %v285, 7
  %v291 = vpop.permute.xlu0 %290
  %292 = vrot.lane.b32.xlu0 %v286, 7
  %v293 = vpop.permute.xlu0 %292
  %294 = vrot.lane.b32.xlu0 %v287, 7
  %v295 = vpop.permute.xlu0 %294
  %296 = vrot.lane.b32.xlu0 %v288, 7
  %v297 = vpop.permute.xlu0 %296
  %298 = vrot.lane.b32.xlu0 %v289, 7
  %v299 = vpop.permute.xlu0 %298
  %vm300 = vcmask 56320
  %v301 = vsel %vm300, %v291, %v293
  %v302 = vsel %vm300, %v293, %v295
  %v303 = vsel %vm300, %v295, %v297
  %v304 = vsel %vm300, %v297, %v299
  %309 = vst [vmem:[#allocation3] sm:$0xc0] %v301
  %310 = vst [vmem:[#allocation3 + $0x8] sm:$0xc0] %v302
  %311 = vst [vmem:[#allocation3 + $0x10] sm:$0xc0] %v303
  %312 = vst [vmem:[#allocation3 + $0x18] sm:$0xc0] %v304
  %313 = vst [vmem:[#allocation3 + $0x20] sm:$0x1] %v301
  %314 = vst [vmem:[#allocation3 + $0x28] sm:$0x1] %v302
  %315 = vst [vmem:[#allocation3 + $0x30] sm:$0x1] %v303
  %316 = vst [vmem:[#allocation3 + $0x38] sm:$0x1] %v304
  %v317 = vld [vmem:[#allocation2 + $0x8] sm:$0x7]
  %v318 = vld [vmem:[#allocation2 + $0x10] sm:$0x7]
  %v319 = vld [vmem:[#allocation2 + $0x18] sm:$0x7]
  %v320 = vld [vmem:[#allocation2 + $0x20] sm:$0x7]
  %v321 = vld [vmem:[#allocation2 + $0x28] sm:$0x7]
  %v322 = vlaneseq
  %v323 = vshrl.u32 %v322, 7
  %v324 = vsub.s32 3, %v323
  %v325 = vrot.slane %v71, %v324
  %v326 = vlaneseq
  %v327 = vshrl.u32 %v326, 7
  %v328 = vsub.s32 3, %v327
  %v329 = vrot.slane %v72, %v328
  %v330 = vlaneseq
  %v331 = vshrl.u32 %v330, 7
  %v332 = vsub.s32 3, %v331
  %v333 = vrot.slane %v73, %v332
  %v334 = vlaneseq
  %v335 = vshrl.u32 %v334, 7
  %v336 = vsub.s32 3, %v335
  %v337 = vrot.slane %v74, %v336
  %342 = vrot.lane.b32.xlu0 %v325, 7
  %v343 = vpop.permute.xlu0 %342
  %344 = vrot.lane.b32.xlu0 %v329, 7
  %v345 = vpop.permute.xlu0 %344
  %346 = vrot.lane.b32.xlu0 %v333, 7
  %v347 = vpop.permute.xlu0 %346
  %348 = vrot.lane.b32.xlu0 %v337, 7
  %v349 = vpop.permute.xlu0 %348
  %v350 = vsel %vm300, %v343, %v345
  %v351 = vsel %vm300, %v345, %v347
  %v352 = vsel %vm300, %v347, %v349
  %v358 = vmul.f32 %v317, %v343
  %v359 = vmul.f32 %v318, %v350
  %v360 = vmul.f32 %v319, %v351
  %v361 = vmul.f32 %v320, %v352
  %v362 = vmul.f32 %v321, %v349
  %v368 = vrot.slane %v358, 7
  %v369 = vrot.slane %v359, 7
  %v370 = vrot.slane %v360, 7
  %v371 = vrot.slane %v361, 7
  %v372 = vrot.slane %v362, 7
  %373 = vrot.lane.b32.xlu0 %v368, 121
  %v374 = vpop.permute.xlu0 %373
  %375 = vrot.lane.b32.xlu0 %v369, 121
  %v376 = vpop.permute.xlu0 %375
  %377 = vrot.lane.b32.xlu0 %v370, 121
  %v378 = vpop.permute.xlu0 %377
  %379 = vrot.lane.b32.xlu0 %v371, 121
  %v380 = vpop.permute.xlu0 %379
  %381 = vrot.lane.b32.xlu0 %v372, 121
  %v382 = vpop.permute.xlu0 %381
  %v383 = vsel %vm266, %v374, %v376
  %v384 = vsel %vm266, %v376, %v378
  %v385 = vsel %vm266, %v378, %v380
  %v386 = vsel %vm266, %v380, %v382
  %391 = vst [vmem:[#allocation3 + $0x20] sm:$0xe] %v383
  %392 = vst [vmem:[#allocation3 + $0x28] sm:$0xe] %v384
  %393 = vst [vmem:[#allocation3 + $0x30] sm:$0xe] %v385
  %394 = vst [vmem:[#allocation3 + $0x38] sm:$0xe] %v386
  %v395 = vld [vmem:[#allocation2 + $0x8] sm:$0x7]
  %v396 = vld [vmem:[#allocation2 + $0x10] sm:$0x7]
  %v397 = vld [vmem:[#allocation2 + $0x18] sm:$0x7]
  %v398 = vld [vmem:[#allocation2 + $0x20] sm:$0x7]
  %v399 = vld [vmem:[#allocation2 + $0x28] sm:$0x7]
  %v400 = vlaneseq
  %v401 = vshrl.u32 %v400, 7
  %v402 = vsub.s32 4, %v401
  %v403 = vrot.slane %v71, %v402
  %v404 = vlaneseq
  %v405 = vshrl.u32 %v404, 7
  %v406 = vsub.s32 4, %v405
  %v407 = vrot.slane %v72, %v406
  %v408 = vlaneseq
  %v409 = vshrl.u32 %v408, 7
  %v410 = vsub.s32 4, %v409
  %v411 = vrot.slane %v73, %v410
  %v412 = vlaneseq
  %v413 = vshrl.u32 %v412, 7
  %v414 = vsub.s32 4, %v413
  %v415 = vrot.slane %v74, %v414
  %420 = vrot.lane.b32.xlu0 %v403, 8
  %v421 = vpop.permute.xlu0 %420
  %422 = vrot.lane.b32.xlu0 %v407, 8
  %v423 = vpop.permute.xlu0 %422
  %424 = vrot.lane.b32.xlu0 %v411, 8
  %v425 = vpop.permute.xlu0 %424
  %426 = vrot.lane.b32.xlu0 %v415, 8
  %v427 = vpop.permute.xlu0 %426
  %v428 = vsel %vm55, %v421, %v423
  %v429 = vsel %vm55, %v423, %v425
  %v430 = vsel %vm55, %v425, %v427
  %v436 = vmul.f32 %v395, %v421
  %v437 = vmul.f32 %v396, %v428
  %v438 = vmul.f32 %v397, %v429
  %v439 = vmul.f32 %v398, %v430
  %v440 = vmul.f32 %v399, %v427
  %v446 = vrot.slane %v436, 4
  %v447 = vrot.slane %v437, 4
  %v448 = vrot.slane %v438, 4
  %v449 = vrot.slane %v439, 4
  %v450 = vrot.slane %v440, 4
  %451 = vrot.lane.b32.xlu0 %v446, 120
  %v452 = vpop.permute.xlu0 %451
  %453 = vrot.lane.b32.xlu0 %v447, 120
  %v454 = vpop.permute.xlu0 %453
  %455 = vrot.lane.b32.xlu0 %v448, 120
  %v456 = vpop.permute.xlu0 %455
  %457 = vrot.lane.b32.xlu0 %v449, 120
  %v458 = vpop.permute.xlu0 %457
  %459 = vrot.lane.b32.xlu0 %v450, 120
  %v460 = vpop.permute.xlu0 %459
  %v461 = vsel %vm187, %v452, %v454
  %v462 = vsel %vm187, %v454, %v456
  %v463 = vsel %vm187, %v456, %v458
  %v464 = vsel %vm187, %v458, %v460
  %469 = vst [vmem:[#allocation3 + $0x20] sm:$0x70] %v461
  %470 = vst [vmem:[#allocation3 + $0x28] sm:$0x70] %v462
  %471 = vst [vmem:[#allocation3 + $0x30] sm:$0x70] %v463
  %472 = vst [vmem:[#allocation3 + $0x38] sm:$0x70] %v464
  %v473 = vld [vmem:[#allocation2 + $0x8] sm:$0x7]
  %v474 = vld [vmem:[#allocation2 + $0x10] sm:$0x7]
  %v475 = vld [vmem:[#allocation2 + $0x18] sm:$0x7]
  %v476 = vld [vmem:[#allocation2 + $0x20] sm:$0x7]
  %v477 = vld [vmem:[#allocation2 + $0x28] sm:$0x7]
  %v478 = vlaneseq
  %v479 = vshrl.u32 %v478, 7
  %v480 = vsub.s32 5, %v479
  %v481 = vrot.slane %v71, %v480
  %v482 = vlaneseq
  %v483 = vshrl.u32 %v482, 7
  %v484 = vsub.s32 5, %v483
  %v485 = vrot.slane %v72, %v484
  %v486 = vlaneseq
  %v487 = vshrl.u32 %v486, 7
  %v488 = vsub.s32 5, %v487
  %v489 = vrot.slane %v73, %v488
  %v490 = vlaneseq
  %v491 = vshrl.u32 %v490, 7
  %v492 = vsub.s32 5, %v491
  %v493 = vrot.slane %v74, %v492
  %498 = vrot.lane.b32.xlu0 %v481, 9
  %v499 = vpop.permute.xlu0 %498
  %500 = vrot.lane.b32.xlu0 %v485, 9
  %v501 = vpop.permute.xlu0 %500
  %502 = vrot.lane.b32.xlu0 %v489, 9
  %v503 = vpop.permute.xlu0 %502
  %504 = vrot.lane.b32.xlu0 %v493, 9
  %v505 = vpop.permute.xlu0 %504
  %v506 = vsel %vm141, %v499, %v501
  %v507 = vsel %vm141, %v501, %v503
  %v508 = vsel %vm141, %v503, %v505
  %v514 = vmul.f32 %v473, %v499
  %v515 = vmul.f32 %v474, %v506
  %v516 = vmul.f32 %v475, %v507
  %v517 = vmul.f32 %v476, %v508
  %v518 = vmul.f32 %v477, %v505
  %v524 = vrot.slane %v514, 1
  %v525 = vrot.slane %v515, 1
  %v526 = vrot.slane %v516, 1
  %v527 = vrot.slane %v517, 1
  %v528 = vrot.slane %v518, 1
  %529 = vrot.lane.b32.xlu0 %v524, 119
  %v530 = vpop.permute.xlu0 %529
  %531 = vrot.lane.b32.xlu0 %v525, 119
  %v532 = vpop.permute.xlu0 %531
  %533 = vrot.lane.b32.xlu0 %v526, 119
  %v534 = vpop.permute.xlu0 %533
  %535 = vrot.lane.b32.xlu0 %v527, 119
  %v536 = vpop.permute.xlu0 %535
  %537 = vrot.lane.b32.xlu0 %v528, 119
  %v538 = vpop.permute.xlu0 %537
  %v539 = vsel %vm112, %v530, %v532
  %v540 = vsel %vm112, %v532, %v534
  %v541 = vsel %vm112, %v534, %v536
  %v542 = vsel %vm112, %v536, %v538
  %547 = vst [vmem:[#allocation3 + $0x20] sm:$0x80] %v539
  %548 = vst [vmem:[#allocation3 + $0x28] sm:$0x80] %v540
  %549 = vst [vmem:[#allocation3 + $0x30] sm:$0x80] %v541
  %550 = vst [vmem:[#allocation3 + $0x38] sm:$0x80] %v542
  %551 = vst [vmem:[#allocation3 + $0x40] sm:$0x3] %v539
  %552 = vst [vmem:[#allocation3 + $0x48] sm:$0x3] %v540
  %553 = vst [vmem:[#allocation3 + $0x50] sm:$0x3] %v541
  %554 = vst [vmem:[#allocation3 + $0x58] sm:$0x3] %v542
  %v555 = vld [vmem:[#allocation2 + $0x8] sm:$0x7]
  %v556 = vld [vmem:[#allocation2 + $0x10] sm:$0x7]
  %v557 = vld [vmem:[#allocation2 + $0x18] sm:$0x7]
  %v558 = vld [vmem:[#allocation2 + $0x20] sm:$0x7]
  %v559 = vld [vmem:[#allocation2 + $0x28] sm:$0x7]
  %v560 = vlaneseq
  %v561 = vshrl.u32 %v560, 7
  %v562 = vsub.s32 6, %v561
  %v563 = vrot.slane %v71, %v562
  %v564 = vlaneseq
  %v565 = vshrl.u32 %v564, 7
  %v566 = vsub.s32 6, %v565
  %v567 = vrot.slane %v72, %v566
  %v568 = vlaneseq
  %v569 = vshrl.u32 %v568, 7
  %v570 = vsub.s32 6, %v569
  %v571 = vrot.slane %v73, %v570
  %v572 = vlaneseq
  %v573 = vshrl.u32 %v572, 7
  %v574 = vsub.s32 6, %v573
  %v575 = vrot.slane %v74, %v574
  %580 = vrot.lane.b32.xlu0 %v563, 23
  %v581 = vpop.permute.xlu0 %580
  %582 = vrot.lane.b32.xlu0 %v567, 23
  %v583 = vpop.permute.xlu0 %582
  %584 = vrot.lane.b32.xlu0 %v571, 23
  %v585 = vpop.permute.xlu0 %584
  %586 = vrot.lane.b32.xlu0 %v575, 23
  %v587 = vpop.permute.xlu0 %586
  %vm588 = vcmask 187392
  %v589 = vsel %vm588, %v581, %v583
  %v590 = vsel %vm588, %v583, %v585
  %v591 = vsel %vm588, %v585, %v587
  %v597 = vmul.f32 %v555, %v581
  %v598 = vmul.f32 %v556, %v589
  %v599 = vmul.f32 %v557, %v590
  %v600 = vmul.f32 %v558, %v591
  %v601 = vmul.f32 %v559, %v587
  %v607 = vrot.slane %v597, 6
  %v608 = vrot.slane %v598, 6
  %v609 = vrot.slane %v599, 6
  %v610 = vrot.slane %v600, 6
  %v611 = vrot.slane %v601, 6
  %612 = vrot.lane.b32.xlu0 %v607, 105
  %v613 = vpop.permute.xlu0 %612
  %614 = vrot.lane.b32.xlu0 %v608, 105
  %v615 = vpop.permute.xlu0 %614
  %616 = vrot.lane.b32.xlu0 %v609, 105
  %v617 = vpop.permute.xlu0 %616
  %618 = vrot.lane.b32.xlu0 %v610, 105
  %v619 = vpop.permute.xlu0 %618
  %620 = vrot.lane.b32.xlu0 %v611, 105
  %v621 = vpop.permute.xlu0 %620
  %vm622 = vcmask 859136
  %v623 = vsel %vm622, %v613, %v615
  %v624 = vsel %vm622, %v615, %v617
  %v625 = vsel %vm622, %v617, %v619
  %v626 = vsel %vm622, %v619, %v621
  %631 = vst [vmem:[#allocation3 + $0x40] sm:$0x1c] %v623
  %632 = vst [vmem:[#allocation3 + $0x48] sm:$0x1c] %v624
  %633 = vst [vmem:[#allocation3 + $0x50] sm:$0x1c] %v625
  %634 = vst [vmem:[#allocation3 + $0x58] sm:$0x1c] %v626
  %v635 = vld [vmem:[#allocation2 + $0x8] sm:$0x7]
  %v636 = vld [vmem:[#allocation2 + $0x10] sm:$0x7]
  %v637 = vld [vmem:[#allocation2 + $0x18] sm:$0x7]
  %v638 = vld [vmem:[#allocation2 + $0x20] sm:$0x7]
  %v639 = vld [vmem:[#allocation2 + $0x28] sm:$0x7]
  %v640 = vlaneseq
  %v641 = vshrl.u32 %v640, 7
  %v642 = vsub.s32 7, %v641
  %v643 = vrot.slane %v71, %v642
  %v644 = vlaneseq
  %v645 = vshrl.u32 %v644, 7
  %v646 = vsub.s32 7, %v645
  %v647 = vrot.slane %v72, %v646
  %v648 = vlaneseq
  %v649 = vshrl.u32 %v648, 7
  %v650 = vsub.s32 7, %v649
  %v651 = vrot.slane %v73, %v650
  %v652 = vlaneseq
  %v653 = vshrl.u32 %v652, 7
  %v654 = vsub.s32 7, %v653
  %v655 = vrot.slane %v74, %v654
  %660 = vrot.lane.b32.xlu0 %v643, 24
  %v661 = vpop.permute.xlu0 %660
  %662 = vrot.lane.b32.xlu0 %v647, 24
  %v663 = vpop.permute.xlu0 %662
  %664 = vrot.lane.b32.xlu0 %v651, 24
  %v665 = vpop.permute.xlu0 %664
  %666 = vrot.lane.b32.xlu0 %v655, 24
  %v667 = vpop.permute.xlu0 %666
  %vm668 = vcmask 195584
  %v669 = vsel %vm668, %v661, %v663
  %v670 = vsel %vm668, %v663, %v665
  %v671 = vsel %vm668, %v665, %v667
  %v677 = vmul.f32 %v635, %v661
  %v678 = vmul.f32 %v636, %v669
  %v679 = vmul.f32 %v637, %v670
  %v680 = vmul.f32 %v638, %v671
  %v681 = vmul.f32 %v639, %v667
  %v687 = vrot.slane %v677, 3
  %v688 = vrot.slane %v678, 3
  %v689 = vrot.slane %v679, 3
  %v690 = vrot.slane %v680, 3
  %v691 = vrot.slane %v681, 3
  %692 = vrot.lane.b32.xlu0 %v687, 104
  %v693 = vpop.permute.xlu0 %692
  %694 = vrot.lane.b32.xlu0 %v688, 104
  %v695 = vpop.permute.xlu0 %694
  %696 = vrot.lane.b32.xlu0 %v689, 104
  %v697 = vpop.permute.xlu0 %696
  %698 = vrot.lane.b32.xlu0 %v690, 104
  %v699 = vpop.permute.xlu0 %698
  %700 = vrot.lane.b32.xlu0 %v691, 104
  %v701 = vpop.permute.xlu0 %700
  %vm702 = vcmask 850944
  %v703 = vsel %vm702, %v693, %v695
  %v704 = vsel %vm702, %v695, %v697
  %v705 = vsel %vm702, %v697, %v699
  %v706 = vsel %vm702, %v699, %v701
  %711 = vst [vmem:[#allocation3 + $0x40] sm:$0xe0] %v703
  %712 = vst [vmem:[#allocation3 + $0x48] sm:$0xe0] %v704
  %713 = vst [vmem:[#allocation3 + $0x50] sm:$0xe0] %v705
  %714 = vst [vmem:[#allocation3 + $0x58] sm:$0xe0] %v706
  %v715 = vld [vmem:[#allocation2 + $0x8] sm:$0x7]
  %v716 = vld [vmem:[#allocation2 + $0x10] sm:$0x7]
  %v717 = vld [vmem:[#allocation2 + $0x18] sm:$0x7]
  %v718 = vld [vmem:[#allocation2 + $0x20] sm:$0x7]
  %v719 = vld [vmem:[#allocation2 + $0x28] sm:$0x7]
  %v720 = vlaneseq
  %v721 = vshrl.u32 %v720, 7
  %v722 = vsub.s32 0, %v721
  %v723 = vrot.slane %v75, %v722
  %v724 = vlaneseq
  %v725 = vshrl.u32 %v724, 7
  %v726 = vsub.s32 0, %v725
  %v727 = vrot.slane %v76, %v726
  %v728 = vlaneseq
  %v729 = vshrl.u32 %v728, 7
  %v730 = vsub.s32 0, %v729
  %v731 = vrot.slane %v77, %v730
  %v732 = vlaneseq
  %v733 = vshrl.u32 %v732, 7
  %v734 = vsub.s32 0, %v733
  %v735 = vrot.slane %v78, %v734
  %740 = vrot.lane.b32.xlu0 %v723, 25
  %v741 = vpop.permute.xlu0 %740
  %742 = vrot.lane.b32.xlu0 %v727, 25
  %v743 = vpop.permute.xlu0 %742
  %744 = vrot.lane.b32.xlu0 %v731, 25
  %v745 = vpop.permute.xlu0 %744
  %746 = vrot.lane.b32.xlu0 %v735, 25
  %v747 = vpop.permute.xlu0 %746
  %vm748 = vcmask 203776
  %v749 = vsel %vm748, %v741, %v743
  %v750 = vsel %vm748, %v743, %v745
  %v751 = vsel %vm748, %v745, %v747
  %v757 = vmul.f32 %v715, %v741
  %v758 = vmul.f32 %v716, %v749
  %v759 = vmul.f32 %v717, %v750
  %v760 = vmul.f32 %v718, %v751
  %v761 = vmul.f32 %v719, %v747
  %767 = vrot.lane.b32.xlu0 %v757, 103
  %v768 = vpop.permute.xlu0 %767
  %769 = vrot.lane.b32.xlu0 %v758, 103
  %v770 = vpop.permute.xlu0 %769
  %771 = vrot.lane.b32.xlu0 %v759, 103
  %v772 = vpop.permute.xlu0 %771
  %773 = vrot.lane.b32.xlu0 %v760, 103
  %v774 = vpop.permute.xlu0 %773
  %775 = vrot.lane.b32.xlu0 %v761, 103
  %v776 = vpop.permute.xlu0 %775
  %vm777 = vcmask 842752
  %v778 = vsel %vm777, %v768, %v770
  %v779 = vsel %vm777, %v770, %v772
  %v780 = vsel %vm777, %v772, %v774
  %v781 = vsel %vm777, %v774, %v776
  %786 = vst [vmem:[#allocation3 + $0x60] sm:$0x7] %v778
  %787 = vst [vmem:[#allocation3 + $0x68] sm:$0x7] %v779
  %788 = vst [vmem:[#allocation3 + $0x70] sm:$0x7] %v780
  %789 = vst [vmem:[#allocation3 + $0x78] sm:$0x7] %v781
  %v790 = vld [vmem:[%s1] sm:$0xff]
  %v791 = vld [vmem:[#allocation3] sm:$0xff]
  %v792 = vld [vmem:[#allocation3 + $0x8] sm:$0xff]
  %v793 = vld [vmem:[#allocation3 + $0x10] sm:$0xff]
  %v794 = vld [vmem:[#allocation3 + $0x18] sm:$0xff]
  %v795 = vld [vmem:[#allocation3 + $0x20] sm:$0xff]
  %v796 = vld [vmem:[#allocation3 + $0x28] sm:$0xff]
  %v797 = vld [vmem:[#allocation3 + $0x30] sm:$0xff]
  %v798 = vld [vmem:[#allocation3 + $0x38] sm:$0xff]
  %v799 = vld [vmem:[#allocation3 + $0x40] sm:$0xff]
  %v800 = vld [vmem:[#allocation3 + $0x48] sm:$0xff]
  %v801 = vld [vmem:[#allocation3 + $0x50] sm:$0xff]
  %v802 = vld [vmem:[#allocation3 + $0x58] sm:$0xff]
  %v803 = vld [vmem:[#allocation3 + $0x60] sm:$0x7]
  %v804 = vld [vmem:[#allocation3 + $0x68] sm:$0x7]
  %v805 = vld [vmem:[#allocation3 + $0x70] sm:$0x7]
  %v806 = vld [vmem:[#allocation3 + $0x78] sm:$0x7]
  %vm807 = vcmask 220160
  %v809 = vsel %vm807, %v790, 0
  %vm811 = vcmask 1042432
  %v813 = vsel %vm811, %v803, 0
  %v816 = vsel %vm811, %v804, 0
  %v819 = vsel %vm811, %v805, 0
  %v822 = vsel %vm811, %v806, 0
  %824 = vmatprep.subr.mxu0 0.0
  %825 = vmatpush1.msra.mxu0 0.0
  %826 = vmatprep.subr.mxu0 0.0
  %827 = vmatpush1.msra.mxu0 0.0
  %828 = vmatprep.subr.mxu0 0.0
  %829 = vmatpush1.msra.mxu0 0.0
  %830 = vmatprep.subr.mxu0 0.0
  %831 = vmatpush1.msra.mxu0 0.0
  %832 = vmatprep.subr.mxu0 0.0
  %833 = vmatpush1.msra.mxu0 0.0
  %834 = vmatprep.subr.mxu0 0.0
  %835 = vmatpush1.msra.mxu0 0.0
  %836 = vmatprep.subr.mxu0 0.0
  %837 = vmatpush1.msra.mxu0 0.0
  %838 = vmatprep.subr.mxu0 0.0
  %839 = vmatpush1.msra.mxu0 0.0
  %840 = vmatprep.subr.mxu0 0.0
  %841 = vmatpush1.msra.mxu0 0.0
  %842 = vmatprep.subr.mxu0 0.0
  %843 = vmatpush1.msra.mxu0 0.0
  %844 = vmatprep.subr.mxu0 0.0
  %845 = vmatpush1.msra.mxu0 0.0
  %846 = vmatprep.subr.mxu0 0.0
  %847 = vmatpush1.msra.mxu0 0.0
  %848 = vmatprep.subr.mxu0 %v816
  %849 = vmatpush1.msra.mxu0 %v813
  %850 = vmatprep.subr.mxu0 %v800
  %851 = vmatpush1.msra.mxu0 %v799
  %852 = vmatprep.subr.mxu0 %v796
  %853 = vmatpush1.msra.mxu0 %v795
  %854 = vmatprep.subr.mxu0 %v792
  %855 = vmatpush1.msra.mxu0 %v791
  %856 = vmatprep.subr.mxu0 0.0
  %857 = vmatpush2.msra.mxu0 0.0
  %858 = vmatprep.subr.mxu0 0.0
  %859 = vmatpush2.msra.mxu0 0.0
  %860 = vmatprep.subr.mxu0 0.0
  %861 = vmatpush2.msra.mxu0 0.0
  %862 = vmatprep.subr.mxu0 0.0
  %863 = vmatpush2.msra.mxu0 0.0
  %864 = vmatprep.subr.mxu0 0.0
  %865 = vmatpush2.msra.mxu0 0.0
  %866 = vmatprep.subr.mxu0 0.0
  %867 = vmatpush2.msra.mxu0 0.0
  %868 = vmatprep.subr.mxu0 0.0
  %869 = vmatpush2.msra.mxu0 0.0
  %870 = vmatprep.subr.mxu0 0.0
  %871 = vmatpush2.msra.mxu0 0.0
  %872 = vmatprep.subr.mxu0 0.0
  %873 = vmatpush2.msra.mxu0 0.0
  %874 = vmatprep.subr.mxu0 0.0
  %875 = vmatpush2.msra.mxu0 0.0
  %876 = vmatprep.subr.mxu0 0.0
  %877 = vmatpush2.msra.mxu0 0.0
  %878 = vmatprep.subr.mxu0 0.0
  %879 = vmatpush2.msra.mxu0 0.0
  %880 = vmatprep.subr.mxu0 0.0
  %881 = vmatpush2.msra.mxu0 0.0
  %882 = vmatprep.subr.mxu0 0.0
  %883 = vmatpush2.msra.mxu0 0.0
  %884 = vmatprep.subr.mxu0 0.0
  %885 = vmatpush2.msra.mxu0 0.0
  %886 = vmatprep.subr.mxu0 0.0
  %887 = vmatpush2.msra.mxu0 0.0
  %888 = vmatprep.mubr.f32.mxu0 0.0
  %889 = vmatmul.mubr.f32.gmra.mxu0 %v809
  %v890 = vpop.f32.mrf.mxu0
  %v891 = vadd.f32 0.0, %v890
  %v892 = vpop.f32.mrf.mxu0
  %v893 = vadd.f32 0.0, %v892
  %894 = vdwg.mxu0
  %895 = vmatprep.subr.mxu0 0.0
  %896 = vmatpush1.msra.mxu0 0.0
  %897 = vmatprep.subr.mxu0 0.0
  %898 = vmatpush1.msra.mxu0 0.0
  %899 = vmatprep.subr.mxu0 0.0
  %900 = vmatpush1.msra.mxu0 0.0
  %901 = vmatprep.subr.mxu0 0.0
  %902 = vmatpush1.msra.mxu0 0.0
  %903 = vmatprep.subr.mxu0 0.0
  %904 = vmatpush1.msra.mxu0 0.0
  %905 = vmatprep.subr.mxu0 0.0
  %906 = vmatpush1.msra.mxu0 0.0
  %907 = vmatprep.subr.mxu0 0.0
  %908 = vmatpush1.msra.mxu0 0.0
  %909 = vmatprep.subr.mxu0 0.0
  %910 = vmatpush1.msra.mxu0 0.0
  %911 = vmatprep.subr.mxu0 0.0
  %912 = vmatpush1.msra.mxu0 0.0
  %913 = vmatprep.subr.mxu0 0.0
  %914 = vmatpush1.msra.mxu0 0.0
  %915 = vmatprep.subr.mxu0 0.0
  %916 = vmatpush1.msra.mxu0 0.0
  %917 = vmatprep.subr.mxu0 0.0
  %918 = vmatpush1.msra.mxu0 0.0
  %919 = vmatprep.subr.mxu0 %v822
  %920 = vmatpush1.msra.mxu0 %v819
  %921 = vmatprep.subr.mxu0 %v802
  %922 = vmatpush1.msra.mxu0 %v801
  %923 = vmatprep.subr.mxu0 %v798
  %924 = vmatpush1.msra.mxu0 %v797
  %925 = vmatprep.subr.mxu0 %v794
  %926 = vmatpush1.msra.mxu0 %v793
  %927 = vmatprep.subr.mxu0 0.0
  %928 = vmatpush2.msra.mxu0 0.0
  %929 = vmatprep.subr.mxu0 0.0
  %930 = vmatpush2.msra.mxu0 0.0
  %931 = vmatprep.subr.mxu0 0.0
  %932 = vmatpush2.msra.mxu0 0.0
  %933 = vmatprep.subr.mxu0 0.0
  %934 = vmatpush2.msra.mxu0 0.0
  %935 = vmatprep.subr.mxu0 0.0
  %936 = vmatpush2.msra.mxu0 0.0
  %937 = vmatprep.subr.mxu0 0.0
  %938 = vmatpush2.msra.mxu0 0.0
  %939 = vmatprep.subr.mxu0 0.0
  %940 = vmatpush2.msra.mxu0 0.0
  %941 = vmatprep.subr.mxu0 0.0
  %942 = vmatpush2.msra.mxu0 0.0
  %943 = vmatprep.subr.mxu0 0.0
  %944 = vmatpush2.msra.mxu0 0.0
  %945 = vmatprep.subr.mxu0 0.0
  %946 = vmatpush2.msra.mxu0 0.0
  %947 = vmatprep.subr.mxu0 0.0
  %948 = vmatpush2.msra.mxu0 0.0
  %949 = vmatprep.subr.mxu0 0.0
  %950 = vmatpush2.msra.mxu0 0.0
  %951 = vmatprep.subr.mxu0 0.0
  %952 = vmatpush2.msra.mxu0 0.0
  %953 = vmatprep.subr.mxu0 0.0
  %954 = vmatpush2.msra.mxu0 0.0
  %955 = vmatprep.subr.mxu0 0.0
  %956 = vmatpush2.msra.mxu0 0.0
  %957 = vmatprep.subr.mxu0 0.0
  %958 = vmatpush2.msra.mxu0 0.0
  %959 = vmatprep.mubr.f32.mxu0 0.0
  %960 = vmatmul.mubr.f32.gmra.mxu0 %v809
  %v961 = vpop.f32.mrf.mxu0
  %v962 = vadd.f32 0.0, %v961
  %v963 = vpop.f32.mrf.mxu0
  %v964 = vadd.f32 0.0, %v963
  %965 = vdwg.mxu0
  %vm966 = vcmask 1043456
  %v967 = vsel %vm966, %v891, 0.0
  %v968 = vsel %vm966, %v893, 0.0
  %v969 = vadd.f32 %v967, %v968
  %v970 = vsel %vm966, %v962, 0.0
  %v971 = vadd.f32 %v969, %v970
  %v972 = vsel %vm966, %v964, 0.0
  %v973 = vadd.f32 %v971, %v972
  %974 = vadd.xlane.f32.xlu0 %v973
  %v975 = vpop.xlane.xlu0 %974
  %v976 = vmul.f32 %v975, 0.001953125
  %v977 = vmul.f32 %v891, %v891
  %v978 = vmul.f32 %v893, %v893
  %v979 = vmul.f32 %v962, %v962
  %v980 = vmul.f32 %v964, %v964
  %v981 = vsel %vm966, %v977, 0.0
  %v982 = vsel %vm966, %v978, 0.0
  %v983 = vadd.f32 %v981, %v982
  %v984 = vsel %vm966, %v979, 0.0
  %v985 = vadd.f32 %v983, %v984
  %v986 = vsel %vm966, %v980, 0.0
  %v987 = vadd.f32 %v985, %v986
  %988 = vadd.xlane.f32.xlu0 %v987
  %v989 = vpop.xlane.xlu0 %988
  %v990 = vmul.f32 %v989, 0.001953125
  %v991 = vmul.f32 %v976, %v976
  %v992 = vsub.f32 %v990, %v991
  %v993 = vld [vmem:[%s3] sm:$0xf]
  %v994 = vadd.f32 %v992, 1e-05
  %v995 = vrsqrt.pop %v994
  %v996 = vmul.f32 %v993, %v995
  %v997 = vmul.f32 %v996, %v976
  %999 = vrot.lane.b32.xlu0 %v997, 1
  %v1000 = vpop.permute.xlu0 %999
  %v1002 = vsub.f32 %v993, %v1000
  %1004 = vset.pattern.permute.xlu0 0
  %1005 = vperm.xlu0 %1004, %v996
  %v1006 = vpop.permute.xlu0 %1005
  %v1008 = vmul.f32 %v1006, %v891
  %v1009 = vmul.f32 %v1006, %v893
  %v1010 = vmul.f32 %v1006, %v962
  %v1011 = vmul.f32 %v1006, %v964
  %1013 = vset.pattern.permute.xlu0 1
  %1014 = vperm.xlu0 %1013, %v1002
  %v1015 = vpop.permute.xlu0 %1014
  %v1017 = vadd.f32 %v1008, %v1015
  %v1018 = vadd.f32 %v1009, %v1015
  %v1019 = vadd.f32 %v1010, %v1015
  %v1020 = vadd.f32 %v1011, %v1015
  %v1021 = vmax.f32 %v1017, 0.0
  %v1022 = vmax.f32 %v1018, 0.0
  %v1023 = vmax.f32 %v1019, 0.0
  %v1024 = vmax.f32 %v1020, 0.0
  %1029 = vrot.lane.b32.xlu0 %v1021, 8
  %v1030 = vpop.permute.xlu0 %1029
  %1031 = vrot.lane.b32.xlu0 %v1022, 8
  %v1032 = vpop.permute.xlu0 %1031
  %1033 = vrot.lane.b32.xlu0 %v1023, 8
  %v1034 = vpop.permute.xlu0 %1033
  %1035 = vrot.lane.b32.xlu0 %v1024, 8
  %v1036 = vpop.permute.xlu0 %1035
  %v1037 = vsel %vm55, %v1030, %v1032
  %v1038 = vsel %vm55, %v1032, %v1034
  %v1039 = vsel %vm55, %v1034, %v1036
  %vm1045 = vcmask 1043520
  %1046 = vst.msk [vmem:[#allocation2 + $0x8] sm:$0xf] %vm1045, %v1030
  %1047 = vst [vmem:[#allocation2 + $0x10] sm:$0xf] %v1037
  %1048 = vst [vmem:[#allocation2 + $0x18] sm:$0xf] %v1038
  %1049 = vst [vmem:[#allocation2 + $0x20] sm:$0xf] %v1039
  %vm1050 = vcmask 60416
  %1051 = vst.msk [vmem:[#allocation2 + $0x28] sm:$0xf] %vm1050, %v1036
  %v1052 = vld [vmem:[#allocation2 + $0x8] sm:$0xf]
  %v1053 = vld [vmem:[#allocation2 + $0x10] sm:$0xf]
  %v1054 = vld [vmem:[#allocation2 + $0x18] sm:$0xf]
  %v1055 = vld [vmem:[#allocation2 + $0x20] sm:$0xf]
  %v1056 = vld [vmem:[#allocation2 + $0x28] sm:$0xf]
  %1062 = vrot.lane.b32.xlu0 %v1052, 119
  %v1063 = vpop.permute.xlu0 %1062
  %1064 = vrot.lane.b32.xlu0 %v1053, 119
  %v1065 = vpop.permute.xlu0 %1064
  %1066 = vrot.lane.b32.xlu0 %v1054, 119
  %v1067 = vpop.permute.xlu0 %1066
  %1068 = vrot.lane.b32.xlu0 %v1055, 119
  %v1069 = vpop.permute.xlu0 %1068
  %1070 = vrot.lane.b32.xlu0 %v1056, 119
  %v1071 = vpop.permute.xlu0 %1070
  %v1072 = vsel %vm112, %v1063, %v1065
  %v1073 = vsel %vm112, %v1065, %v1067
  %v1074 = vsel %vm112, %v1067, %v1069
  %v1075 = vsel %vm112, %v1069, %v1071
  %v1080 = vmax.f32 %v1021, %v1072
  %v1081 = vmax.f32 %v1022, %v1073
  %v1082 = vmax.f32 %v1023, %v1074
  %v1083 = vmax.f32 %v1024, %v1075
  %1084 = vrot.lane.b32.xlu0 %v1052, 127
  %v1085 = vpop.permute.xlu0 %1084
  %1086 = vrot.lane.b32.xlu0 %v1053, 127
  %v1087 = vpop.permute.xlu0 %1086
  %1088 = vrot.lane.b32.xlu0 %v1054, 127
  %v1089 = vpop.permute.xlu0 %1088
  %1090 = vrot.lane.b32.xlu0 %v1055, 127
  %v1091 = vpop.permute.xlu0 %1090
  %1092 = vrot.lane.b32.xlu0 %v1056, 127
  %v1093 = vpop.permute.xlu0 %1092
  %vm1094 = vcmask 1039360
  %v1095 = vsel %vm1094, %v1085, %v1087
  %v1096 = vsel %vm1094, %v1087, %v1089
  %v1097 = vsel %vm1094, %v1089, %v1091
  %v1098 = vsel %vm1094, %v1091, %v1093
  %v1104 = vmax.f32 %v1052, %v1095
  %v1105 = vmax.f32 %v1053, %v1096
  %v1106 = vmax.f32 %v1054, %v1097
  %v1107 = vmax.f32 %v1055, %v1098
  %v1108 = vmax.f32 %v1056, %v1093
  %1114 = vrot.lane.b32.xlu0 %v1104, 104
  %v1115 = vpop.permute.xlu0 %1114
  %1116 = vrot.lane.b32.xlu0 %v1105, 104
  %v1117 = vpop.permute.xlu0 %1116
  %1118 = vrot.lane.b32.xlu0 %v1106, 104
  %v1119 = vpop.permute.xlu0 %1118
  %1120 = vrot.lane.b32.xlu0 %v1107, 104
  %v1121 = vpop.permute.xlu0 %1120
  %1122 = vrot.lane.b32.xlu0 %v1108, 104
  %v1123 = vpop.permute.xlu0 %1122
  %v1124 = vsel %vm702, %v1115, %v1117
  %v1125 = vsel %vm702, %v1117, %v1119
  %v1126 = vsel %vm702, %v1119, %v1121
  %v1127 = vsel %vm702, %v1121, %v1123
  %v1132 = vmax.f32 %v1080, %v1124
  %v1133 = vmax.f32 %v1081, %v1125
  %v1134 = vmax.f32 %v1082, %v1126
  %v1135 = vmax.f32 %v1083, %v1127
  %1140 = vrot.lane.b32.xlu0 %v1132, 8
  %v1141 = vpop.permute.xlu0 %1140
  %1142 = vrot.lane.b32.xlu0 %v1133, 8
  %v1143 = vpop.permute.xlu0 %1142
  %1144 = vrot.lane.b32.xlu0 %v1134, 8
  %v1145 = vpop.permute.xlu0 %1144
  %1146 = vrot.lane.b32.xlu0 %v1135, 8
  %v1147 = vpop.permute.xlu0 %1146
  %v1148 = vsel %vm55, %v1141, %v1143
  %v1149 = vsel %vm55, %v1143, %v1145
  %v1150 = vsel %vm55, %v1145, %v1147
  %1156 = vst.msk [vmem:[#allocation2 + $0x8] sm:$0xf] %vm1045, %v1141
  %1157 = vst [vmem:[#allocation2 + $0x10] sm:$0xf] %v1148
  %1158 = vst [vmem:[#allocation2 + $0x18] sm:$0xf] %v1149
  %1159 = vst [vmem:[#allocation2 + $0x20] sm:$0xf] %v1150
  %1160 = vst.msk [vmem:[#allocation2 + $0x28] sm:$0xf] %vm1050, %v1147
  %s1161 = scalar_lea.vmem %s2, 64
  %v1162 = vld [vmem:[%s1161] sm:$0xff]
  %v1163 = vld [vmem:[%s1161 + $0x8] sm:$0xff]
  %v1164 = vld [vmem:[%s1161 + $0x10] sm:$0xff]
  %v1165 = vld [vmem:[%s1161 + $0x18] sm:$0xff]
  %v1166 = vld [vmem:[%s1161 + $0x20] sm:$0x3]
  %v1167 = vld [vmem:[%s1161 + $0x28] sm:$0x3]
  %v1168 = vld [vmem:[%s1161 + $0x30] sm:$0x3]
  %v1169 = vld [vmem:[%s1161 + $0x38] sm:$0x3]
  %v1170 = vld [vmem:[#allocation2] sm:$0xf]
  %v1171 = vld [vmem:[#allocation2 + $0x8] sm:$0xf]
  %v1172 = vld [vmem:[#allocation2 + $0x10] sm:$0xf]
  %v1173 = vld [vmem:[#allocation2 + $0x18] sm:$0xf]
  %v1174 = vld [vmem:[#allocation2 + $0x20] sm:$0xf]
  %v1175 = vlaneseq
  %v1176 = vshrl.u32 %v1175, 7
  %v1177 = vsub.s32 0, %v1176
  %v1178 = vrot.slane %v1162, %v1177
  %v1179 = vlaneseq
  %v1180 = vshrl.u32 %v1179, 7
  %v1181 = vsub.s32 0, %v1180
  %v1182 = vrot.slane %v1163, %v1181
  %v1183 = vlaneseq
  %v1184 = vshrl.u32 %v1183, 7
  %v1185 = vsub.s32 0, %v1184
  %v1186 = vrot.slane %v1164, %v1185
  %v1187 = vlaneseq
  %v1188 = vshrl.u32 %v1187, 7
  %v1189 = vsub.s32 0, %v1188
  %v1190 = vrot.slane %v1165, %v1189
  %1195 = vrot.lane.b32.xlu0 %v1178, 102
  %v1196 = vpop.permute.xlu0 %1195
  %1197 = vrot.lane.b32.xlu0 %v1182, 102
  %v1198 = vpop.permute.xlu0 %1197
  %1199 = vrot.lane.b32.xlu0 %v1186, 102
  %v1200 = vpop.permute.xlu0 %1199
  %1201 = vrot.lane.b32.xlu0 %v1190, 102
  %v1202 = vpop.permute.xlu0 %1201
  %vm1203 = vcmask 834560
  %v1204 = vsel %vm1203, %v1196, %v1198
  %v1205 = vsel %vm1203, %v1198, %v1200
  %v1206 = vsel %vm1203, %v1200, %v1202
  %v1212 = vmul.f32 %v1170, %v1196
  %v1213 = vmul.f32 %v1171, %v1204
  %v1214 = vmul.f32 %v1172, %v1205
  %v1215 = vmul.f32 %v1173, %v1206
  %v1216 = vmul.f32 %v1174, %v1202
  %1222 = vrot.lane.b32.xlu0 %v1212, 26
  %v1223 = vpop.permute.xlu0 %1222
  %1224 = vrot.lane.b32.xlu0 %v1213, 26
  %v1225 = vpop.permute.xlu0 %1224
  %1226 = vrot.lane.b32.xlu0 %v1214, 26
  %v1227 = vpop.permute.xlu0 %1226
  %1228 = vrot.lane.b32.xlu0 %v1215, 26
  %v1229 = vpop.permute.xlu0 %1228
  %1230 = vrot.lane.b32.xlu0 %v1216, 26
  %v1231 = vpop.permute.xlu0 %1230
  %vm1232 = vcmask 211968
  %v1233 = vsel %vm1232, %v1223, %v1225
  %v1234 = vsel %vm1232, %v1225, %v1227
  %v1235 = vsel %vm1232, %v1227, %v1229
  %v1236 = vsel %vm1232, %v1229, %v1231
  %1241 = vst [vmem:[#allocation3] sm:$0xf] %v1233
  %1242 = vst [vmem:[#allocation3 + $0x8] sm:$0xf] %v1234
  %1243 = vst [vmem:[#allocation3 + $0x10] sm:$0xf] %v1235
  %1244 = vst [vmem:[#allocation3 + $0x18] sm:$0xf] %v1236
  %v1245 = vld [vmem:[#allocation2] sm:$0xf]
  %v1246 = vld [vmem:[#allocation2 + $0x8] sm:$0xf]
  %v1247 = vld [vmem:[#allocation2 + $0x10] sm:$0xf]
  %v1248 = vld [vmem:[#allocation2 + $0x18] sm:$0xf]
  %v1249 = vld [vmem:[#allocation2 + $0x20] sm:$0xf]
  %v1250 = vlaneseq
  %v1251 = vshrl.u32 %v1250, 7
  %v1252 = vsub.s32 1, %v1251
  %v1253 = vrot.slane %v1162, %v1252
  %v1254 = vlaneseq
  %v1255 = vshrl.u32 %v1254, 7
  %v1256 = vsub.s32 1, %v1255
  %v1257 = vrot.slane %v1163, %v1256
  %v1258 = vlaneseq
  %v1259 = vshrl.u32 %v1258, 7
  %v1260 = vsub.s32 1, %v1259
  %v1261 = vrot.slane %v1164, %v1260
  %v1262 = vlaneseq
  %v1263 = vshrl.u32 %v1262, 7
  %v1264 = vsub.s32 1, %v1263
  %v1265 = vrot.slane %v1165, %v1264
  %1270 = vrot.lane.b32.xlu0 %v1253, 104
  %v1271 = vpop.permute.xlu0 %1270
  %1272 = vrot.lane.b32.xlu0 %v1257, 104
  %v1273 = vpop.permute.xlu0 %1272
  %1274 = vrot.lane.b32.xlu0 %v1261, 104
  %v1275 = vpop.permute.xlu0 %1274
  %1276 = vrot.lane.b32.xlu0 %v1265, 104
  %v1277 = vpop.permute.xlu0 %1276
  %v1278 = vsel %vm702, %v1271, %v1273
  %v1279 = vsel %vm702, %v1273, %v1275
  %v1280 = vsel %vm702, %v1275, %v1277
  %v1286 = vmul.f32 %v1245, %v1271
  %v1287 = vmul.f32 %v1246, %v1278
  %v1288 = vmul.f32 %v1247, %v1279
  %v1289 = vmul.f32 %v1248, %v1280
  %v1290 = vmul.f32 %v1249, %v1277
  %v1296 = vrot.slane %v1286, 4
  %v1297 = vrot.slane %v1287, 4
  %v1298 = vrot.slane %v1288, 4
  %v1299 = vrot.slane %v1289, 4
  %v1300 = vrot.slane %v1290, 4
  %1301 = vrot.lane.b32.xlu0 %v1296, 24
  %v1302 = vpop.permute.xlu0 %1301
  %1303 = vrot.lane.b32.xlu0 %v1297, 24
  %v1304 = vpop.permute.xlu0 %1303
  %1305 = vrot.lane.b32.xlu0 %v1298, 24
  %v1306 = vpop.permute.xlu0 %1305
  %1307 = vrot.lane.b32.xlu0 %v1299, 24
  %v1308 = vpop.permute.xlu0 %1307
  %1309 = vrot.lane.b32.xlu0 %v1300, 24
  %v1310 = vpop.permute.xlu0 %1309
  %v1311 = vsel %vm668, %v1302, %v1304
  %v1312 = vsel %vm668, %v1304, %v1306
  %v1313 = vsel %vm668, %v1306, %v1308
  %v1314 = vsel %vm668, %v1308, %v1310
  %1319 = vst [vmem:[#allocation3] sm:$0xf0] %v1311
  %1320 = vst [vmem:[#allocation3 + $0x8] sm:$0xf0] %v1312
  %1321 = vst [vmem:[#allocation3 + $0x10] sm:$0xf0] %v1313
  %1322 = vst [vmem:[#allocation3 + $0x18] sm:$0xf0] %v1314
  %v1323 = vld [vmem:[#allocation2] sm:$0xf]
  %v1324 = vld [vmem:[#allocation2 + $0x8] sm:$0xf]
  %v1325 = vld [vmem:[#allocation2 + $0x10] sm:$0xf]
  %v1326 = vld [vmem:[#allocation2 + $0x18] sm:$0xf]
  %v1327 = vld [vmem:[#allocation2 + $0x20] sm:$0xf]
  %v1328 = vlaneseq
  %v1329 = vshrl.u32 %v1328, 7
  %v1330 = vsub.s32 2, %v1329
  %v1331 = vrot.slane %v1162, %v1330
  %v1332 = vlaneseq
  %v1333 = vshrl.u32 %v1332, 7
  %v1334 = vsub.s32 2, %v1333
  %v1335 = vrot.slane %v1163, %v1334
  %v1336 = vlaneseq
  %v1337 = vshrl.u32 %v1336, 7
  %v1338 = vsub.s32 2, %v1337
  %v1339 = vrot.slane %v1164, %v1338
  %v1340 = vlaneseq
  %v1341 = vshrl.u32 %v1340, 7
  %v1342 = vsub.s32 2, %v1341
  %v1343 = vrot.slane %v1165, %v1342
  %1348 = vrot.lane.b32.xlu0 %v1331, 106
  %v1349 = vpop.permute.xlu0 %1348
  %1350 = vrot.lane.b32.xlu0 %v1335, 106
  %v1351 = vpop.permute.xlu0 %1350
  %1352 = vrot.lane.b32.xlu0 %v1339, 106
  %v1353 = vpop.permute.xlu0 %1352
  %1354 = vrot.lane.b32.xlu0 %v1343, 106
  %v1355 = vpop.permute.xlu0 %1354
  %vm1356 = vcmask 867328
  %v1357 = vsel %vm1356, %v1349, %v1351
  %v1358 = vsel %vm1356, %v1351, %v1353
  %v1359 = vsel %vm1356, %v1353, %v1355
  %v1365 = vmul.f32 %v1323, %v1349
  %v1366 = vmul.f32 %v1324, %v1357
  %v1367 = vmul.f32 %v1325, %v1358
  %v1368 = vmul.f32 %v1326, %v1359
  %v1369 = vmul.f32 %v1327, %v1355
  %1375 = vrot.lane.b32.xlu0 %v1365, 22
  %v1376 = vpop.permute.xlu0 %1375
  %1377 = vrot.lane.b32.xlu0 %v1366, 22
  %v1378 = vpop.permute.xlu0 %1377
  %1379 = vrot.lane.b32.xlu0 %v1367, 22
  %v1380 = vpop.permute.xlu0 %1379
  %1381 = vrot.lane.b32.xlu0 %v1368, 22
  %v1382 = vpop.permute.xlu0 %1381
  %1383 = vrot.lane.b32.xlu0 %v1369, 22
  %v1384 = vpop.permute.xlu0 %1383
  %vm1385 = vcmask 179200
  %v1386 = vsel %vm1385, %v1376, %v1378
  %v1387 = vsel %vm1385, %v1378, %v1380
  %v1388 = vsel %vm1385, %v1380, %v1382
  %v1389 = vsel %vm1385, %v1382, %v1384
  %1394 = vst [vmem:[#allocation3 + $0x20] sm:$0xf] %v1386
  %1395 = vst [vmem:[#allocation3 + $0x28] sm:$0xf] %v1387
  %1396 = vst [vmem:[#allocation3 + $0x30] sm:$0xf] %v1388
  %1397 = vst [vmem:[#allocation3 + $0x38] sm:$0xf] %v1389
  %v1398 = vld [vmem:[#allocation2 + $0x8] sm:$0xf]
  %v1399 = vld [vmem:[#allocation2 + $0x10] sm:$0xf]
  %v1400 = vld [vmem:[#allocation2 + $0x18] sm:$0xf]
  %v1401 = vld [vmem:[#allocation2 + $0x20] sm:$0xf]
  %v1402 = vld [vmem:[#allocation2 + $0x28] sm:$0xf]
  %v1403 = vlaneseq
  %v1404 = vshrl.u32 %v1403, 7
  %v1405 = vsub.s32 3, %v1404
  %v1406 = vrot.slane %v1162, %v1405
  %v1407 = vlaneseq
  %v1408 = vshrl.u32 %v1407, 7
  %v1409 = vsub.s32 3, %v1408
  %v1410 = vrot.slane %v1163, %v1409
  %v1411 = vlaneseq
  %v1412 = vshrl.u32 %v1411, 7
  %v1413 = vsub.s32 3, %v1412
  %v1414 = vrot.slane %v1164, %v1413
  %v1415 = vlaneseq
  %v1416 = vshrl.u32 %v1415, 7
  %v1417 = vsub.s32 3, %v1416
  %v1418 = vrot.slane %v1165, %v1417
  %1423 = vrot.lane.b32.xlu0 %v1406, 6
  %v1424 = vpop.permute.xlu0 %1423
  %1425 = vrot.lane.b32.xlu0 %v1410, 6
  %v1426 = vpop.permute.xlu0 %1425
  %1427 = vrot.lane.b32.xlu0 %v1414, 6
  %v1428 = vpop.permute.xlu0 %1427
  %1429 = vrot.lane.b32.xlu0 %v1418, 6
  %v1430 = vpop.permute.xlu0 %1429
  %vm1431 = vcmask 48128
  %v1432 = vsel %vm1431, %v1424, %v1426
  %v1433 = vsel %vm1431, %v1426, %v1428
  %v1434 = vsel %vm1431, %v1428, %v1430
  %v1440 = vmul.f32 %v1398, %v1424
  %v1441 = vmul.f32 %v1399, %v1432
  %v1442 = vmul.f32 %v1400, %v1433
  %v1443 = vmul.f32 %v1401, %v1434
  %v1444 = vmul.f32 %v1402, %v1430
  %v1450 = vrot.slane %v1440, 4
  %v1451 = vrot.slane %v1441, 4
  %v1452 = vrot.slane %v1442, 4
  %v1453 = vrot.slane %v1443, 4
  %v1454 = vrot.slane %v1444, 4
  %1455 = vrot.lane.b32.xlu0 %v1450, 122
  %v1456 = vpop.permute.xlu0 %1455
  %1457 = vrot.lane.b32.xlu0 %v1451, 122
  %v1458 = vpop.permute.xlu0 %1457
  %1459 = vrot.lane.b32.xlu0 %v1452, 122
  %v1460 = vpop.permute.xlu0 %1459
  %1461 = vrot.lane.b32.xlu0 %v1453, 122
  %v1462 = vpop.permute.xlu0 %1461
  %1463 = vrot.lane.b32.xlu0 %v1454, 122
  %v1464 = vpop.permute.xlu0 %1463
  %vm1465 = vcmask 998400
  %v1466 = vsel %vm1465, %v1456, %v1458
  %v1467 = vsel %vm1465, %v1458, %v1460
  %v1468 = vsel %vm1465, %v1460, %v1462
  %v1469 = vsel %vm1465, %v1462, %v1464
  %1474 = vst [vmem:[#allocation3 + $0x20] sm:$0xf0] %v1466
  %1475 = vst [vmem:[#allocation3 + $0x28] sm:$0xf0] %v1467
  %1476 = vst [vmem:[#allocation3 + $0x30] sm:$0xf0] %v1468
  %1477 = vst [vmem:[#allocation3 + $0x38] sm:$0xf0] %v1469
  %v1478 = vld [vmem:[#allocation2 + $0x8] sm:$0xf]
  %v1479 = vld [vmem:[#allocation2 + $0x10] sm:$0xf]
  %v1480 = vld [vmem:[#allocation2 + $0x18] sm:$0xf]
  %v1481 = vld [vmem:[#allocation2 + $0x20] sm:$0xf]
  %v1482 = vld [vmem:[#allocation2 + $0x28] sm:$0xf]
  %v1483 = vlaneseq
  %v1484 = vshrl.u32 %v1483, 7
  %v1485 = vsub.s32 4, %v1484
  %v1486 = vrot.slane %v1162, %v1485
  %v1487 = vlaneseq
  %v1488 = vshrl.u32 %v1487, 7
  %v1489 = vsub.s32 4, %v1488
  %v1490 = vrot.slane %v1163, %v1489
  %v1491 = vlaneseq
  %v1492 = vshrl.u32 %v1491, 7
  %v1493 = vsub.s32 4, %v1492
  %v1494 = vrot.slane %v1164, %v1493
  %v1495 = vlaneseq
  %v1496 = vshrl.u32 %v1495, 7
  %v1497 = vsub.s32 4, %v1496
  %v1498 = vrot.slane %v1165, %v1497
  %1503 = vrot.lane.b32.xlu0 %v1486, 8
  %v1504 = vpop.permute.xlu0 %1503
  %1505 = vrot.lane.b32.xlu0 %v1490, 8
  %v1506 = vpop.permute.xlu0 %1505
  %1507 = vrot.lane.b32.xlu0 %v1494, 8
  %v1508 = vpop.permute.xlu0 %1507
  %1509 = vrot.lane.b32.xlu0 %v1498, 8
  %v1510 = vpop.permute.xlu0 %1509
  %v1511 = vsel %vm55, %v1504, %v1506
  %v1512 = vsel %vm55, %v1506, %v1508
  %v1513 = vsel %vm55, %v1508, %v1510
  %v1519 = vmul.f32 %v1478, %v1504
  %v1520 = vmul.f32 %v1479, %v1511
  %v1521 = vmul.f32 %v1480, %v1512
  %v1522 = vmul.f32 %v1481, %v1513
  %v1523 = vmul.f32 %v1482, %v1510
  %1529 = vrot.lane.b32.xlu0 %v1519, 120
  %v1530 = vpop.permute.xlu0 %1529
  %1531 = vrot.lane.b32.xlu0 %v1520, 120
  %v1532 = vpop.permute.xlu0 %1531
  %1533 = vrot.lane.b32.xlu0 %v1521, 120
  %v1534 = vpop.permute.xlu0 %1533
  %1535 = vrot.lane.b32.xlu0 %v1522, 120
  %v1536 = vpop.permute.xlu0 %1535
  %1537 = vrot.lane.b32.xlu0 %v1523, 120
  %v1538 = vpop.permute.xlu0 %1537
  %v1539 = vsel %vm187, %v1530, %v1532
  %v1540 = vsel %vm187, %v1532, %v1534
  %v1541 = vsel %vm187, %v1534, %v1536
  %v1542 = vsel %vm187, %v1536, %v1538
  %1547 = vst [vmem:[#allocation3 + $0x40] sm:$0xf] %v1539
  %1548 = vst [vmem:[#allocation3 + $0x48] sm:$0xf] %v1540
  %1549 = vst [vmem:[#allocation3 + $0x50] sm:$0xf] %v1541
  %1550 = vst [vmem:[#allocation3 + $0x58] sm:$0xf] %v1542
  %v1551 = vld [vmem:[#allocation2 + $0x8] sm:$0xf]
  %v1552 = vld [vmem:[#allocation2 + $0x10] sm:$0xf]
  %v1553 = vld [vmem:[#allocation2 + $0x18] sm:$0xf]
  %v1554 = vld [vmem:[#allocation2 + $0x20] sm:$0xf]
  %v1555 = vld [vmem:[#allocation2 + $0x28] sm:$0xf]
  %v1556 = vlaneseq
  %v1557 = vshrl.u32 %v1556, 7
  %v1558 = vsub.s32 5, %v1557
  %v1559 = vrot.slane %v1162, %v1558
  %v1560 = vlaneseq
  %v1561 = vshrl.u32 %v1560, 7
  %v1562 = vsub.s32 5, %v1561
  %v1563 = vrot.slane %v1163, %v1562
  %v1564 = vlaneseq
  %v1565 = vshrl.u32 %v1564, 7
  %v1566 = vsub.s32 5, %v1565
  %v1567 = vrot.slane %v1164, %v1566
  %v1568 = vlaneseq
  %v1569 = vshrl.u32 %v1568, 7
  %v1570 = vsub.s32 5, %v1569
  %v1571 = vrot.slane %v1165, %v1570
  %1576 = vrot.lane.b32.xlu0 %v1559, 10
  %v1577 = vpop.permute.xlu0 %1576
  %1578 = vrot.lane.b32.xlu0 %v1563, 10
  %v1579 = vpop.permute.xlu0 %1578
  %1580 = vrot.lane.b32.xlu0 %v1567, 10
  %v1581 = vpop.permute.xlu0 %1580
  %1582 = vrot.lane.b32.xlu0 %v1571, 10
  %v1583 = vpop.permute.xlu0 %1582
  %vm1584 = vcmask 80896
  %v1585 = vsel %vm1584, %v1577, %v1579
  %v1586 = vsel %vm1584, %v1579, %v1581
  %v1587 = vsel %vm1584, %v1581, %v1583
  %v1593 = vmul.f32 %v1551, %v1577
  %v1594 = vmul.f32 %v1552, %v1585
  %v1595 = vmul.f32 %v1553, %v1586
  %v1596 = vmul.f32 %v1554, %v1587
  %v1597 = vmul.f32 %v1555, %v1583
  %v1603 = vrot.slane %v1593, 4
  %v1604 = vrot.slane %v1594, 4
  %v1605 = vrot.slane %v1595, 4
  %v1606 = vrot.slane %v1596, 4
  %v1607 = vrot.slane %v1597, 4
  %1608 = vrot.lane.b32.xlu0 %v1603, 118
  %v1609 = vpop.permute.xlu0 %1608
  %1610 = vrot.lane.b32.xlu0 %v1604, 118
  %v1611 = vpop.permute.xlu0 %1610
  %1612 = vrot.lane.b32.xlu0 %v1605, 118
  %v1613 = vpop.permute.xlu0 %1612
  %1614 = vrot.lane.b32.xlu0 %v1606, 118
  %v1615 = vpop.permute.xlu0 %1614
  %1616 = vrot.lane.b32.xlu0 %v1607, 118
  %v1617 = vpop.permute.xlu0 %1616
  %vm1618 = vcmask 965632
  %v1619 = vsel %vm1618, %v1609, %v1611
  %v1620 = vsel %vm1618, %v1611, %v1613
  %v1621 = vsel %vm1618, %v1613, %v1615
  %v1622 = vsel %vm1618, %v1615, %v1617
  %1627 = vst [vmem:[#allocation3 + $0x40] sm:$0xf0] %v1619
  %1628 = vst [vmem:[#allocation3 + $0x48] sm:$0xf0] %v1620
  %1629 = vst [vmem:[#allocation3 + $0x50] sm:$0xf0] %v1621
  %1630 = vst [vmem:[#allocation3 + $0x58] sm:$0xf0] %v1622
  %v1631 = vld [vmem:[#allocation2 + $0x8] sm:$0xf]
  %v1632 = vld [vmem:[#allocation2 + $0x10] sm:$0xf]
  %v1633 = vld [vmem:[#allocation2 + $0x18] sm:$0xf]
  %v1634 = vld [vmem:[#allocation2 + $0x20] sm:$0xf]
  %v1635 = vld [vmem:[#allocation2 + $0x28] sm:$0xf]
  %v1636 = vlaneseq
  %v1637 = vshrl.u32 %v1636, 7
  %v1638 = vsub.s32 6, %v1637
  %v1639 = vrot.slane %v1162, %v1638
  %v1640 = vlaneseq
  %v1641 = vshrl.u32 %v1640, 7
  %v1642 = vsub.s32 6, %v1641
  %v1643 = vrot.slane %v1163, %v1642
  %v1644 = vlaneseq
  %v1645 = vshrl.u32 %v1644, 7
  %v1646 = vsub.s32 6, %v1645
  %v1647 = vrot.slane %v1164, %v1646
  %v1648 = vlaneseq
  %v1649 = vshrl.u32 %v1648, 7
  %v1650 = vsub.s32 6, %v1649
  %v1651 = vrot.slane %v1165, %v1650
  %1656 = vrot.lane.b32.xlu0 %v1639, 38
  %v1657 = vpop.permute.xlu0 %1656
  %1658 = vrot.lane.b32.xlu0 %v1643, 38
  %v1659 = vpop.permute.xlu0 %1658
  %1660 = vrot.lane.b32.xlu0 %v1647, 38
  %v1661 = vpop.permute.xlu0 %1660
  %1662 = vrot.lane.b32.xlu0 %v1651, 38
  %v1663 = vpop.permute.xlu0 %1662
  %vm1664 = vcmask 310272
  %v1665 = vsel %vm1664, %v1657, %v1659
  %v1666 = vsel %vm1664, %v1659, %v1661
  %v1667 = vsel %vm1664, %v1661, %v1663
  %v1673 = vmul.f32 %v1631, %v1657
  %v1674 = vmul.f32 %v1632, %v1665
  %v1675 = vmul.f32 %v1633, %v1666
  %v1676 = vmul.f32 %v1634, %v1667
  %v1677 = vmul.f32 %v1635, %v1663
  %1683 = vrot.lane.b32.xlu0 %v1673, 90
  %v1684 = vpop.permute.xlu0 %1683
  %1685 = vrot.lane.b32.xlu0 %v1674, 90
  %v1686 = vpop.permute.xlu0 %1685
  %1687 = vrot.lane.b32.xlu0 %v1675, 90
  %v1688 = vpop.permute.xlu0 %1687
  %1689 = vrot.lane.b32.xlu0 %v1676, 90
  %v1690 = vpop.permute.xlu0 %1689
  %1691 = vrot.lane.b32.xlu0 %v1677, 90
  %v1692 = vpop.permute.xlu0 %1691
  %vm1693 = vcmask 736256
  %v1694 = vsel %vm1693, %v1684, %v1686
  %v1695 = vsel %vm1693, %v1686, %v1688
  %v1696 = vsel %vm1693, %v1688, %v1690
  %v1697 = vsel %vm1693, %v1690, %v1692
  %1702 = vst [vmem:[#allocation3 + $0x60] sm:$0xf] %v1694
  %1703 = vst [vmem:[#allocation3 + $0x68] sm:$0xf] %v1695
  %1704 = vst [vmem:[#allocation3 + $0x70] sm:$0xf] %v1696
  %1705 = vst [vmem:[#allocation3 + $0x78] sm:$0xf] %v1697
  %v1706 = vld [vmem:[#allocation2 + $0x8] sm:$0xf]
  %v1707 = vld [vmem:[#allocation2 + $0x10] sm:$0xf]
  %v1708 = vld [vmem:[#allocation2 + $0x18] sm:$0xf]
  %v1709 = vld [vmem:[#allocation2 + $0x20] sm:$0xf]
  %v1710 = vld [vmem:[#allocation2 + $0x28] sm:$0xf]
  %v1711 = vlaneseq
  %v1712 = vshrl.u32 %v1711, 7
  %v1713 = vsub.s32 7, %v1712
  %v1714 = vrot.slane %v1162, %v1713
  %v1715 = vlaneseq
  %v1716 = vshrl.u32 %v1715, 7
  %v1717 = vsub.s32 7, %v1716
  %v1718 = vrot.slane %v1163, %v1717
  %v1719 = vlaneseq
  %v1720 = vshrl.u32 %v1719, 7
  %v1721 = vsub.s32 7, %v1720
  %v1722 = vrot.slane %v1164, %v1721
  %v1723 = vlaneseq
  %v1724 = vshrl.u32 %v1723, 7
  %v1725 = vsub.s32 7, %v1724
  %v1726 = vrot.slane %v1165, %v1725
  %1731 = vrot.lane.b32.xlu0 %v1714, 40
  %v1732 = vpop.permute.xlu0 %1731
  %1733 = vrot.lane.b32.xlu0 %v1718, 40
  %v1734 = vpop.permute.xlu0 %1733
  %1735 = vrot.lane.b32.xlu0 %v1722, 40
  %v1736 = vpop.permute.xlu0 %1735
  %1737 = vrot.lane.b32.xlu0 %v1726, 40
  %v1738 = vpop.permute.xlu0 %1737
  %vm1739 = vcmask 326656
  %v1740 = vsel %vm1739, %v1732, %v1734
  %v1741 = vsel %vm1739, %v1734, %v1736
  %v1742 = vsel %vm1739, %v1736, %v1738
  %v1748 = vmul.f32 %v1706, %v1732
  %v1749 = vmul.f32 %v1707, %v1740
  %v1750 = vmul.f32 %v1708, %v1741
  %v1751 = vmul.f32 %v1709, %v1742
  %v1752 = vmul.f32 %v1710, %v1738
  %v1758 = vrot.slane %v1748, 4
  %v1759 = vrot.slane %v1749, 4
  %v1760 = vrot.slane %v1750, 4
  %v1761 = vrot.slane %v1751, 4
  %v1762 = vrot.slane %v1752, 4
  %1763 = vrot.lane.b32.xlu0 %v1758, 88
  %v1764 = vpop.permute.xlu0 %1763
  %1765 = vrot.lane.b32.xlu0 %v1759, 88
  %v1766 = vpop.permute.xlu0 %1765
  %1767 = vrot.lane.b32.xlu0 %v1760, 88
  %v1768 = vpop.permute.xlu0 %1767
  %1769 = vrot.lane.b32.xlu0 %v1761, 88
  %v1770 = vpop.permute.xlu0 %1769
  %1771 = vrot.lane.b32.xlu0 %v1762, 88
  %v1772 = vpop.permute.xlu0 %1771
  %vm1773 = vcmask 719872
  %v1774 = vsel %vm1773, %v1764, %v1766
  %v1775 = vsel %vm1773, %v1766, %v1768
  %v1776 = vsel %vm1773, %v1768, %v1770
  %v1777 = vsel %vm1773, %v1770, %v1772
  %1782 = vst [vmem:[#allocation3 + $0x60] sm:$0xf0] %v1774
  %1783 = vst [vmem:[#allocation3 + $0x68] sm:$0xf0] %v1775
  %1784 = vst [vmem:[#allocation3 + $0x70] sm:$0xf0] %v1776
  %1785 = vst [vmem:[#allocation3 + $0x78] sm:$0xf0] %v1777
  %v1786 = vld [vmem:[#allocation2 + $0x8] sm:$0xf]
  %v1787 = vld [vmem:[#allocation2 + $0x10] sm:$0xf]
  %v1788 = vld [vmem:[#allocation2 + $0x18] sm:$0xf]
  %v1789 = vld [vmem:[#allocation2 + $0x20] sm:$0xf]
  %v1790 = vld [vmem:[#allocation2 + $0x28] sm:$0xf]
  %v1791 = vlaneseq
  %v1792 = vshrl.u32 %v1791, 7
  %v1793 = vsub.s32 0, %v1792
  %v1794 = vrot.slane %v1166, %v1793
  %v1795 = vlaneseq
  %v1796 = vshrl.u32 %v1795, 7
  %v1797 = vsub.s32 0, %v1796
  %v1798 = vrot.slane %v1167, %v1797
  %v1799 = vlaneseq
  %v1800 = vshrl.u32 %v1799, 7
  %v1801 = vsub.s32 0, %v1800
  %v1802 = vrot.slane %v1168, %v1801
  %v1803 = vlaneseq
  %v1804 = vshrl.u32 %v1803, 7
  %v1805 = vsub.s32 0, %v1804
  %v1806 = vrot.slane %v1169, %v1805
  %1811 = vrot.lane.b32.xlu0 %v1794, 42
  %v1812 = vpop.permute.xlu0 %1811
  %1813 = vrot.lane.b32.xlu0 %v1798, 42
  %v1814 = vpop.permute.xlu0 %1813
  %1815 = vrot.lane.b32.xlu0 %v1802, 42
  %v1816 = vpop.permute.xlu0 %1815
  %1817 = vrot.lane.b32.xlu0 %v1806, 42
  %v1818 = vpop.permute.xlu0 %1817
  %vm1819 = vcmask 343040
  %v1820 = vsel %vm1819, %v1812, %v1814
  %v1821 = vsel %vm1819, %v1814, %v1816
  %v1822 = vsel %vm1819, %v1816, %v1818
  %v1828 = vmul.f32 %v1786, %v1812
  %v1829 = vmul.f32 %v1787, %v1820
  %v1830 = vmul.f32 %v1788, %v1821
  %v1831 = vmul.f32 %v1789, %v1822
  %v1832 = vmul.f32 %v1790, %v1818
  %1838 = vrot.lane.b32.xlu0 %v1828, 86
  %v1839 = vpop.permute.xlu0 %1838
  %1840 = vrot.lane.b32.xlu0 %v1829, 86
  %v1841 = vpop.permute.xlu0 %1840
  %1842 = vrot.lane.b32.xlu0 %v1830, 86
  %v1843 = vpop.permute.xlu0 %1842
  %1844 = vrot.lane.b32.xlu0 %v1831, 86
  %v1845 = vpop.permute.xlu0 %1844
  %1846 = vrot.lane.b32.xlu0 %v1832, 86
  %v1847 = vpop.permute.xlu0 %1846
  %vm1848 = vcmask 703488
  %v1849 = vsel %vm1848, %v1839, %v1841
  %v1850 = vsel %vm1848, %v1841, %v1843
  %v1851 = vsel %vm1848, %v1843, %v1845
  %v1852 = vsel %vm1848, %v1845, %v1847
  %1857 = vst [vmem:[#allocation3 + $0x80] sm:$0xf] %v1849
  %1858 = vst [vmem:[#allocation3 + $0x88] sm:$0xf] %v1850
  %1859 = vst [vmem:[#allocation3 + $0x90] sm:$0xf] %v1851
  %1860 = vst [vmem:[#allocation3 + $0x98] sm:$0xf] %v1852
  %s1861 = scalar_lea.vmem %s1, 64
  %v1862 = vld [vmem:[%s1861] sm:$0xff]
  %v1863 = vld [vmem:[#allocation3] sm:$0xff]
  %v1864 = vld [vmem:[#allocation3 + $0x8] sm:$0xff]
  %v1865 = vld [vmem:[#allocation3 + $0x10] sm:$0xff]
  %v1866 = vld [vmem:[#allocation3 + $0x18] sm:$0xff]
  %v1867 = vld [vmem:[#allocation3 + $0x20] sm:$0xff]
  %v1868 = vld [vmem:[#allocation3 + $0x28] sm:$0xff]
  %v1869 = vld [vmem:[#allocation3 + $0x30] sm:$0xff]
  %v1870 = vld [vmem:[#allocation3 + $0x38] sm:$0xff]
  %v1871 = vld [vmem:[#allocation3 + $0x40] sm:$0xff]
  %v1872 = vld [vmem:[#allocation3 + $0x48] sm:$0xff]
  %v1873 = vld [vmem:[#allocation3 + $0x50] sm:$0xff]
  %v1874 = vld [vmem:[#allocation3 + $0x58] sm:$0xff]
  %v1875 = vld [vmem:[#allocation3 + $0x60] sm:$0xff]
  %v1876 = vld [vmem:[#allocation3 + $0x68] sm:$0xff]
  %v1877 = vld [vmem:[#allocation3 + $0x70] sm:$0xff]
  %v1878 = vld [vmem:[#allocation3 + $0x78] sm:$0xff]
  %v1879 = vld [vmem:[#allocation3 + $0x80] sm:$0xf]
  %v1880 = vld [vmem:[#allocation3 + $0x88] sm:$0xf]
  %v1881 = vld [vmem:[#allocation3 + $0x90] sm:$0xf]
  %v1882 = vld [vmem:[#allocation3 + $0x98] sm:$0xf]
  %vm1883 = vcmask 293888
  %v1885 = vsel %vm1883, %v1862, 0
  %v1888 = vsel %vm966, %v1879, 0
  %v1891 = vsel %vm966, %v1880, 0
  %v1894 = vsel %vm966, %v1881, 0
  %v1897 = vsel %vm966, %v1882, 0
  %1899 = vmatprep.subr.mxu0 0.0
  %1900 = vmatpush1.msra.mxu0 0.0
  %1901 = vmatprep.subr.mxu0 0.0
  %1902 = vmatpush1.msra.mxu0 0.0
  %1903 = vmatprep.subr.mxu0 0.0
  %1904 = vmatpush1.msra.mxu0 0.0
  %1905 = vmatprep.subr.mxu0 0.0
  %1906 = vmatpush1.msra.mxu0 0.0
  %1907 = vmatprep.subr.mxu0 0.0
  %1908 = vmatpush1.msra.mxu0 0.0
  %1909 = vmatprep.subr.mxu0 0.0
  %1910 = vmatpush1.msra.mxu0 0.0
  %1911 = vmatprep.subr.mxu0 0.0
  %1912 = vmatpush1.msra.mxu0 0.0
  %1913 = vmatprep.subr.mxu0 0.0
  %1914 = vmatpush1.msra.mxu0 0.0
  %1915 = vmatprep.subr.mxu0 0.0
  %1916 = vmatpush1.msra.mxu0 0.0
  %1917 = vmatprep.subr.mxu0 0.0
  %1918 = vmatpush1.msra.mxu0 0.0
  %1919 = vmatprep.subr.mxu0 0.0
  %1920 = vmatpush1.msra.mxu0 0.0
  %1921 = vmatprep.subr.mxu0 %v1891
  %1922 = vmatpush1.msra.mxu0 %v1888
  %1923 = vmatprep.subr.mxu0 %v1876
  %1924 = vmatpush1.msra.mxu0 %v1875
  %1925 = vmatprep.subr.mxu0 %v1872
  %1926 = vmatpush1.msra.mxu0 %v1871
  %1927 = vmatprep.subr.mxu0 %v1868
  %1928 = vmatpush1.msra.mxu0 %v1867
  %1929 = vmatprep.subr.mxu0 %v1864
  %1930 = vmatpush1.msra.mxu0 %v1863
  %1931 = vmatprep.subr.mxu0 0.0
  %1932 = vmatpush2.msra.mxu0 0.0
  %1933 = vmatprep.subr.mxu0 0.0
  %1934 = vmatpush2.msra.mxu0 0.0
  %1935 = vmatprep.subr.mxu0 0.0
  %1936 = vmatpush2.msra.mxu0 0.0
  %1937 = vmatprep.subr.mxu0 0.0
  %1938 = vmatpush2.msra.mxu0 0.0
  %1939 = vmatprep.subr.mxu0 0.0
  %1940 = vmatpush2.msra.mxu0 0.0
  %1941 = vmatprep.subr.mxu0 0.0
  %1942 = vmatpush2.msra.mxu0 0.0
  %1943 = vmatprep.subr.mxu0 0.0
  %1944 = vmatpush2.msra.mxu0 0.0
  %1945 = vmatprep.subr.mxu0 0.0
  %1946 = vmatpush2.msra.mxu0 0.0
  %1947 = vmatprep.subr.mxu0 0.0
  %1948 = vmatpush2.msra.mxu0 0.0
  %1949 = vmatprep.subr.mxu0 0.0
  %1950 = vmatpush2.msra.mxu0 0.0
  %1951 = vmatprep.subr.mxu0 0.0
  %1952 = vmatpush2.msra.mxu0 0.0
  %1953 = vmatprep.subr.mxu0 0.0
  %1954 = vmatpush2.msra.mxu0 0.0
  %1955 = vmatprep.subr.mxu0 0.0
  %1956 = vmatpush2.msra.mxu0 0.0
  %1957 = vmatprep.subr.mxu0 0.0
  %1958 = vmatpush2.msra.mxu0 0.0
  %1959 = vmatprep.subr.mxu0 0.0
  %1960 = vmatpush2.msra.mxu0 0.0
  %1961 = vmatprep.subr.mxu0 0.0
  %1962 = vmatpush2.msra.mxu0 0.0
  %1963 = vmatprep.mubr.f32.mxu0 0.0
  %1964 = vmatmul.mubr.f32.gmra.mxu0 %v1885
  %v1965 = vpop.f32.mrf.mxu0
  %v1966 = vadd.f32 0.0, %v1965
  %v1967 = vpop.f32.mrf.mxu0
  %v1968 = vadd.f32 0.0, %v1967
  %1969 = vdwg.mxu0
  %1970 = vmatprep.subr.mxu0 0.0
  %1971 = vmatpush1.msra.mxu0 0.0
  %1972 = vmatprep.subr.mxu0 0.0
  %1973 = vmatpush1.msra.mxu0 0.0
  %1974 = vmatprep.subr.mxu0 0.0
  %1975 = vmatpush1.msra.mxu0 0.0
  %1976 = vmatprep.subr.mxu0 0.0
  %1977 = vmatpush1.msra.mxu0 0.0
  %1978 = vmatprep.subr.mxu0 0.0
  %1979 = vmatpush1.msra.mxu0 0.0
  %1980 = vmatprep.subr.mxu0 0.0
  %1981 = vmatpush1.msra.mxu0 0.0
  %1982 = vmatprep.subr.mxu0 0.0
  %1983 = vmatpush1.msra.mxu0 0.0
  %1984 = vmatprep.subr.mxu0 0.0
  %1985 = vmatpush1.msra.mxu0 0.0
  %1986 = vmatprep.subr.mxu0 0.0
  %1987 = vmatpush1.msra.mxu0 0.0
  %1988 = vmatprep.subr.mxu0 0.0
  %1989 = vmatpush1.msra.mxu0 0.0
  %1990 = vmatprep.subr.mxu0 0.0
  %1991 = vmatpush1.msra.mxu0 0.0
  %1992 = vmatprep.subr.mxu0 %v1897
  %1993 = vmatpush1.msra.mxu0 %v1894
  %1994 = vmatprep.subr.mxu0 %v1878
  %1995 = vmatpush1.msra.mxu0 %v1877
  %1996 = vmatprep.subr.mxu0 %v1874
  %1997 = vmatpush1.msra.mxu0 %v1873
  %1998 = vmatprep.subr.mxu0 %v1870
  %1999 = vmatpush1.msra.mxu0 %v1869
  %2000 = vmatprep.subr.mxu0 %v1866
  %2001 = vmatpush1.msra.mxu0 %v1865
  %2002 = vmatprep.subr.mxu0 0.0
  %2003 = vmatpush2.msra.mxu0 0.0
  %2004 = vmatprep.subr.mxu0 0.0
  %2005 = vmatpush2.msra.mxu0 0.0
  %2006 = vmatprep.subr.mxu0 0.0
  %2007 = vmatpush2.msra.mxu0 0.0
  %2008 = vmatprep.subr.mxu0 0.0
  %2009 = vmatpush2.msra.mxu0 0.0
  %2010 = vmatprep.subr.mxu0 0.0
  %2011 = vmatpush2.msra.mxu0 0.0
  %2012 = vmatprep.subr.mxu0 0.0
  %2013 = vmatpush2.msra.mxu0 0.0
  %2014 = vmatprep.subr.mxu0 0.0
  %2015 = vmatpush2.msra.mxu0 0.0
  %2016 = vmatprep.subr.mxu0 0.0
  %2017 = vmatpush2.msra.mxu0 0.0
  %2018 = vmatprep.subr.mxu0 0.0
  %2019 = vmatpush2.msra.mxu0 0.0
  %2020 = vmatprep.subr.mxu0 0.0
  %2021 = vmatpush2.msra.mxu0 0.0
  %2022 = vmatprep.subr.mxu0 0.0
  %2023 = vmatpush2.msra.mxu0 0.0
  %2024 = vmatprep.subr.mxu0 0.0
  %2025 = vmatpush2.msra.mxu0 0.0
  %2026 = vmatprep.subr.mxu0 0.0
  %2027 = vmatpush2.msra.mxu0 0.0
  %2028 = vmatprep.subr.mxu0 0.0
  %2029 = vmatpush2.msra.mxu0 0.0
  %2030 = vmatprep.subr.mxu0 0.0
  %2031 = vmatpush2.msra.mxu0 0.0
  %2032 = vmatprep.subr.mxu0 0.0
  %2033 = vmatpush2.msra.mxu0 0.0
  %2034 = vmatprep.mubr.f32.mxu0 0.0
  %2035 = vmatmul.mubr.f32.gmra.mxu0 %v1885
  %v2036 = vpop.f32.mrf.mxu0
  %v2037 = vadd.f32 0.0, %v2036
  %v2038 = vpop.f32.mrf.mxu0
  %v2039 = vadd.f32 0.0, %v2038
  %2040 = vdwg.mxu0
  %v2041 = vlaneseq
  %v2042 = vshrl.u32 %v2041, 7
  %v2043 = vsub.s32 1, %v2042
  %v2044 = vrot.slane %v1166, %v2043
  %v2045 = vlaneseq
  %v2046 = vshrl.u32 %v2045, 7
  %v2047 = vsub.s32 1, %v2046
  %v2048 = vrot.slane %v1167, %v2047
  %v2049 = vlaneseq
  %v2050 = vshrl.u32 %v2049, 7
  %v2051 = vsub.s32 1, %v2050
  %v2052 = vrot.slane %v1168, %v2051
  %v2053 = vlaneseq
  %v2054 = vshrl.u32 %v2053, 7
  %v2055 = vsub.s32 1, %v2054
  %v2056 = vrot.slane %v1169, %v2055
  %v2057 = vmul.f32 %v1966, %v2044
  %v2058 = vmul.f32 %v1968, %v2048
  %v2059 = vmul.f32 %v2037, %v2052
  %v2060 = vmul.f32 %v2039, %v2056
  %v2061 = vadd.f32 %v2057, %v2058
  %v2062 = vadd.f32 %v2061, %v2059
  %v2063 = vadd.f32 %v2062, %v2060
  %2064 = vadd.xlane.f32.xlu0 %v2063
  %v2065 = vpop.xlane.xlu0 %2064
  %v2066 = vmul.f32 %v2065, 0.0078125
  %v2067 = vmul.f32 %v2057, %v1966
  %v2068 = vmul.f32 %v2058, %v1968
  %v2069 = vmul.f32 %v2059, %v2037
  %v2070 = vmul.f32 %v2060, %v2039
  %v2071 = vadd.f32 %v2067, %v2068
  %v2072 = vadd.f32 %v2071, %v2069
  %v2073 = vadd.f32 %v2072, %v2070
  %2074 = vadd.xlane.f32.xlu0 %v2073
  %v2075 = vpop.xlane.xlu0 %2074
  %v2076 = vmul.f32 %v2075, 0.0078125
  %v2077 = vmul.f32 %v2066, %v2066
  %v2078 = vsub.f32 %v2076, %v2077
  %v2079 = vld [vmem:[%s3 + $0x4] sm:$0xff]
  %v2080 = vadd.f32 %v2078, 1e-05
  %v2081 = vrsqrt.pop %v2080
  %v2082 = vmul.f32 %v2079, %v2081
  %v2083 = vmul.f32 %v2082, %v2066
  %2085 = vrot.lane.b32.xlu0 %v2083, 1
  %v2086 = vpop.permute.xlu0 %2085
  %v2088 = vsub.f32 %v2079, %v2086
  %2090 = vset.pattern.permute.xlu0 0
  %2091 = vperm.xlu0 %2090, %v2082
  %v2092 = vpop.permute.xlu0 %2091
  %v2094 = vmul.f32 %v2092, %v1966
  %v2095 = vmul.f32 %v2092, %v1968
  %v2096 = vmul.f32 %v2092, %v2037
  %v2097 = vmul.f32 %v2092, %v2039
  %2099 = vset.pattern.permute.xlu0 1
  %2100 = vperm.xlu0 %2099, %v2088
  %v2101 = vpop.permute.xlu0 %2100
  %v2103 = vadd.f32 %v2094, %v2101
  %v2104 = vadd.f32 %v2095, %v2101
  %v2105 = vadd.f32 %v2096, %v2101
  %v2106 = vadd.f32 %v2097, %v2101
  %v2107 = vmax.f32 %v2103, 0.0
  %v2108 = vmax.f32 %v2104, 0.0
  %v2109 = vmax.f32 %v2105, 0.0
  %v2110 = vmax.f32 %v2106, 0.0
  %2115 = vrot.lane.b32.xlu0 %v2107, 8
  %v2116 = vpop.permute.xlu0 %2115
  %2117 = vrot.lane.b32.xlu0 %v2108, 8
  %v2118 = vpop.permute.xlu0 %2117
  %2119 = vrot.lane.b32.xlu0 %v2109, 8
  %v2120 = vpop.permute.xlu0 %2119
  %2121 = vrot.lane.b32.xlu0 %v2110, 8
  %v2122 = vpop.permute.xlu0 %2121
  %v2123 = vsel %vm55, %v2116, %v2118
  %v2124 = vsel %vm55, %v2118, %v2120
  %v2125 = vsel %vm55, %v2120, %v2122
  %vm2131 = vcmask 1047616
  %2132 = vst.msk [vmem:[#allocation2 + $0x8] sm:$0xff] %vm2131, %v2116
  %2133 = vst [vmem:[#allocation2 + $0x10] sm:$0xff] %v2123
  %2134 = vst [vmem:[#allocation2 + $0x18] sm:$0xff] %v2124
  %2135 = vst [vmem:[#allocation2 + $0x20] sm:$0xff] %v2125
  %2136 = vst.msk [vmem:[#allocation2 + $0x28] sm:$0xff] %vm55, %v2122
  %v2137 = vld [vmem:[#allocation2 + $0x8] sm:$0xff]
  %v2138 = vld [vmem:[#allocation2 + $0x10] sm:$0xff]
  %v2139 = vld [vmem:[#allocation2 + $0x18] sm:$0xff]
  %v2140 = vld [vmem:[#allocation2 + $0x20] sm:$0xff]
  %v2141 = vld [vmem:[#allocation2 + $0x28] sm:$0xff]
  %2147 = vrot.lane.b32.xlu0 %v2137, 118
  %v2148 = vpop.permute.xlu0 %2147
  %2149 = vrot.lane.b32.xlu0 %v2138, 118
  %v2150 = vpop.permute.xlu0 %2149
  %2151 = vrot.lane.b32.xlu0 %v2139, 118
  %v2152 = vpop.permute.xlu0 %2151
  %2153 = vrot.lane.b32.xlu0 %v2140, 118
  %v2154 = vpop.permute.xlu0 %2153
  %2155 = vrot.lane.b32.xlu0 %v2141, 118
  %v2156 = vpop.permute.xlu0 %2155
  %v2157 = vsel %vm1618, %v2148, %v2150
  %v2158 = vsel %vm1618, %v2150, %v2152
  %v2159 = vsel %vm1618, %v2152, %v2154
  %v2160 = vsel %vm1618, %v2154, %v2156
  %v2165 = vmax.f32 %v2107, %v2157
  %v2166 = vmax.f32 %v2108, %v2158
  %v2167 = vmax.f32 %v2109, %v2159
  %v2168 = vmax.f32 %v2110, %v2160
  %2169 = vrot.lane.b32.xlu0 %v2137, 126
  %v2170 = vpop.permute.xlu0 %2169
  %2171 = vrot.lane.b32.xlu0 %v2138, 126
  %v2172 = vpop.permute.xlu0 %2171
  %2173 = vrot.lane.b32.xlu0 %v2139, 126
  %v2174 = vpop.permute.xlu0 %2173
  %2175 = vrot.lane.b32.xlu0 %v2140, 126
  %v2176 = vpop.permute.xlu0 %2175
  %2177 = vrot.lane.b32.xlu0 %v2141, 126
  %v2178 = vpop.permute.xlu0 %2177
  %vm2179 = vcmask 1031168
  %v2180 = vsel %vm2179, %v2170, %v2172
  %v2181 = vsel %vm2179, %v2172, %v2174
  %v2182 = vsel %vm2179, %v2174, %v2176
  %v2183 = vsel %vm2179, %v2176, %v2178
  %v2189 = vmax.f32 %v2137, %v2180
  %v2190 = vmax.f32 %v2138, %v2181
  %v2191 = vmax.f32 %v2139, %v2182
  %v2192 = vmax.f32 %v2140, %v2183
  %v2193 = vmax.f32 %v2141, %v2178
  %2199 = vrot.lane.b32.xlu0 %v2189, 88
  %v2200 = vpop.permute.xlu0 %2199
  %2201 = vrot.lane.b32.xlu0 %v2190, 88
  %v2202 = vpop.permute.xlu0 %2201
  %2203 = vrot.lane.b32.xlu0 %v2191, 88
  %v2204 = vpop.permute.xlu0 %2203
  %2205 = vrot.lane.b32.xlu0 %v2192, 88
  %v2206 = vpop.permute.xlu0 %2205
  %2207 = vrot.lane.b32.xlu0 %v2193, 88
  %v2208 = vpop.permute.xlu0 %2207
  %v2209 = vsel %vm1773, %v2200, %v2202
  %v2210 = vsel %vm1773, %v2202, %v2204
  %v2211 = vsel %vm1773, %v2204, %v2206
  %v2212 = vsel %vm1773, %v2206, %v2208
  %v2217 = vmax.f32 %v2165, %v2209
  %v2218 = vmax.f32 %v2166, %v2210
  %v2219 = vmax.f32 %v2167, %v2211
  %v2220 = vmax.f32 %v2168, %v2212
  %2225 = vrot.lane.b32.xlu0 %v2217, 8
  %v2226 = vpop.permute.xlu0 %2225
  %2227 = vrot.lane.b32.xlu0 %v2218, 8
  %v2228 = vpop.permute.xlu0 %2227
  %2229 = vrot.lane.b32.xlu0 %v2219, 8
  %v2230 = vpop.permute.xlu0 %2229
  %2231 = vrot.lane.b32.xlu0 %v2220, 8
  %v2232 = vpop.permute.xlu0 %2231
  %v2233 = vsel %vm55, %v2226, %v2228
  %v2234 = vsel %vm55, %v2228, %v2230
  %v2235 = vsel %vm55, %v2230, %v2232
  %2241 = vst.msk [vmem:[#allocation2 + $0x8] sm:$0xff] %vm2131, %v2226
  %2242 = vst [vmem:[#allocation2 + $0x10] sm:$0xff] %v2233
  %2243 = vst [vmem:[#allocation2 + $0x18] sm:$0xff] %v2234
  %2244 = vst [vmem:[#allocation2 + $0x20] sm:$0xff] %v2235
  %2245 = vst.msk [vmem:[#allocation2 + $0x28] sm:$0xff] %vm55, %v2232
  %s2246 = scalar_lea.vmem %s2, 128
  %v2247 = vld [vmem:[%s2246] sm:$0xff]
  %v2248 = vld [vmem:[%s2246 + $0x8] sm:$0xff]
  %v2249 = vld [vmem:[%s2246 + $0x10] sm:$0xff]
  %v2250 = vld [vmem:[%s2246 + $0x18] sm:$0xff]
  %v2251 = vld [vmem:[%s2246 + $0x20] sm:$0x3]
  %v2252 = vld [vmem:[%s2246 + $0x28] sm:$0x3]
  %v2253 = vld [vmem:[%s2246 + $0x30] sm:$0x3]
  %v2254 = vld [vmem:[%s2246 + $0x38] sm:$0x3]
  %v2255 = vld [vmem:[#allocation2] sm:$0xff]
  %v2256 = vld [vmem:[#allocation2 + $0x8] sm:$0xff]
  %v2257 = vld [vmem:[#allocation2 + $0x10] sm:$0xff]
  %v2258 = vld [vmem:[#allocation2 + $0x18] sm:$0xff]
  %v2259 = vld [vmem:[#allocation2 + $0x20] sm:$0xff]
  %v2260 = vlaneseq
  %v2261 = vshrl.u32 %v2260, 7
  %v2262 = vsub.s32 0, %v2261
  %v2263 = vrot.slane %v2247, %v2262
  %v2264 = vlaneseq
  %v2265 = vshrl.u32 %v2264, 7
  %v2266 = vsub.s32 0, %v2265
  %v2267 = vrot.slane %v2248, %v2266
  %v2268 = vlaneseq
  %v2269 = vshrl.u32 %v2268, 7
  %v2270 = vsub.s32 0, %v2269
  %v2271 = vrot.slane %v2249, %v2270
  %v2272 = vlaneseq
  %v2273 = vshrl.u32 %v2272, 7
  %v2274 = vsub.s32 0, %v2273
  %v2275 = vrot.slane %v2250, %v2274
  %2280 = vrot.lane.b32.xlu0 %v2263, 68
  %v2281 = vpop.permute.xlu0 %2280
  %2282 = vrot.lane.b32.xlu0 %v2267, 68
  %v2283 = vpop.permute.xlu0 %2282
  %2284 = vrot.lane.b32.xlu0 %v2271, 68
  %v2285 = vpop.permute.xlu0 %2284
  %2286 = vrot.lane.b32.xlu0 %v2275, 68
  %v2287 = vpop.permute.xlu0 %2286
  %vm2288 = vcmask 556032
  %v2289 = vsel %vm2288, %v2281, %v2283
  %v2290 = vsel %vm2288, %v2283, %v2285
  %v2291 = vsel %vm2288, %v2285, %v2287
  %v2297 = vmul.f32 %v2255, %v2281
  %v2298 = vmul.f32 %v2256, %v2289
  %v2299 = vmul.f32 %v2257, %v2290
  %v2300 = vmul.f32 %v2258, %v2291
  %v2301 = vmul.f32 %v2259, %v2287
  %2307 = vrot.lane.b32.xlu0 %v2297, 60
  %v2308 = vpop.permute.xlu0 %2307
  %2309 = vrot.lane.b32.xlu0 %v2298, 60
  %v2310 = vpop.permute.xlu0 %2309
  %2311 = vrot.lane.b32.xlu0 %v2299, 60
  %v2312 = vpop.permute.xlu0 %2311
  %2313 = vrot.lane.b32.xlu0 %v2300, 60
  %v2314 = vpop.permute.xlu0 %2313
  %2315 = vrot.lane.b32.xlu0 %v2301, 60
  %v2316 = vpop.permute.xlu0 %2315
  %vm2317 = vcmask 490496
  %v2318 = vsel %vm2317, %v2308, %v2310
  %v2319 = vsel %vm2317, %v2310, %v2312
  %v2320 = vsel %vm2317, %v2312, %v2314
  %v2321 = vsel %vm2317, %v2314, %v2316
  %2326 = vst [vmem:[#allocation3] sm:$0xff] %v2318
  %2327 = vst [vmem:[#allocation3 + $0x8] sm:$0xff] %v2319
  %2328 = vst [vmem:[#allocation3 + $0x10] sm:$0xff] %v2320
  %2329 = vst [vmem:[#allocation3 + $0x18] sm:$0xff] %v2321
  %v2330 = vld [vmem:[#allocation2] sm:$0xff]
  %v2331 = vld [vmem:[#allocation2 + $0x8] sm:$0xff]
  %v2332 = vld [vmem:[#allocation2 + $0x10] sm:$0xff]
  %v2333 = vld [vmem:[#allocation2 + $0x18] sm:$0xff]
  %v2334 = vld [vmem:[#allocation2 + $0x20] sm:$0xff]
  %v2335 = vlaneseq
  %v2336 = vshrl.u32 %v2335, 7
  %v2337 = vsub.s32 1, %v2336
  %v2338 = vrot.slane %v2247, %v2337
  %v2339 = vlaneseq
  %v2340 = vshrl.u32 %v2339, 7
  %v2341 = vsub.s32 1, %v2340
  %v2342 = vrot.slane %v2248, %v2341
  %v2343 = vlaneseq
  %v2344 = vshrl.u32 %v2343, 7
  %v2345 = vsub.s32 1, %v2344
  %v2346 = vrot.slane %v2249, %v2345
  %v2347 = vlaneseq
  %v2348 = vshrl.u32 %v2347, 7
  %v2349 = vsub.s32 1, %v2348
  %v2350 = vrot.slane %v2250, %v2349
  %2355 = vrot.lane.b32.xlu0 %v2338, 72
  %v2356 = vpop.permute.xlu0 %2355
  %2357 = vrot.lane.b32.xlu0 %v2342, 72
  %v2358 = vpop.permute.xlu0 %2357
  %2359 = vrot.lane.b32.xlu0 %v2346, 72
  %v2360 = vpop.permute.xlu0 %2359
  %2361 = vrot.lane.b32.xlu0 %v2350, 72
  %v2362 = vpop.permute.xlu0 %2361
  %vm2363 = vcmask 588800
  %v2364 = vsel %vm2363, %v2356, %v2358
  %v2365 = vsel %vm2363, %v2358, %v2360
  %v2366 = vsel %vm2363, %v2360, %v2362
  %v2372 = vmul.f32 %v2330, %v2356
  %v2373 = vmul.f32 %v2331, %v2364
  %v2374 = vmul.f32 %v2332, %v2365
  %v2375 = vmul.f32 %v2333, %v2366
  %v2376 = vmul.f32 %v2334, %v2362
  %2382 = vrot.lane.b32.xlu0 %v2372, 56
  %v2383 = vpop.permute.xlu0 %2382
  %2384 = vrot.lane.b32.xlu0 %v2373, 56
  %v2385 = vpop.permute.xlu0 %2384
  %2386 = vrot.lane.b32.xlu0 %v2374, 56
  %v2387 = vpop.permute.xlu0 %2386
  %2388 = vrot.lane.b32.xlu0 %v2375, 56
  %v2389 = vpop.permute.xlu0 %2388
  %2390 = vrot.lane.b32.xlu0 %v2376, 56
  %v2391 = vpop.permute.xlu0 %2390
  %vm2392 = vcmask 457728
  %v2393 = vsel %vm2392, %v2383, %v2385
  %v2394 = vsel %vm2392, %v2385, %v2387
  %v2395 = vsel %vm2392, %v2387, %v2389
  %v2396 = vsel %vm2392, %v2389, %v2391
  %2401 = vst [vmem:[#allocation3 + $0x20] sm:$0xff] %v2393
  %2402 = vst [vmem:[#allocation3 + $0x28] sm:$0xff] %v2394
  %2403 = vst [vmem:[#allocation3 + $0x30] sm:$0xff] %v2395
  %2404 = vst [vmem:[#allocation3 + $0x38] sm:$0xff] %v2396
  %v2405 = vld [vmem:[#allocation2] sm:$0xff]
  %v2406 = vld [vmem:[#allocation2 + $0x8] sm:$0xff]
  %v2407 = vld [vmem:[#allocation2 + $0x10] sm:$0xff]
  %v2408 = vld [vmem:[#allocation2 + $0x18] sm:$0xff]
  %v2409 = vld [vmem:[#allocation2 + $0x20] sm:$0xff]
  %v2410 = vlaneseq
  %v2411 = vshrl.u32 %v2410, 7
  %v2412 = vsub.s32 2, %v2411
  %v2413 = vrot.slane %v2247, %v2412
  %v2414 = vlaneseq
  %v2415 = vshrl.u32 %v2414, 7
  %v2416 = vsub.s32 2, %v2415
  %v2417 = vrot.slane %v2248, %v2416
  %v2418 = vlaneseq
  %v2419 = vshrl.u32 %v2418, 7
  %v2420 = vsub.s32 2, %v2419
  %v2421 = vrot.slane %v2249, %v2420
  %v2422 = vlaneseq
  %v2423 = vshrl.u32 %v2422, 7
  %v2424 = vsub.s32 2, %v2423
  %v2425 = vrot.slane %v2250, %v2424
  %2430 = vrot.lane.b32.xlu0 %v2413, 76
  %v2431 = vpop.permute.xlu0 %2430
  %2432 = vrot.lane.b32.xlu0 %v2417, 76
  %v2433 = vpop.permute.xlu0 %2432
  %2434 = vrot.lane.b32.xlu0 %v2421, 76
  %v2435 = vpop.permute.xlu0 %2434
  %2436 = vrot.lane.b32.xlu0 %v2425, 76
  %v2437 = vpop.permute.xlu0 %2436
  %vm2438 = vcmask 621568
  %v2439 = vsel %vm2438, %v2431, %v2433
  %v2440 = vsel %vm2438, %v2433, %v2435
  %v2441 = vsel %vm2438, %v2435, %v2437
  %v2447 = vmul.f32 %v2405, %v2431
  %v2448 = vmul.f32 %v2406, %v2439
  %v2449 = vmul.f32 %v2407, %v2440
  %v2450 = vmul.f32 %v2408, %v2441
  %v2451 = vmul.f32 %v2409, %v2437
  %2457 = vrot.lane.b32.xlu0 %v2447, 52
  %v2458 = vpop.permute.xlu0 %2457
  %2459 = vrot.lane.b32.xlu0 %v2448, 52
  %v2460 = vpop.permute.xlu0 %2459
  %2461 = vrot.lane.b32.xlu0 %v2449, 52
  %v2462 = vpop.permute.xlu0 %2461
  %2463 = vrot.lane.b32.xlu0 %v2450, 52
  %v2464 = vpop.permute.xlu0 %2463
  %2465 = vrot.lane.b32.xlu0 %v2451, 52
  %v2466 = vpop.permute.xlu0 %2465
  %vm2467 = vcmask 424960
  %v2468 = vsel %vm2467, %v2458, %v2460
  %v2469 = vsel %vm2467, %v2460, %v2462
  %v2470 = vsel %vm2467, %v2462, %v2464
  %v2471 = vsel %vm2467, %v2464, %v2466
  %2476 = vst [vmem:[#allocation3 + $0x40] sm:$0xff] %v2468
  %2477 = vst [vmem:[#allocation3 + $0x48] sm:$0xff] %v2469
  %2478 = vst [vmem:[#allocation3 + $0x50] sm:$0xff] %v2470
  %2479 = vst [vmem:[#allocation3 + $0x58] sm:$0xff] %v2471
  %v2480 = vld [vmem:[#allocation2 + $0x8] sm:$0xff]
  %v2481 = vld [vmem:[#allocation2 + $0x10] sm:$0xff]
  %v2482 = vld [vmem:[#allocation2 + $0x18] sm:$0xff]
  %v2483 = vld [vmem:[#allocation2 + $0x20] sm:$0xff]
  %v2484 = vld [vmem:[#allocation2 + $0x28] sm:$0xff]
  %v2485 = vlaneseq
  %v2486 = vshrl.u32 %v2485, 7
  %v2487 = vsub.s32 3, %v2486
  %v2488 = vrot.slane %v2247, %v2487
  %v2489 = vlaneseq
  %v2490 = vshrl.u32 %v2489, 7
  %v2491 = vsub.s32 3, %v2490
  %v2492 = vrot.slane %v2248, %v2491
  %v2493 = vlaneseq
  %v2494 = vshrl.u32 %v2493, 7
  %v2495 = vsub.s32 3, %v2494
  %v2496 = vrot.slane %v2249, %v2495
  %v2497 = vlaneseq
  %v2498 = vshrl.u32 %v2497, 7
  %v2499 = vsub.s32 3, %v2498
  %v2500 = vrot.slane %v2250, %v2499
  %2505 = vrot.lane.b32.xlu0 %v2488, 4
  %v2506 = vpop.permute.xlu0 %2505
  %2507 = vrot.lane.b32.xlu0 %v2492, 4
  %v2508 = vpop.permute.xlu0 %2507
  %2509 = vrot.lane.b32.xlu0 %v2496, 4
  %v2510 = vpop.permute.xlu0 %2509
  %2511 = vrot.lane.b32.xlu0 %v2500, 4
  %v2512 = vpop.permute.xlu0 %2511
  %vm2513 = vcmask 31744
  %v2514 = vsel %vm2513, %v2506, %v2508
  %v2515 = vsel %vm2513, %v2508, %v2510
  %v2516 = vsel %vm2513, %v2510, %v2512
  %v2522 = vmul.f32 %v2480, %v2506
  %v2523 = vmul.f32 %v2481, %v2514
  %v2524 = vmul.f32 %v2482, %v2515
  %v2525 = vmul.f32 %v2483, %v2516
  %v2526 = vmul.f32 %v2484, %v2512
  %2532 = vrot.lane.b32.xlu0 %v2522, 124
  %v2533 = vpop.permute.xlu0 %2532
  %2534 = vrot.lane.b32.xlu0 %v2523, 124
  %v2535 = vpop.permute.xlu0 %2534
  %2536 = vrot.lane.b32.xlu0 %v2524, 124
  %v2537 = vpop.permute.xlu0 %2536
  %2538 = vrot.lane.b32.xlu0 %v2525, 124
  %v2539 = vpop.permute.xlu0 %2538
  %2540 = vrot.lane.b32.xlu0 %v2526, 124
  %v2541 = vpop.permute.xlu0 %2540
  %vm2542 = vcmask 1014784
  %v2543 = vsel %vm2542, %v2533, %v2535
  %v2544 = vsel %vm2542, %v2535, %v2537
  %v2545 = vsel %vm2542, %v2537, %v2539
  %v2546 = vsel %vm2542, %v2539, %v2541
  %2551 = vst [vmem:[#allocation3 + $0x60] sm:$0xff] %v2543
  %2552 = vst [vmem:[#allocation3 + $0x68] sm:$0xff] %v2544
  %2553 = vst [vmem:[#allocation3 + $0x70] sm:$0xff] %v2545
  %2554 = vst [vmem:[#allocation3 + $0x78] sm:$0xff] %v2546
  %v2555 = vld [vmem:[#allocation2 + $0x8] sm:$0xff]
  %v2556 = vld [vmem:[#allocation2 + $0x10] sm:$0xff]
  %v2557 = vld [vmem:[#allocation2 + $0x18] sm:$0xff]
  %v2558 = vld [vmem:[#allocation2 + $0x20] sm:$0xff]
  %v2559 = vld [vmem:[#allocation2 + $0x28] sm:$0xff]
  %v2560 = vlaneseq
  %v2561 = vshrl.u32 %v2560, 7
  %v2562 = vsub.s32 4, %v2561
  %v2563 = vrot.slane %v2247, %v2562
  %v2564 = vlaneseq
  %v2565 = vshrl.u32 %v2564, 7
  %v2566 = vsub.s32 4, %v2565
  %v2567 = vrot.slane %v2248, %v2566
  %v2568 = vlaneseq
  %v2569 = vshrl.u32 %v2568, 7
  %v2570 = vsub.s32 4, %v2569
  %v2571 = vrot.slane %v2249, %v2570
  %v2572 = vlaneseq
  %v2573 = vshrl.u32 %v2572, 7
  %v2574 = vsub.s32 4, %v2573
  %v2575 = vrot.slane %v2250, %v2574
  %2580 = vrot.lane.b32.xlu0 %v2563, 8
  %v2581 = vpop.permute.xlu0 %2580
  %2582 = vrot.lane.b32.xlu0 %v2567, 8
  %v2583 = vpop.permute.xlu0 %2582
  %2584 = vrot.lane.b32.xlu0 %v2571, 8
  %v2585 = vpop.permute.xlu0 %2584
  %2586 = vrot.lane.b32.xlu0 %v2575, 8
  %v2587 = vpop.permute.xlu0 %2586
  %v2588 = vsel %vm55, %v2581, %v2583
  %v2589 = vsel %vm55, %v2583, %v2585
  %v2590 = vsel %vm55, %v2585, %v2587
  %v2596 = vmul.f32 %v2555, %v2581
  %v2597 = vmul.f32 %v2556, %v2588
  %v2598 = vmul.f32 %v2557, %v2589
  %v2599 = vmul.f32 %v2558, %v2590
  %v2600 = vmul.f32 %v2559, %v2587
  %2606 = vrot.lane.b32.xlu0 %v2596, 120
  %v2607 = vpop.permute.xlu0 %2606
  %2608 = vrot.lane.b32.xlu0 %v2597, 120
  %v2609 = vpop.permute.xlu0 %2608
  %2610 = vrot.lane.b32.xlu0 %v2598, 120
  %v2611 = vpop.permute.xlu0 %2610
  %2612 = vrot.lane.b32.xlu0 %v2599, 120
  %v2613 = vpop.permute.xlu0 %2612
  %2614 = vrot.lane.b32.xlu0 %v2600, 120
  %v2615 = vpop.permute.xlu0 %2614
  %v2616 = vsel %vm187, %v2607, %v2609
  %v2617 = vsel %vm187, %v2609, %v2611
  %v2618 = vsel %vm187, %v2611, %v2613
  %v2619 = vsel %vm187, %v2613, %v2615
  %2624 = vst [vmem:[#allocation3 + $0x80] sm:$0xff] %v2616
  %2625 = vst [vmem:[#allocation3 + $0x88] sm:$0xff] %v2617
  %2626 = vst [vmem:[#allocation3 + $0x90] sm:$0xff] %v2618
  %2627 = vst [vmem:[#allocation3 + $0x98] sm:$0xff] %v2619
  %v2628 = vld [vmem:[#allocation2 + $0x8] sm:$0xff]
  %v2629 = vld [vmem:[#allocation2 + $0x10] sm:$0xff]
  %v2630 = vld [vmem:[#allocation2 + $0x18] sm:$0xff]
  %v2631 = vld [vmem:[#allocation2 + $0x20] sm:$0xff]
  %v2632 = vld [vmem:[#allocation2 + $0x28] sm:$0xff]
  %v2633 = vlaneseq
  %v2634 = vshrl.u32 %v2633, 7
  %v2635 = vsub.s32 5, %v2634
  %v2636 = vrot.slane %v2247, %v2635
  %v2637 = vlaneseq
  %v2638 = vshrl.u32 %v2637, 7
  %v2639 = vsub.s32 5, %v2638
  %v2640 = vrot.slane %v2248, %v2639
  %v2641 = vlaneseq
  %v2642 = vshrl.u32 %v2641, 7
  %v2643 = vsub.s32 5, %v2642
  %v2644 = vrot.slane %v2249, %v2643
  %v2645 = vlaneseq
  %v2646 = vshrl.u32 %v2645, 7
  %v2647 = vsub.s32 5, %v2646
  %v2648 = vrot.slane %v2250, %v2647
  %2653 = vrot.lane.b32.xlu0 %v2636, 12
  %v2654 = vpop.permute.xlu0 %2653
  %2655 = vrot.lane.b32.xlu0 %v2640, 12
  %v2656 = vpop.permute.xlu0 %2655
  %2657 = vrot.lane.b32.xlu0 %v2644, 12
  %v2658 = vpop.permute.xlu0 %2657
  %2659 = vrot.lane.b32.xlu0 %v2648, 12
  %v2660 = vpop.permute.xlu0 %2659
  %vm2661 = vcmask 97280
  %v2662 = vsel %vm2661, %v2654, %v2656
  %v2663 = vsel %vm2661, %v2656, %v2658
  %v2664 = vsel %vm2661, %v2658, %v2660
  %v2670 = vmul.f32 %v2628, %v2654
  %v2671 = vmul.f32 %v2629, %v2662
  %v2672 = vmul.f32 %v2630, %v2663
  %v2673 = vmul.f32 %v2631, %v2664
  %v2674 = vmul.f32 %v2632, %v2660
  %2680 = vrot.lane.b32.xlu0 %v2670, 116
  %v2681 = vpop.permute.xlu0 %2680
  %2682 = vrot.lane.b32.xlu0 %v2671, 116
  %v2683 = vpop.permute.xlu0 %2682
  %2684 = vrot.lane.b32.xlu0 %v2672, 116
  %v2685 = vpop.permute.xlu0 %2684
  %2686 = vrot.lane.b32.xlu0 %v2673, 116
  %v2687 = vpop.permute.xlu0 %2686
  %2688 = vrot.lane.b32.xlu0 %v2674, 116
  %v2689 = vpop.permute.xlu0 %2688
  %vm2690 = vcmask 949248
  %v2691 = vsel %vm2690, %v2681, %v2683
  %v2692 = vsel %vm2690, %v2683, %v2685
  %v2693 = vsel %vm2690, %v2685, %v2687
  %v2694 = vsel %vm2690, %v2687, %v2689
  %2699 = vst [vmem:[#allocation3 + $0xa0] sm:$0xff] %v2691
  %2700 = vst [vmem:[#allocation3 + $0xa8] sm:$0xff] %v2692
  %2701 = vst [vmem:[#allocation3 + $0xb0] sm:$0xff] %v2693
  %2702 = vst [vmem:[#allocation3 + $0xb8] sm:$0xff] %v2694
  %v2703 = vld [vmem:[#allocation2 + $0x8] sm:$0xff]
  %v2704 = vld [vmem:[#allocation2 + $0x10] sm:$0xff]
  %v2705 = vld [vmem:[#allocation2 + $0x18] sm:$0xff]
  %v2706 = vld [vmem:[#allocation2 + $0x20] sm:$0xff]
  %v2707 = vld [vmem:[#allocation2 + $0x28] sm:$0xff]
  %v2708 = vlaneseq
  %v2709 = vshrl.u32 %v2708, 7
  %v2710 = vsub.s32 6, %v2709
  %v2711 = vrot.slane %v2247, %v2710
  %v2712 = vlaneseq
  %v2713 = vshrl.u32 %v2712, 7
  %v2714 = vsub.s32 6, %v2713
  %v2715 = vrot.slane %v2248, %v2714
  %v2716 = vlaneseq
  %v2717 = vshrl.u32 %v2716, 7
  %v2718 = vsub.s32 6, %v2717
  %v2719 = vrot.slane %v2249, %v2718
  %v2720 = vlaneseq
  %v2721 = vshrl.u32 %v2720, 7
  %v2722 = vsub.s32 6, %v2721
  %v2723 = vrot.slane %v2250, %v2722
  %2728 = vrot.lane.b32.xlu0 %v2711, 68
  %v2729 = vpop.permute.xlu0 %2728
  %2730 = vrot.lane.b32.xlu0 %v2715, 68
  %v2731 = vpop.permute.xlu0 %2730
  %2732 = vrot.lane.b32.xlu0 %v2719, 68
  %v2733 = vpop.permute.xlu0 %2732
  %2734 = vrot.lane.b32.xlu0 %v2723, 68
  %v2735 = vpop.permute.xlu0 %2734
  %v2736 = vsel %vm2288, %v2729, %v2731
  %v2737 = vsel %vm2288, %v2731, %v2733
  %v2738 = vsel %vm2288, %v2733, %v2735
  %v2744 = vmul.f32 %v2703, %v2729
  %v2745 = vmul.f32 %v2704, %v2736
  %v2746 = vmul.f32 %v2705, %v2737
  %v2747 = vmul.f32 %v2706, %v2738
  %v2748 = vmul.f32 %v2707, %v2735
  %2754 = vrot.lane.b32.xlu0 %v2744, 60
  %v2755 = vpop.permute.xlu0 %2754
  %2756 = vrot.lane.b32.xlu0 %v2745, 60
  %v2757 = vpop.permute.xlu0 %2756
  %2758 = vrot.lane.b32.xlu0 %v2746, 60
  %v2759 = vpop.permute.xlu0 %2758
  %2760 = vrot.lane.b32.xlu0 %v2747, 60
  %v2761 = vpop.permute.xlu0 %2760
  %2762 = vrot.lane.b32.xlu0 %v2748, 60
  %v2763 = vpop.permute.xlu0 %2762
  %v2764 = vsel %vm2317, %v2755, %v2757
  %v2765 = vsel %vm2317, %v2757, %v2759
  %v2766 = vsel %vm2317, %v2759, %v2761
  %v2767 = vsel %vm2317, %v2761, %v2763
  %2772 = vst [vmem:[#allocation3 + $0xc0] sm:$0xff] %v2764
  %2773 = vst [vmem:[#allocation3 + $0xc8] sm:$0xff] %v2765
  %2774 = vst [vmem:[#allocation3 + $0xd0] sm:$0xff] %v2766
  %2775 = vst [vmem:[#allocation3 + $0xd8] sm:$0xff] %v2767
  %v2776 = vld [vmem:[#allocation2 + $0x8] sm:$0xff]
  %v2777 = vld [vmem:[#allocation2 + $0x10] sm:$0xff]
  %v2778 = vld [vmem:[#allocation2 + $0x18] sm:$0xff]
  %v2779 = vld [vmem:[#allocation2 + $0x20] sm:$0xff]
  %v2780 = vld [vmem:[#allocation2 + $0x28] sm:$0xff]
  %v2781 = vlaneseq
  %v2782 = vshrl.u32 %v2781, 7
  %v2783 = vsub.s32 7, %v2782
  %v2784 = vrot.slane %v2247, %v2783
  %v2785 = vlaneseq
  %v2786 = vshrl.u32 %v2785, 7
  %v2787 = vsub.s32 7, %v2786
  %v2788 = vrot.slane %v2248, %v2787
  %v2789 = vlaneseq
  %v2790 = vshrl.u32 %v2789, 7
  %v2791 = vsub.s32 7, %v2790
  %v2792 = vrot.slane %v2249, %v2791
  %v2793 = vlaneseq
  %v2794 = vshrl.u32 %v2793, 7
  %v2795 = vsub.s32 7, %v2794
  %v2796 = vrot.slane %v2250, %v2795
  %2801 = vrot.lane.b32.xlu0 %v2784, 72
  %v2802 = vpop.permute.xlu0 %2801
  %2803 = vrot.lane.b32.xlu0 %v2788, 72
  %v2804 = vpop.permute.xlu0 %2803
  %2805 = vrot.lane.b32.xlu0 %v2792, 72
  %v2806 = vpop.permute.xlu0 %2805
  %2807 = vrot.lane.b32.xlu0 %v2796, 72
  %v2808 = vpop.permute.xlu0 %2807
  %v2809 = vsel %vm2363, %v2802, %v2804
  %v2810 = vsel %vm2363, %v2804, %v2806
  %v2811 = vsel %vm2363, %v2806, %v2808
  %v2817 = vmul.f32 %v2776, %v2802
  %v2818 = vmul.f32 %v2777, %v2809
  %v2819 = vmul.f32 %v2778, %v2810
  %v2820 = vmul.f32 %v2779, %v2811
  %v2821 = vmul.f32 %v2780, %v2808
  %2827 = vrot.lane.b32.xlu0 %v2817, 56
  %v2828 = vpop.permute.xlu0 %2827
  %2829 = vrot.lane.b32.xlu0 %v2818, 56
  %v2830 = vpop.permute.xlu0 %2829
  %2831 = vrot.lane.b32.xlu0 %v2819, 56
  %v2832 = vpop.permute.xlu0 %2831
  %2833 = vrot.lane.b32.xlu0 %v2820, 56
  %v2834 = vpop.permute.xlu0 %2833
  %2835 = vrot.lane.b32.xlu0 %v2821, 56
  %v2836 = vpop.permute.xlu0 %2835
  %v2837 = vsel %vm2392, %v2828, %v2830
  %v2838 = vsel %vm2392, %v2830, %v2832
  %v2839 = vsel %vm2392, %v2832, %v2834
  %v2840 = vsel %vm2392, %v2834, %v2836
  %2845 = vst [vmem:[#allocation3 + $0xe0] sm:$0xff] %v2837
  %2846 = vst [vmem:[#allocation3 + $0xe8] sm:$0xff] %v2838
  %2847 = vst [vmem:[#allocation3 + $0xf0] sm:$0xff] %v2839
  %2848 = vst [vmem:[#allocation3 + $0xf8] sm:$0xff] %v2840
  %v2849 = vld [vmem:[#allocation2 + $0x8] sm:$0xff]
  %v2850 = vld [vmem:[#allocation2 + $0x10] sm:$0xff]
  %v2851 = vld [vmem:[#allocation2 + $0x18] sm:$0xff]
  %v2852 = vld [vmem:[#allocation2 + $0x20] sm:$0xff]
  %v2853 = vld [vmem:[#allocation2 + $0x28] sm:$0xff]
  %v2854 = vlaneseq
  %v2855 = vshrl.u32 %v2854, 7
  %v2856 = vsub.s32 0, %v2855
  %v2857 = vrot.slane %v2251, %v2856
  %v2858 = vlaneseq
  %v2859 = vshrl.u32 %v2858, 7
  %v2860 = vsub.s32 0, %v2859
  %v2861 = vrot.slane %v2252, %v2860
  %v2862 = vlaneseq
  %v2863 = vshrl.u32 %v2862, 7
  %v2864 = vsub.s32 0, %v2863
  %v2865 = vrot.slane %v2253, %v2864
  %v2866 = vlaneseq
  %v2867 = vshrl.u32 %v2866, 7
  %v2868 = vsub.s32 0, %v2867
  %v2869 = vrot.slane %v2254, %v2868
  %2874 = vrot.lane.b32.xlu0 %v2857, 76
  %v2875 = vpop.permute.xlu0 %2874
  %2876 = vrot.lane.b32.xlu0 %v2861, 76
  %v2877 = vpop.permute.xlu0 %2876
  %2878 = vrot.lane.b32.xlu0 %v2865, 76
  %v2879 = vpop.permute.xlu0 %2878
  %2880 = vrot.lane.b32.xlu0 %v2869, 76
  %v2881 = vpop.permute.xlu0 %2880
  %v2882 = vsel %vm2438, %v2875, %v2877
  %v2883 = vsel %vm2438, %v2877, %v2879
  %v2884 = vsel %vm2438, %v2879, %v2881
  %v2890 = vmul.f32 %v2849, %v2875
  %v2891 = vmul.f32 %v2850, %v2882
  %v2892 = vmul.f32 %v2851, %v2883
  %v2893 = vmul.f32 %v2852, %v2884
  %v2894 = vmul.f32 %v2853, %v2881
  %2900 = vrot.lane.b32.xlu0 %v2890, 52
  %v2901 = vpop.permute.xlu0 %2900
  %2902 = vrot.lane.b32.xlu0 %v2891, 52
  %v2903 = vpop.permute.xlu0 %2902
  %2904 = vrot.lane.b32.xlu0 %v2892, 52
  %v2905 = vpop.permute.xlu0 %2904
  %2906 = vrot.lane.b32.xlu0 %v2893, 52
  %v2907 = vpop.permute.xlu0 %2906
  %2908 = vrot.lane.b32.xlu0 %v2894, 52
  %v2909 = vpop.permute.xlu0 %2908
  %v2910 = vsel %vm2467, %v2901, %v2903
  %v2911 = vsel %vm2467, %v2903, %v2905
  %v2912 = vsel %vm2467, %v2905, %v2907
  %v2913 = vsel %vm2467, %v2907, %v2909
  %2918 = vst [vmem:[#allocation3 + $0x100] sm:$0xff] %v2910
  %2919 = vst [vmem:[#allocation3 + $0x108] sm:$0xff] %v2911
  %2920 = vst [vmem:[#allocation3 + $0x110] sm:$0xff] %v2912
  %2921 = vst [vmem:[#allocation3 + $0x118] sm:$0xff] %v2913
  %s2922 = scalar_lea.vmem %s1, 128
  %v2923 = vld [vmem:[%s2922] sm:$0xff]
  %v2924 = vld [vmem:[%s2922 + $0x10] sm:$0xff]
  %v2925 = vld [vmem:[#allocation3] sm:$0xff]
  %v2926 = vld [vmem:[#allocation3 + $0x8] sm:$0xff]
  %v2927 = vld [vmem:[#allocation3 + $0x10] sm:$0xff]
  %v2928 = vld [vmem:[#allocation3 + $0x18] sm:$0xff]
  %v2929 = vld [vmem:[#allocation3 + $0x20] sm:$0xff]
  %v2930 = vld [vmem:[#allocation3 + $0x28] sm:$0xff]
  %v2931 = vld [vmem:[#allocation3 + $0x30] sm:$0xff]
  %v2932 = vld [vmem:[#allocation3 + $0x38] sm:$0xff]
  %v2933 = vld [vmem:[#allocation3 + $0x40] sm:$0xff]
  %v2934 = vld [vmem:[#allocation3 + $0x48] sm:$0xff]
  %v2935 = vld [vmem:[#allocation3 + $0x50] sm:$0xff]
  %v2936 = vld [vmem:[#allocation3 + $0x58] sm:$0xff]
  %v2937 = vld [vmem:[#allocation3 + $0x60] sm:$0xff]
  %v2938 = vld [vmem:[#allocation3 + $0x68] sm:$0xff]
  %v2939 = vld [vmem:[#allocation3 + $0x70] sm:$0xff]
  %v2940 = vld [vmem:[#allocation3 + $0x78] sm:$0xff]
  %v2941 = vld [vmem:[#allocation3 + $0x80] sm:$0xff]
  %v2942 = vld [vmem:[#allocation3 + $0x88] sm:$0xff]
  %v2943 = vld [vmem:[#allocation3 + $0x90] sm:$0xff]
  %v2944 = vld [vmem:[#allocation3 + $0x98] sm:$0xff]
  %v2945 = vld [vmem:[#allocation3 + $0xa0] sm:$0xff]
  %v2946 = vld [vmem:[#allocation3 + $0xa8] sm:$0xff]
  %v2947 = vld [vmem:[#allocation3 + $0xb0] sm:$0xff]
  %v2948 = vld [vmem:[#allocation3 + $0xb8] sm:$0xff]
  %v2949 = vld [vmem:[#allocation3 + $0xc0] sm:$0xff]
  %v2950 = vld [vmem:[#allocation3 + $0xc8] sm:$0xff]
  %v2951 = vld [vmem:[#allocation3 + $0xd0] sm:$0xff]
  %v2952 = vld [vmem:[#allocation3 + $0xd8] sm:$0xff]
  %v2953 = vld [vmem:[#allocation3 + $0xe0] sm:$0xff]
  %v2954 = vld [vmem:[#allocation3 + $0xe8] sm:$0xff]
  %v2955 = vld [vmem:[#allocation3 + $0xf0] sm:$0xff]
  %v2956 = vld [vmem:[#allocation3 + $0xf8] sm:$0xff]
  %v2957 = vld [vmem:[#allocation3 + $0x100] sm:$0xff]
  %v2958 = vld [vmem:[#allocation3 + $0x108] sm:$0xff]
  %v2959 = vld [vmem:[#allocation3 + $0x110] sm:$0xff]
  %v2960 = vld [vmem:[#allocation3 + $0x118] sm:$0xff]
  %v2962 = vsel %vm2363, %v2923, 0
  %v2965 = vsel %vm2363, %v2924, 0
  %2967 = vmatprep.subr.mxu0 0.0
  %2968 = vmatpush1.msra.mxu0 0.0
  %2969 = vmatprep.subr.mxu0 0.0
  %2970 = vmatpush1.msra.mxu0 0.0
  %2971 = vmatprep.subr.mxu0 0.0
  %2972 = vmatpush1.msra.mxu0 0.0
  %2973 = vmatprep.subr.mxu0 0.0
  %2974 = vmatpush1.msra.mxu0 0.0
  %2975 = vmatprep.subr.mxu0 0.0
  %2976 = vmatpush1.msra.mxu0 0.0
  %2977 = vmatprep.subr.mxu0 0.0
  %2978 = vmatpush1.msra.mxu0 0.0
  %2979 = vmatprep.subr.mxu0 0.0
  %2980 = vmatpush1.msra.mxu0 0.0
  %2981 = vmatprep.subr.mxu0 %v2958
  %2982 = vmatpush1.msra.mxu0 %v2957
  %2983 = vmatprep.subr.mxu0 %v2954
  %2984 = vmatpush1.msra.mxu0 %v2953
  %2985 = vmatprep.subr.mxu0 %v2950
  %2986 = vmatpush1.msra.mxu0 %v2949
  %2987 = vmatprep.subr.mxu0 %v2946
  %2988 = vmatpush1.msra.mxu0 %v2945
  %2989 = vmatprep.subr.mxu0 %v2942
  %2990 = vmatpush1.msra.mxu0 %v2941
  %2991 = vmatprep.subr.mxu0 %v2938
  %2992 = vmatpush1.msra.mxu0 %v2937
  %2993 = vmatprep.subr.mxu0 %v2934
  %2994 = vmatpush1.msra.mxu0 %v2933
  %2995 = vmatprep.subr.mxu0 %v2930
  %2996 = vmatpush1.msra.mxu0 %v2929
  %2997 = vmatprep.subr.mxu0 %v2926
  %2998 = vmatpush1.msra.mxu0 %v2925
  %2999 = vmatprep.subr.mxu0 0.0
  %3000 = vmatpush2.msra.mxu0 0.0
  %3001 = vmatprep.subr.mxu0 0.0
  %3002 = vmatpush2.msra.mxu0 0.0
  %3003 = vmatprep.subr.mxu0 0.0
  %3004 = vmatpush2.msra.mxu0 0.0
  %3005 = vmatprep.subr.mxu0 0.0
  %3006 = vmatpush2.msra.mxu0 0.0
  %3007 = vmatprep.subr.mxu0 0.0
  %3008 = vmatpush2.msra.mxu0 0.0
  %3009 = vmatprep.subr.mxu0 0.0
  %3010 = vmatpush2.msra.mxu0 0.0
  %3011 = vmatprep.subr.mxu0 0.0
  %3012 = vmatpush2.msra.mxu0 0.0
  %3013 = vmatprep.subr.mxu0 0.0
  %3014 = vmatpush2.msra.mxu0 0.0
  %3015 = vmatprep.subr.mxu0 0.0
  %3016 = vmatpush2.msra.mxu0 0.0
  %3017 = vmatprep.subr.mxu0 0.0
  %3018 = vmatpush2.msra.mxu0 0.0
  %3019 = vmatprep.subr.mxu0 0.0
  %3020 = vmatpush2.msra.mxu0 0.0
  %3021 = vmatprep.subr.mxu0 0.0
  %3022 = vmatpush2.msra.mxu0 0.0
  %3023 = vmatprep.subr.mxu0 0.0
  %3024 = vmatpush2.msra.mxu0 0.0
  %3025 = vmatprep.subr.mxu0 0.0
  %3026 = vmatpush2.msra.mxu0 0.0
  %3027 = vmatprep.subr.mxu0 0.0
  %3028 = vmatpush2.msra.mxu0 0.0
  %3029 = vmatprep.subr.mxu0 0.0
  %3030 = vmatpush2.msra.mxu0 0.0
  %3031 = vmatprep.mubr.f32.mxu0 0.0
  %3032 = vmatmul.mubr.f32.gmra.mxu0 %v2962
  %v3033 = vpop.f32.mrf.mxu0
  %v3034 = vadd.f32 0.0, %v3033
  %v3035 = vpop.f32.mrf.mxu0
  %v3036 = vadd.f32 0.0, %v3035
  %3037 = vmatprep.mubr.f32.mxu0 0.0
  %3038 = vmatmul.mubr.f32.gmra.mxu0 %v2965
  %v3039 = vpop.f32.mrf.mxu0
  %v3040 = vadd.f32 0.0, %v3039
  %v3041 = vpop.f32.mrf.mxu0
  %v3042 = vadd.f32 0.0, %v3041
  %3043 = vdwg.mxu0
  %3044 = vmatprep.subr.mxu0 0.0
  %3045 = vmatpush1.msra.mxu0 0.0
  %3046 = vmatprep.subr.mxu0 0.0
  %3047 = vmatpush1.msra.mxu0 0.0
  %3048 = vmatprep.subr.mxu0 0.0
  %3049 = vmatpush1.msra.mxu0 0.0
  %3050 = vmatprep.subr.mxu0 0.0
  %3051 = vmatpush1.msra.mxu0 0.0
  %3052 = vmatprep.subr.mxu0 0.0
  %3053 = vmatpush1.msra.mxu0 0.0
  %3054 = vmatprep.subr.mxu0 0.0
  %3055 = vmatpush1.msra.mxu0 0.0
  %3056 = vmatprep.subr.mxu0 0.0
  %3057 = vmatpush1.msra.mxu0 0.0
  %3058 = vmatprep.subr.mxu0 %v2960
  %3059 = vmatpush1.msra.mxu0 %v2959
  %3060 = vmatprep.subr.mxu0 %v2956
  %3061 = vmatpush1.msra.mxu0 %v2955
  %3062 = vmatprep.subr.mxu0 %v2952
  %3063 = vmatpush1.msra.mxu0 %v2951
  %3064 = vmatprep.subr.mxu0 %v2948
  %3065 = vmatpush1.msra.mxu0 %v2947
  %3066 = vmatprep.subr.mxu0 %v2944
  %3067 = vmatpush1.msra.mxu0 %v2943
  %3068 = vmatprep.subr.mxu0 %v2940
  %3069 = vmatpush1.msra.mxu0 %v2939
  %3070 = vmatprep.subr.mxu0 %v2936
  %3071 = vmatpush1.msra.mxu0 %v2935
  %3072 = vmatprep.subr.mxu0 %v2932
  %3073 = vmatpush1.msra.mxu0 %v2931
  %3074 = vmatprep.subr.mxu0 %v2928
  %3075 = vmatpush1.msra.mxu0 %v2927
  %3076 = vmatprep.subr.mxu0 0.0
  %3077 = vmatpush2.msra.mxu0 0.0
  %3078 = vmatprep.subr.mxu0 0.0
  %3079 = vmatpush2.msra.mxu0 0.0
  %3080 = vmatprep.subr.mxu0 0.0
  %3081 = vmatpush2.msra.mxu0 0.0
  %3082 = vmatprep.subr.mxu0 0.0
  %3083 = vmatpush2.msra.mxu0 0.0
  %3084 = vmatprep.subr.mxu0 0.0
  %3085 = vmatpush2.msra.mxu0 0.0
  %3086 = vmatprep.subr.mxu0 0.0
  %3087 = vmatpush2.msra.mxu0 0.0
  %3088 = vmatprep.subr.mxu0 0.0
  %3089 = vmatpush2.msra.mxu0 0.0
  %3090 = vmatprep.subr.mxu0 0.0
  %3091 = vmatpush2.msra.mxu0 0.0
  %3092 = vmatprep.subr.mxu0 0.0
  %3093 = vmatpush2.msra.mxu0 0.0
  %3094 = vmatprep.subr.mxu0 0.0
  %3095 = vmatpush2.msra.mxu0 0.0
  %3096 = vmatprep.subr.mxu0 0.0
  %3097 = vmatpush2.msra.mxu0 0.0
  %3098 = vmatprep.subr.mxu0 0.0
  %3099 = vmatpush2.msra.mxu0 0.0
  %3100 = vmatprep.subr.mxu0 0.0
  %3101 = vmatpush2.msra.mxu0 0.0
  %3102 = vmatprep.subr.mxu0 0.0
  %3103 = vmatpush2.msra.mxu0 0.0
  %3104 = vmatprep.subr.mxu0 0.0
  %3105 = vmatpush2.msra.mxu0 0.0
  %3106 = vmatprep.subr.mxu0 0.0
  %3107 = vmatpush2.msra.mxu0 0.0
  %3108 = vmatprep.mubr.f32.mxu0 0.0
  %3109 = vmatmul.mubr.f32.gmra.mxu0 %v2962
  %v3110 = vpop.f32.mrf.mxu0
  %v3111 = vadd.f32 0.0, %v3110
  %v3112 = vpop.f32.mrf.mxu0
  %v3113 = vadd.f32 0.0, %v3112
  %3114 = vmatprep.mubr.f32.mxu0 0.0
  %3115 = vmatmul.mubr.f32.gmra.mxu0 %v2965
  %v3116 = vpop.f32.mrf.mxu0
  %v3117 = vadd.f32 0.0, %v3116
  %v3118 = vpop.f32.mrf.mxu0
  %v3119 = vadd.f32 0.0, %v3118
  %3120 = vdwg.mxu0
  %v3121 = vlaneseq
  %v3122 = vshrl.u32 %v3121, 7
  %v3123 = vsub.s32 1, %v3122
  %v3124 = vrot.slane %v2251, %v3123
  %v3125 = vlaneseq
  %v3126 = vshrl.u32 %v3125, 7
  %v3127 = vsub.s32 1, %v3126
  %v3128 = vrot.slane %v2252, %v3127
  %v3129 = vlaneseq
  %v3130 = vshrl.u32 %v3129, 7
  %v3131 = vsub.s32 1, %v3130
  %v3132 = vrot.slane %v2253, %v3131
  %v3133 = vlaneseq
  %v3134 = vshrl.u32 %v3133, 7
  %v3135 = vsub.s32 1, %v3134
  %v3136 = vrot.slane %v2254, %v3135
  %v3137 = vmul.f32 %v3034, %v3124
  %v3138 = vmul.f32 %v3036, %v3128
  %v3139 = vmul.f32 %v3111, %v3132
  %v3140 = vmul.f32 %v3113, %v3136
  %v3141 = vmul.f32 %v3040, %v3124
  %v3142 = vmul.f32 %v3042, %v3128
  %v3143 = vmul.f32 %v3117, %v3132
  %v3144 = vmul.f32 %v3119, %v3136
  %v3145 = vadd.f32 %v3137, %v3138
  %v3146 = vadd.f32 %v3145, %v3139
  %v3147 = vadd.f32 %v3146, %v3140
  %3148 = vadd.xlane.f32.xlu0 %v3147
  %v3149 = vpop.xlane.xlu0 %3148
  %v3150 = vadd.f32 %v3141, %v3142
  %v3151 = vadd.f32 %v3150, %v3143
  %v3152 = vadd.f32 %v3151, %v3144
  %3153 = vadd.xlane.f32.xlu0 %v3152
  %v3154 = vpop.xlane.xlu0 %3153
  %v3155 = vmul.f32 %v3149, 0.03125
  %v3156 = vmul.f32 %v3154, 0.03125
  %v3157 = vmul.f32 %v3137, %v3034
  %v3158 = vmul.f32 %v3138, %v3036
  %v3159 = vmul.f32 %v3139, %v3111
  %v3160 = vmul.f32 %v3140, %v3113
  %v3161 = vmul.f32 %v3141, %v3040
  %v3162 = vmul.f32 %v3142, %v3042
  %v3163 = vmul.f32 %v3143, %v3117
  %v3164 = vmul.f32 %v3144, %v3119
  %v3165 = vadd.f32 %v3157, %v3158
  %v3166 = vadd.f32 %v3165, %v3159
  %v3167 = vadd.f32 %v3166, %v3160
  %3168 = vadd.xlane.f32.xlu0 %v3167
  %v3169 = vpop.xlane.xlu0 %3168
  %v3170 = vadd.f32 %v3161, %v3162
  %v3171 = vadd.f32 %v3170, %v3163
  %v3172 = vadd.f32 %v3171, %v3164
  %3173 = vadd.xlane.f32.xlu0 %v3172
  %v3174 = vpop.xlane.xlu0 %3173
  %v3175 = vmul.f32 %v3169, 0.03125
  %v3176 = vmul.f32 %v3174, 0.03125
  %v3177 = vmul.f32 %v3155, %v3155
  %v3178 = vmul.f32 %v3156, %v3156
  %v3179 = vsub.f32 %v3175, %v3177
  %v3180 = vsub.f32 %v3176, %v3178
  %v3181 = vld [vmem:[%s3 + $0xc] sm:$0xff]
  %v3182 = vld [vmem:[%s3 + $0x14] sm:$0xff]
  %v3183 = vadd.f32 %v3179, 1e-05
  %v3184 = vadd.f32 %v3180, 1e-05
  %v3185 = vrsqrt.pop %v3183
  %v3186 = vrsqrt.pop %v3184
  %v3187 = vmul.f32 %v3181, %v3185
  %v3188 = vmul.f32 %v3182, %v3186
  %v3189 = vmul.f32 %v3187, %v3155
  %v3190 = vmul.f32 %v3188, %v3156
  %3193 = vrot.lane.b32.xlu0 %v3189, 1
  %v3194 = vpop.permute.xlu0 %3193
  %3195 = vrot.lane.b32.xlu0 %v3190, 1
  %v3196 = vpop.permute.xlu0 %3195
  %v3199 = vsub.f32 %v3181, %v3194
  %v3200 = vsub.f32 %v3182, %v3196
  %3202 = vset.pattern.permute.xlu0 0
  %3203 = vperm.xlu0 %3202, %v3187
  %v3204 = vpop.permute.xlu0 %3203
  %3207 = vset.pattern.permute.xlu0 0
  %3208 = vperm.xlu0 %3207, %v3188
  %v3209 = vpop.permute.xlu0 %3208
  %v3211 = vmul.f32 %v3204, %v3034
  %v3212 = vmul.f32 %v3204, %v3036
  %v3213 = vmul.f32 %v3204, %v3111
  %v3214 = vmul.f32 %v3204, %v3113
  %v3215 = vmul.f32 %v3209, %v3040
  %v3216 = vmul.f32 %v3209, %v3042
  %v3217 = vmul.f32 %v3209, %v3117
  %v3218 = vmul.f32 %v3209, %v3119
  %3220 = vset.pattern.permute.xlu0 1
  %3221 = vperm.xlu0 %3220, %v3199
  %v3222 = vpop.permute.xlu0 %3221
  %3225 = vset.pattern.permute.xlu0 1
  %3226 = vperm.xlu0 %3225, %v3200
  %v3227 = vpop.permute.xlu0 %3226
  %v3229 = vadd.f32 %v3211, %v3222
  %v3230 = vadd.f32 %v3212, %v3222
  %v3231 = vadd.f32 %v3213, %v3222
  %v3232 = vadd.f32 %v3214, %v3222
  %v3233 = vadd.f32 %v3215, %v3227
  %v3234 = vadd.f32 %v3216, %v3227
  %v3235 = vadd.f32 %v3217, %v3227
  %v3236 = vadd.f32 %v3218, %v3227
  %v3237 = vmax.f32 %v3229, 0.0
  %v3238 = vmax.f32 %v3230, 0.0
  %v3239 = vmax.f32 %v3231, 0.0
  %v3240 = vmax.f32 %v3232, 0.0
  %v3241 = vmax.f32 %v3233, 0.0
  %v3242 = vmax.f32 %v3234, 0.0
  %v3243 = vmax.f32 %v3235, 0.0
  %v3244 = vmax.f32 %v3236, 0.0
  %3253 = vrot.lane.b32.xlu0 %v3237, 8
  %v3254 = vpop.permute.xlu0 %3253
  %3255 = vrot.lane.b32.xlu0 %v3238, 8
  %v3256 = vpop.permute.xlu0 %3255
  %3257 = vrot.lane.b32.xlu0 %v3239, 8
  %v3258 = vpop.permute.xlu0 %3257
  %3259 = vrot.lane.b32.xlu0 %v3240, 8
  %v3260 = vpop.permute.xlu0 %3259
  %3261 = vrot.lane.b32.xlu0 %v3241, 8
  %v3262 = vpop.permute.xlu0 %3261
  %3263 = vrot.lane.b32.xlu0 %v3242, 8
  %v3264 = vpop.permute.xlu0 %3263
  %3265 = vrot.lane.b32.xlu0 %v3243, 8
  %v3266 = vpop.permute.xlu0 %3265
  %3267 = vrot.lane.b32.xlu0 %v3244, 8
  %v3268 = vpop.permute.xlu0 %3267
  %v3269 = vsel %vm55, %v3254, %v3256
  %v3270 = vsel %vm55, %v3256, %v3258
  %v3271 = vsel %vm55, %v3258, %v3260
  %v3272 = vsel %vm55, %v3262, %v3264
  %v3273 = vsel %vm55, %v3264, %v3266
  %v3274 = vsel %vm55, %v3266, %v3268
  %3285 = vst.msk [vmem:[#allocation2 + $0x8] sm:$0xff] %vm2131, %v3254
  %3286 = vst [vmem:[#allocation2 + $0x10] sm:$0xff] %v3269
  %3287 = vst [vmem:[#allocation2 + $0x18] sm:$0xff] %v3270
  %3288 = vst [vmem:[#allocation2 + $0x20] sm:$0xff] %v3271
  %3289 = vst.msk [vmem:[#allocation2 + $0x28] sm:$0xff] %vm55, %v3260
  %3290 = vst.msk [vmem:[#allocation2 + $0x40] sm:$0xff] %vm2131, %v3262
  %3291 = vst [vmem:[#allocation2 + $0x48] sm:$0xff] %v3272
  %3292 = vst [vmem:[#allocation2 + $0x50] sm:$0xff] %v3273
  %3293 = vst [vmem:[#allocation2 + $0x58] sm:$0xff] %v3274
  %3294 = vst.msk [vmem:[#allocation2 + $0x60] sm:$0xff] %vm55, %v3268
  %v3295 = vld [vmem:[#allocation2 + $0x8] sm:$0xff]
  %v3296 = vld [vmem:[#allocation2 + $0x10] sm:$0xff]
  %v3297 = vld [vmem:[#allocation2 + $0x18] sm:$0xff]
  %v3298 = vld [vmem:[#allocation2 + $0x20] sm:$0xff]
  %v3299 = vld [vmem:[#allocation2 + $0x28] sm:$0xff]
  %v3300 = vld [vmem:[#allocation2 + $0x40] sm:$0xff]
  %v3301 = vld [vmem:[#allocation2 + $0x48] sm:$0xff]
  %v3302 = vld [vmem:[#allocation2 + $0x50] sm:$0xff]
  %v3303 = vld [vmem:[#allocation2 + $0x58] sm:$0xff]
  %v3304 = vld [vmem:[#allocation2 + $0x60] sm:$0xff]
  %3315 = vrot.lane.b32.xlu0 %v3295, 116
  %v3316 = vpop.permute.xlu0 %3315
  %3317 = vrot.lane.b32.xlu0 %v3296, 116
  %v3318 = vpop.permute.xlu0 %3317
  %3319 = vrot.lane.b32.xlu0 %v3297, 116
  %v3320 = vpop.permute.xlu0 %3319
  %3321 = vrot.lane.b32.xlu0 %v3298, 116
  %v3322 = vpop.permute.xlu0 %3321
  %3323 = vrot.lane.b32.xlu0 %v3299, 116
  %v3324 = vpop.permute.xlu0 %3323
  %3325 = vrot.lane.b32.xlu0 %v3300, 116
  %v3326 = vpop.permute.xlu0 %3325
  %3327 = vrot.lane.b32.xlu0 %v3301, 116
  %v3328 = vpop.permute.xlu0 %3327
  %3329 = vrot.lane.b32.xlu0 %v3302, 116
  %v3330 = vpop.permute.xlu0 %3329
  %3331 = vrot.lane.b32.xlu0 %v3303, 116
  %v3332 = vpop.permute.xlu0 %3331
  %3333 = vrot.lane.b32.xlu0 %v3304, 116
  %v3334 = vpop.permute.xlu0 %3333
  %v3335 = vsel %vm2690, %v3316, %v3318
  %v3336 = vsel %vm2690, %v3318, %v3320
  %v3337 = vsel %vm2690, %v3320, %v3322
  %v3338 = vsel %vm2690, %v3322, %v3324
  %v3339 = vsel %vm2690, %v3326, %v3328
  %v3340 = vsel %vm2690, %v3328, %v3330
  %v3341 = vsel %vm2690, %v3330, %v3332
  %v3342 = vsel %vm2690, %v3332, %v3334
  %v3351 = vmax.f32 %v3237, %v3335
  %v3352 = vmax.f32 %v3238, %v3336
  %v3353 = vmax.f32 %v3239, %v3337
  %v3354 = vmax.f32 %v3240, %v3338
  %v3355 = vmax.f32 %v3241, %v3339
  %v3356 = vmax.f32 %v3242, %v3340
  %v3357 = vmax.f32 %v3243, %v3341
  %v3358 = vmax.f32 %v3244, %v3342
  %3359 = vrot.lane.b32.xlu0 %v3295, 124
  %v3360 = vpop.permute.xlu0 %3359
  %3361 = vrot.lane.b32.xlu0 %v3296, 124
  %v3362 = vpop.permute.xlu0 %3361
  %3363 = vrot.lane.b32.xlu0 %v3297, 124
  %v3364 = vpop.permute.xlu0 %3363
  %3365 = vrot.lane.b32.xlu0 %v3298, 124
  %v3366 = vpop.permute.xlu0 %3365
  %3367 = vrot.lane.b32.xlu0 %v3299, 124
  %v3368 = vpop.permute.xlu0 %3367
  %3369 = vrot.lane.b32.xlu0 %v3300, 124
  %v3370 = vpop.permute.xlu0 %3369
  %3371 = vrot.lane.b32.xlu0 %v3301, 124
  %v3372 = vpop.permute.xlu0 %3371
  %3373 = vrot.lane.b32.xlu0 %v3302, 124
  %v3374 = vpop.permute.xlu0 %3373
  %3375 = vrot.lane.b32.xlu0 %v3303, 124
  %v3376 = vpop.permute.xlu0 %3375
  %3377 = vrot.lane.b32.xlu0 %v3304, 124
  %v3378 = vpop.permute.xlu0 %3377
  %v3379 = vsel %vm2542, %v3360, %v3362
  %v3380 = vsel %vm2542, %v3362, %v3364
  %v3381 = vsel %vm2542, %v3364, %v3366
  %v3382 = vsel %vm2542, %v3366, %v3368
  %v3383 = vsel %vm2542, %v3370, %v3372
  %v3384 = vsel %vm2542, %v3372, %v3374
  %v3385 = vsel %vm2542, %v3374, %v3376
  %v3386 = vsel %vm2542, %v3376, %v3378
  %v3397 = vmax.f32 %v3295, %v3379
  %v3398 = vmax.f32 %v3296, %v3380
  %v3399 = vmax.f32 %v3297, %v3381
  %v3400 = vmax.f32 %v3298, %v3382
  %v3401 = vmax.f32 %v3299, %v3368
  %v3402 = vmax.f32 %v3300, %v3383
  %v3403 = vmax.f32 %v3301, %v3384
  %v3404 = vmax.f32 %v3302, %v3385
  %v3405 = vmax.f32 %v3303, %v3386
  %v3406 = vmax.f32 %v3304, %v3378
  %3417 = vrot.lane.b32.xlu0 %v3397, 56
  %v3418 = vpop.permute.xlu0 %3417
  %3419 = vrot.lane.b32.xlu0 %v3398, 56
  %v3420 = vpop.permute.xlu0 %3419
  %3421 = vrot.lane.b32.xlu0 %v3399, 56
  %v3422 = vpop.permute.xlu0 %3421
  %3423 = vrot.lane.b32.xlu0 %v3400, 56
  %v3424 = vpop.permute.xlu0 %3423
  %3425 = vrot.lane.b32.xlu0 %v3401, 56
  %v3426 = vpop.permute.xlu0 %3425
  %3427 = vrot.lane.b32.xlu0 %v3402, 56
  %v3428 = vpop.permute.xlu0 %3427
  %3429 = vrot.lane.b32.xlu0 %v3403, 56
  %v3430 = vpop.permute.xlu0 %3429
  %3431 = vrot.lane.b32.xlu0 %v3404, 56
  %v3432 = vpop.permute.xlu0 %3431
  %3433 = vrot.lane.b32.xlu0 %v3405, 56
  %v3434 = vpop.permute.xlu0 %3433
  %3435 = vrot.lane.b32.xlu0 %v3406, 56
  %v3436 = vpop.permute.xlu0 %3435
  %v3437 = vsel %vm2392, %v3418, %v3420
  %v3438 = vsel %vm2392, %v3420, %v3422
  %v3439 = vsel %vm2392, %v3422, %v3424
  %v3440 = vsel %vm2392, %v3424, %v3426
  %v3441 = vsel %vm2392, %v3428, %v3430
  %v3442 = vsel %vm2392, %v3430, %v3432
  %v3443 = vsel %vm2392, %v3432, %v3434
  %v3444 = vsel %vm2392, %v3434, %v3436
  %v3453 = vmax.f32 %v3351, %v3437
  %v3454 = vmax.f32 %v3352, %v3438
  %v3455 = vmax.f32 %v3353, %v3439
  %v3456 = vmax.f32 %v3354, %v3440
  %v3457 = vmax.f32 %v3355, %v3441
  %v3458 = vmax.f32 %v3356, %v3442
  %v3459 = vmax.f32 %v3357, %v3443
  %v3460 = vmax.f32 %v3358, %v3444
  %3469 = vrot.lane.b32.xlu0 %v3453, 8
  %v3470 = vpop.permute.xlu0 %3469
  %3471 = vrot.lane.b32.xlu0 %v3454, 8
  %v3472 = vpop.permute.xlu0 %3471
  %3473 = vrot.lane.b32.xlu0 %v3455, 8
  %v3474 = vpop.permute.xlu0 %3473
  %3475 = vrot.lane.b32.xlu0 %v3456, 8
  %v3476 = vpop.permute.xlu0 %3475
  %3477 = vrot.lane.b32.xlu0 %v3457, 8
  %v3478 = vpop.permute.xlu0 %3477
  %3479 = vrot.lane.b32.xlu0 %v3458, 8
  %v3480 = vpop.permute.xlu0 %3479
  %3481 = vrot.lane.b32.xlu0 %v3459, 8
  %v3482 = vpop.permute.xlu0 %3481
  %3483 = vrot.lane.b32.xlu0 %v3460, 8
  %v3484 = vpop.permute.xlu0 %3483
  %v3485 = vsel %vm55, %v3470, %v3472
  %v3486 = vsel %vm55, %v3472, %v3474
  %v3487 = vsel %vm55, %v3474, %v3476
  %v3488 = vsel %vm55, %v3478, %v3480
  %v3489 = vsel %vm55, %v3480, %v3482
  %v3490 = vsel %vm55, %v3482, %v3484
  %3501 = vst.msk [vmem:[#allocation2 + $0x8] sm:$0xff] %vm2131, %v3470
  %3502 = vst [vmem:[#allocation2 + $0x10] sm:$0xff] %v3485
  %3503 = vst [vmem:[#allocation2 + $0x18] sm:$0xff] %v3486
  %3504 = vst [vmem:[#allocation2 + $0x20] sm:$0xff] %v3487
  %3505 = vst.msk [vmem:[#allocation2 + $0x28] sm:$0xff] %vm55, %v3476
  %3506 = vst.msk [vmem:[#allocation2 + $0x40] sm:$0xff] %vm2131, %v3478
  %3507 = vst [vmem:[#allocation2 + $0x48] sm:$0xff] %v3488
  %3508 = vst [vmem:[#allocation2 + $0x50] sm:$0xff] %v3489
  %3509 = vst [vmem:[#allocation2 + $0x58] sm:$0xff] %v3490
  %3510 = vst.msk [vmem:[#allocation2 + $0x60] sm:$0xff] %vm55, %v3484
  %s3511 = scalar_lea.vmem %s2, 192
  %v3512 = vld [vmem:[%s3511] sm:$0xff]
  %v3513 = vld [vmem:[%s3511 + $0x8] sm:$0xff]
  %v3514 = vld [vmem:[%s3511 + $0x10] sm:$0xff]
  %v3515 = vld [vmem:[%s3511 + $0x18] sm:$0xff]
  %v3516 = vld [vmem:[%s3511 + $0x20] sm:$0x3]
  %v3517 = vld [vmem:[%s3511 + $0x28] sm:$0x3]
  %v3518 = vld [vmem:[%s3511 + $0x30] sm:$0x3]
  %v3519 = vld [vmem:[%s3511 + $0x38] sm:$0x3]
  %v3520 = vld [vmem:[#allocation2] sm:$0xff]
  %v3521 = vld [vmem:[#allocation2 + $0x8] sm:$0xff]
  %v3522 = vld [vmem:[#allocation2 + $0x10] sm:$0xff]
  %v3523 = vld [vmem:[#allocation2 + $0x18] sm:$0xff]
  %v3524 = vld [vmem:[#allocation2 + $0x38] sm:$0xff]
  %v3525 = vld [vmem:[#allocation2 + $0x40] sm:$0xff]
  %v3526 = vld [vmem:[#allocation2 + $0x48] sm:$0xff]
  %v3527 = vld [vmem:[#allocation2 + $0x50] sm:$0xff]
  %v3528 = vlaneseq
  %v3529 = vshrl.u32 %v3528, 7
  %v3530 = vsub.s32 0, %v3529
  %v3531 = vrot.slane %v3512, %v3530
  %v3532 = vlaneseq
  %v3533 = vshrl.u32 %v3532, 7
  %v3534 = vsub.s32 0, %v3533
  %v3535 = vrot.slane %v3513, %v3534
  %v3536 = vlaneseq
  %v3537 = vshrl.u32 %v3536, 7
  %v3538 = vsub.s32 0, %v3537
  %v3539 = vrot.slane %v3514, %v3538
  %v3540 = vlaneseq
  %v3541 = vshrl.u32 %v3540, 7
  %v3542 = vsub.s32 0, %v3541
  %v3543 = vrot.slane %v3515, %v3542
  %v3544 = vmul.f32 %v3520, %v3531
  %v3545 = vmul.f32 %v3521, %v3535
  %v3546 = vmul.f32 %v3522, %v3539
  %v3547 = vmul.f32 %v3523, %v3543
  %v3548 = vmul.f32 %v3524, %v3531
  %v3549 = vmul.f32 %v3525, %v3535
  %v3550 = vmul.f32 %v3526, %v3539
  %v3551 = vmul.f32 %v3527, %v3543
  %3552 = vst [vmem:[#allocation3] sm:$0xff] %v3544
  %3553 = vst [vmem:[#allocation3 + $0x8] sm:$0xff] %v3545
  %3554 = vst [vmem:[#allocation3 + $0x10] sm:$0xff] %v3546
  %3555 = vst [vmem:[#allocation3 + $0x18] sm:$0xff] %v3547
  %3556 = vst [vmem:[#allocation3 + $0x20] sm:$0xff] %v3548
  %3557 = vst [vmem:[#allocation3 + $0x28] sm:$0xff] %v3549
  %3558 = vst [vmem:[#allocation3 + $0x30] sm:$0xff] %v3550
  %3559 = vst [vmem:[#allocation3 + $0x38] sm:$0xff] %v3551
  %v3560 = vld [vmem:[#allocation2] sm:$0xff]
  %v3561 = vld [vmem:[#allocation2 + $0x8] sm:$0xff]
  %v3562 = vld [vmem:[#allocation2 + $0x10] sm:$0xff]
  %v3563 = vld [vmem:[#allocation2 + $0x18] sm:$0xff]
  %v3564 = vld [vmem:[#allocation2 + $0x20] sm:$0xff]
  %v3565 = vld [vmem:[#allocation2 + $0x38] sm:$0xff]
  %v3566 = vld [vmem:[#allocation2 + $0x40] sm:$0xff]
  %v3567 = vld [vmem:[#allocation2 + $0x48] sm:$0xff]
  %v3568 = vld [vmem:[#allocation2 + $0x50] sm:$0xff]
  %v3569 = vld [vmem:[#allocation2 + $0x58] sm:$0xff]
  %v3570 = vlaneseq
  %v3571 = vshrl.u32 %v3570, 7
  %v3572 = vsub.s32 1, %v3571
  %v3573 = vrot.slane %v3512, %v3572
  %v3574 = vlaneseq
  %v3575 = vshrl.u32 %v3574, 7
  %v3576 = vsub.s32 1, %v3575
  %v3577 = vrot.slane %v3513, %v3576
  %v3578 = vlaneseq
  %v3579 = vshrl.u32 %v3578, 7
  %v3580 = vsub.s32 1, %v3579
  %v3581 = vrot.slane %v3514, %v3580
  %v3582 = vlaneseq
  %v3583 = vshrl.u32 %v3582, 7
  %v3584 = vsub.s32 1, %v3583
  %v3585 = vrot.slane %v3515, %v3584
  %3590 = vrot.lane.b32.xlu0 %v3573, 8
  %v3591 = vpop.permute.xlu0 %3590
  %3592 = vrot.lane.b32.xlu0 %v3577, 8
  %v3593 = vpop.permute.xlu0 %3592
  %3594 = vrot.lane.b32.xlu0 %v3581, 8
  %v3595 = vpop.permute.xlu0 %3594
  %3596 = vrot.lane.b32.xlu0 %v3585, 8
  %v3597 = vpop.permute.xlu0 %3596
  %v3598 = vsel %vm55, %v3591, %v3593
  %v3599 = vsel %vm55, %v3593, %v3595
  %v3600 = vsel %vm55, %v3595, %v3597
  %v3606 = vmul.f32 %v3560, %v3591
  %v3607 = vmul.f32 %v3561, %v3598
  %v3608 = vmul.f32 %v3562, %v3599
  %v3609 = vmul.f32 %v3563, %v3600
  %v3610 = vmul.f32 %v3564, %v3597
  %v3611 = vmul.f32 %v3565, %v3591
  %v3612 = vmul.f32 %v3566, %v3598
  %v3613 = vmul.f32 %v3567, %v3599
  %v3614 = vmul.f32 %v3568, %v3600
  %v3615 = vmul.f32 %v3569, %v3597
  %3626 = vrot.lane.b32.xlu0 %v3606, 120
  %v3627 = vpop.permute.xlu0 %3626
  %3628 = vrot.lane.b32.xlu0 %v3607, 120
  %v3629 = vpop.permute.xlu0 %3628
  %3630 = vrot.lane.b32.xlu0 %v3608, 120
  %v3631 = vpop.permute.xlu0 %3630
  %3632 = vrot.lane.b32.xlu0 %v3609, 120
  %v3633 = vpop.permute.xlu0 %3632
  %3634 = vrot.lane.b32.xlu0 %v3610, 120
  %v3635 = vpop.permute.xlu0 %3634
  %3636 = vrot.lane.b32.xlu0 %v3611, 120
  %v3637 = vpop.permute.xlu0 %3636
  %3638 = vrot.lane.b32.xlu0 %v3612, 120
  %v3639 = vpop.permute.xlu0 %3638
  %3640 = vrot.lane.b32.xlu0 %v3613, 120
  %v3641 = vpop.permute.xlu0 %3640
  %3642 = vrot.lane.b32.xlu0 %v3614, 120
  %v3643 = vpop.permute.xlu0 %3642
  %3644 = vrot.lane.b32.xlu0 %v3615, 120
  %v3645 = vpop.permute.xlu0 %3644
  %v3646 = vsel %vm187, %v3627, %v3629
  %v3647 = vsel %vm187, %v3629, %v3631
  %v3648 = vsel %vm187, %v3631, %v3633
  %v3649 = vsel %vm187, %v3633, %v3635
  %v3650 = vsel %vm187, %v3637, %v3639
  %v3651 = vsel %vm187, %v3639, %v3641
  %v3652 = vsel %vm187, %v3641, %v3643
  %v3653 = vsel %vm187, %v3643, %v3645
  %3662 = vst [vmem:[#allocation3 + $0x40] sm:$0xff] %v3646
  %3663 = vst [vmem:[#allocation3 + $0x48] sm:$0xff] %v3647
  %3664 = vst [vmem:[#allocation3 + $0x50] sm:$0xff] %v3648
  %3665 = vst [vmem:[#allocation3 + $0x58] sm:$0xff] %v3649
  %3666 = vst [vmem:[#allocation3 + $0x60] sm:$0xff] %v3650
  %3667 = vst [vmem:[#allocation3 + $0x68] sm:$0xff] %v3651
  %3668 = vst [vmem:[#allocation3 + $0x70] sm:$0xff] %v3652
  %3669 = vst [vmem:[#allocation3 + $0x78] sm:$0xff] %v3653
  %v3670 = vld [vmem:[#allocation2] sm:$0xff]
  %v3671 = vld [vmem:[#allocation2 + $0x8] sm:$0xff]
  %v3672 = vld [vmem:[#allocation2 + $0x10] sm:$0xff]
  %v3673 = vld [vmem:[#allocation2 + $0x18] sm:$0xff]
  %v3674 = vld [vmem:[#allocation2 + $0x20] sm:$0xff]
  %v3675 = vld [vmem:[#allocation2 + $0x38] sm:$0xff]
  %v3676 = vld [vmem:[#allocation2 + $0x40] sm:$0xff]
  %v3677 = vld [vmem:[#allocation2 + $0x48] sm:$0xff]
  %v3678 = vld [vmem:[#allocation2 + $0x50] sm:$0xff]
  %v3679 = vld [vmem:[#allocation2 + $0x58] sm:$0xff]
  %v3680 = vlaneseq
  %v3681 = vshrl.u32 %v3680, 7
  %v3682 = vsub.s32 2, %v3681
  %v3683 = vrot.slane %v3512, %v3682
  %v3684 = vlaneseq
  %v3685 = vshrl.u32 %v3684, 7
  %v3686 = vsub.s32 2, %v3685
  %v3687 = vrot.slane %v3513, %v3686
  %v3688 = vlaneseq
  %v3689 = vshrl.u32 %v3688, 7
  %v3690 = vsub.s32 2, %v3689
  %v3691 = vrot.slane %v3514, %v3690
  %v3692 = vlaneseq
  %v3693 = vshrl.u32 %v3692, 7
  %v3694 = vsub.s32 2, %v3693
  %v3695 = vrot.slane %v3515, %v3694
  %3700 = vrot.lane.b32.xlu0 %v3683, 16
  %v3701 = vpop.permute.xlu0 %3700
  %3702 = vrot.lane.b32.xlu0 %v3687, 16
  %v3703 = vpop.permute.xlu0 %3702
  %3704 = vrot.lane.b32.xlu0 %v3691, 16
  %v3705 = vpop.permute.xlu0 %3704
  %3706 = vrot.lane.b32.xlu0 %v3695, 16
  %v3707 = vpop.permute.xlu0 %3706
  %v3708 = vsel %vm32, %v3701, %v3703
  %v3709 = vsel %vm32, %v3703, %v3705
  %v3710 = vsel %vm32, %v3705, %v3707
  %v3716 = vmul.f32 %v3670, %v3701
  %v3717 = vmul.f32 %v3671, %v3708
  %v3718 = vmul.f32 %v3672, %v3709
  %v3719 = vmul.f32 %v3673, %v3710
  %v3720 = vmul.f32 %v3674, %v3707
  %v3721 = vmul.f32 %v3675, %v3701
  %v3722 = vmul.f32 %v3676, %v3708
  %v3723 = vmul.f32 %v3677, %v3709
  %v3724 = vmul.f32 %v3678, %v3710
  %v3725 = vmul.f32 %v3679, %v3707
  %3736 = vrot.lane.b32.xlu0 %v3716, 112
  %v3737 = vpop.permute.xlu0 %3736
  %3738 = vrot.lane.b32.xlu0 %v3717, 112
  %v3739 = vpop.permute.xlu0 %3738
  %3740 = vrot.lane.b32.xlu0 %v3718, 112
  %v3741 = vpop.permute.xlu0 %3740
  %3742 = vrot.lane.b32.xlu0 %v3719, 112
  %v3743 = vpop.permute.xlu0 %3742
  %3744 = vrot.lane.b32.xlu0 %v3720, 112
  %v3745 = vpop.permute.xlu0 %3744
  %3746 = vrot.lane.b32.xlu0 %v3721, 112
  %v3747 = vpop.permute.xlu0 %3746
  %3748 = vrot.lane.b32.xlu0 %v3722, 112
  %v3749 = vpop.permute.xlu0 %3748
  %3750 = vrot.lane.b32.xlu0 %v3723, 112
  %v3751 = vpop.permute.xlu0 %3750
  %3752 = vrot.lane.b32.xlu0 %v3724, 112
  %v3753 = vpop.permute.xlu0 %3752
  %3754 = vrot.lane.b32.xlu0 %v3725, 112
  %v3755 = vpop.permute.xlu0 %3754
  %vm3756 = vcmask 916480
  %v3757 = vsel %vm3756, %v3737, %v3739
  %v3758 = vsel %vm3756, %v3739, %v3741
  %v3759 = vsel %vm3756, %v3741, %v3743
  %v3760 = vsel %vm3756, %v3743, %v3745
  %v3761 = vsel %vm3756, %v3747, %v3749
  %v3762 = vsel %vm3756, %v3749, %v3751
  %v3763 = vsel %vm3756, %v3751, %v3753
  %v3764 = vsel %vm3756, %v3753, %v3755
  %3773 = vst [vmem:[#allocation3 + $0x80] sm:$0xff] %v3757
  %3774 = vst [vmem:[#allocation3 + $0x88] sm:$0xff] %v3758
  %3775 = vst [vmem:[#allocation3 + $0x90] sm:$0xff] %v3759
  %3776 = vst [vmem:[#allocation3 + $0x98] sm:$0xff] %v3760
  %3777 = vst [vmem:[#allocation3 + $0xa0] sm:$0xff] %v3761
  %3778 = vst [vmem:[#allocation3 + $0xa8] sm:$0xff] %v3762
  %3779 = vst [vmem:[#allocation3 + $0xb0] sm:$0xff] %v3763
  %3780 = vst [vmem:[#allocation3 + $0xb8] sm:$0xff] %v3764
  %v3781 = vld [vmem:[#allocation2 + $0x8] sm:$0xff]
  %v3782 = vld [vmem:[#allocation2 + $0x10] sm:$0xff]
  %v3783 = vld [vmem:[#allocation2 + $0x18] sm:$0xff]
  %v3784 = vld [vmem:[#allocation2 + $0x20] sm:$0xff]
  %v3785 = vld [vmem:[#allocation2 + $0x40] sm:$0xff]
  %v3786 = vld [vmem:[#allocation2 + $0x48] sm:$0xff]
  %v3787 = vld [vmem:[#allocation2 + $0x50] sm:$0xff]
  %v3788 = vld [vmem:[#allocation2 + $0x58] sm:$0xff]
  %v3789 = vlaneseq
  %v3790 = vshrl.u32 %v3789, 7
  %v3791 = vsub.s32 3, %v3790
  %v3792 = vrot.slane %v3512, %v3791
  %v3793 = vlaneseq
  %v3794 = vshrl.u32 %v3793, 7
  %v3795 = vsub.s32 3, %v3794
  %v3796 = vrot.slane %v3513, %v3795
  %v3797 = vlaneseq
  %v3798 = vshrl.u32 %v3797, 7
  %v3799 = vsub.s32 3, %v3798
  %v3800 = vrot.slane %v3514, %v3799
  %v3801 = vlaneseq
  %v3802 = vshrl.u32 %v3801, 7
  %v3803 = vsub.s32 3, %v3802
  %v3804 = vrot.slane %v3515, %v3803
  %v3805 = vmul.f32 %v3781, %v3792
  %v3806 = vmul.f32 %v3782, %v3796
  %v3807 = vmul.f32 %v3783, %v3800
  %v3808 = vmul.f32 %v3784, %v3804
  %v3809 = vmul.f32 %v3785, %v3792
  %v3810 = vmul.f32 %v3786, %v3796
  %v3811 = vmul.f32 %v3787, %v3800
  %v3812 = vmul.f32 %v3788, %v3804
  %3813 = vst [vmem:[#allocation3 + $0xc0] sm:$0xff] %v3805
  %3814 = vst [vmem:[#allocation3 + $0xc8] sm:$0xff] %v3806
  %3815 = vst [vmem:[#allocation3 + $0xd0] sm:$0xff] %v3807
  %3816 = vst [vmem:[#allocation3 + $0xd8] sm:$0xff] %v3808
  %3817 = vst [vmem:[#allocation3 + $0xe0] sm:$0xff] %v3809
  %3818 = vst [vmem:[#allocation3 + $0xe8] sm:$0xff] %v3810
  %3819 = vst [vmem:[#allocation3 + $0xf0] sm:$0xff] %v3811
  %3820 = vst [vmem:[#allocation3 + $0xf8] sm:$0xff] %v3812
  %v3821 = vld [vmem:[#allocation2 + $0x8] sm:$0xff]
  %v3822 = vld [vmem:[#allocation2 + $0x10] sm:$0xff]
  %v3823 = vld [vmem:[#allocation2 + $0x18] sm:$0xff]
  %v3824 = vld [vmem:[#allocation2 + $0x20] sm:$0xff]
  %v3825 = vld [vmem:[#allocation2 + $0x28] sm:$0xff]
  %v3826 = vld [vmem:[#allocation2 + $0x40] sm:$0xff]
  %v3827 = vld [vmem:[#allocation2 + $0x48] sm:$0xff]
  %v3828 = vld [vmem:[#allocation2 + $0x50] sm:$0xff]
  %v3829 = vld [vmem:[#allocation2 + $0x58] sm:$0xff]
  %v3830 = vld [vmem:[#allocation2 + $0x60] sm:$0xff]
  %v3831 = vlaneseq
  %v3832 = vshrl.u32 %v3831, 7
  %v3833 = vsub.s32 4, %v3832
  %v3834 = vrot.slane %v3512, %v3833
  %v3835 = vlaneseq
  %v3836 = vshrl.u32 %v3835, 7
  %v3837 = vsub.s32 4, %v3836
  %v3838 = vrot.slane %v3513, %v3837
  %v3839 = vlaneseq
  %v3840 = vshrl.u32 %v3839, 7
  %v3841 = vsub.s32 4, %v3840
  %v3842 = vrot.slane %v3514, %v3841
  %v3843 = vlaneseq
  %v3844 = vshrl.u32 %v3843, 7
  %v3845 = vsub.s32 4, %v3844
  %v3846 = vrot.slane %v3515, %v3845
  %3851 = vrot.lane.b32.xlu0 %v3834, 8
  %v3852 = vpop.permute.xlu0 %3851
  %3853 = vrot.lane.b32.xlu0 %v3838, 8
  %v3854 = vpop.permute.xlu0 %3853
  %3855 = vrot.lane.b32.xlu0 %v3842, 8
  %v3856 = vpop.permute.xlu0 %3855
  %3857 = vrot.lane.b32.xlu0 %v3846, 8
  %v3858 = vpop.permute.xlu0 %3857
  %v3859 = vsel %vm55, %v3852, %v3854
  %v3860 = vsel %vm55, %v3854, %v3856
  %v3861 = vsel %vm55, %v3856, %v3858
  %v3867 = vmul.f32 %v3821, %v3852
  %v3868 = vmul.f32 %v3822, %v3859
  %v3869 = vmul.f32 %v3823, %v3860
  %v3870 = vmul.f32 %v3824, %v3861
  %v3871 = vmul.f32 %v3825, %v3858
  %v3872 = vmul.f32 %v3826, %v3852
  %v3873 = vmul.f32 %v3827, %v3859
  %v3874 = vmul.f32 %v3828, %v3860
  %v3875 = vmul.f32 %v3829, %v3861
  %v3876 = vmul.f32 %v3830, %v3858
  %3887 = vrot.lane.b32.xlu0 %v3867, 120
  %v3888 = vpop.permute.xlu0 %3887
  %3889 = vrot.lane.b32.xlu0 %v3868, 120
  %v3890 = vpop.permute.xlu0 %3889
  %3891 = vrot.lane.b32.xlu0 %v3869, 120
  %v3892 = vpop.permute.xlu0 %3891
  %3893 = vrot.lane.b32.xlu0 %v3870, 120
  %v3894 = vpop.permute.xlu0 %3893
  %3895 = vrot.lane.b32.xlu0 %v3871, 120
  %v3896 = vpop.permute.xlu0 %3895
  %3897 = vrot.lane.b32.xlu0 %v3872, 120
  %v3898 = vpop.permute.xlu0 %3897
  %3899 = vrot.lane.b32.xlu0 %v3873, 120
  %v3900 = vpop.permute.xlu0 %3899
  %3901 = vrot.lane.b32.xlu0 %v3874, 120
  %v3902 = vpop.permute.xlu0 %3901
  %3903 = vrot.lane.b32.xlu0 %v3875, 120
  %v3904 = vpop.permute.xlu0 %3903
  %3905 = vrot.lane.b32.xlu0 %v3876, 120
  %v3906 = vpop.permute.xlu0 %3905
  %v3907 = vsel %vm187, %v3888, %v3890
  %v3908 = vsel %vm187, %v3890, %v3892
  %v3909 = vsel %vm187, %v3892, %v3894
  %v3910 = vsel %vm187, %v3894, %v3896
  %v3911 = vsel %vm187, %v3898, %v3900
  %v3912 = vsel %vm187, %v3900, %v3902
  %v3913 = vsel %vm187, %v3902, %v3904
  %v3914 = vsel %vm187, %v3904, %v3906
  %3923 = vst [vmem:[#allocation3 + $0x100] sm:$0xff] %v3907
  %3924 = vst [vmem:[#allocation3 + $0x108] sm:$0xff] %v3908
  %3925 = vst [vmem:[#allocation3 + $0x110] sm:$0xff] %v3909
  %3926 = vst [vmem:[#allocation3 + $0x118] sm:$0xff] %v3910
  %3927 = vst [vmem:[#allocation3 + $0x120] sm:$0xff] %v3911
  %3928 = vst [vmem:[#allocation3 + $0x128] sm:$0xff] %v3912
  %3929 = vst [vmem:[#allocation3 + $0x130] sm:$0xff] %v3913
  %3930 = vst [vmem:[#allocation3 + $0x138] sm:$0xff] %v3914
  %v3931 = vld [vmem:[#allocation2 + $0x8] sm:$0xff]
  %v3932 = vld [vmem:[#allocation2 + $0x10] sm:$0xff]
  %v3933 = vld [vmem:[#allocation2 + $0x18] sm:$0xff]
  %v3934 = vld [vmem:[#allocation2 + $0x20] sm:$0xff]
  %v3935 = vld [vmem:[#allocation2 + $0x28] sm:$0xff]
  %v3936 = vld [vmem:[#allocation2 + $0x40] sm:$0xff]
  %v3937 = vld [vmem:[#allocation2 + $0x48] sm:$0xff]
  %v3938 = vld [vmem:[#allocation2 + $0x50] sm:$0xff]
  %v3939 = vld [vmem:[#allocation2 + $0x58] sm:$0xff]
  %v3940 = vld [vmem:[#allocation2 + $0x60] sm:$0xff]
  %v3941 = vlaneseq
  %v3942 = vshrl.u32 %v3941, 7
  %v3943 = vsub.s32 5, %v3942
  %v3944 = vrot.slane %v3512, %v3943
  %v3945 = vlaneseq
  %v3946 = vshrl.u32 %v3945, 7
  %v3947 = vsub.s32 5, %v3946
  %v3948 = vrot.slane %v3513, %v3947
  %v3949 = vlaneseq
  %v3950 = vshrl.u32 %v3949, 7
  %v3951 = vsub.s32 5, %v3950
  %v3952 = vrot.slane %v3514, %v3951
  %v3953 = vlaneseq
  %v3954 = vshrl.u32 %v3953, 7
  %v3955 = vsub.s32 5, %v3954
  %v3956 = vrot.slane %v3515, %v3955
  %3961 = vrot.lane.b32.xlu0 %v3944, 16
  %v3962 = vpop.permute.xlu0 %3961
  %3963 = vrot.lane.b32.xlu0 %v3948, 16
  %v3964 = vpop.permute.xlu0 %3963
  %3965 = vrot.lane.b32.xlu0 %v3952, 16
  %v3966 = vpop.permute.xlu0 %3965
  %3967 = vrot.lane.b32.xlu0 %v3956, 16
  %v3968 = vpop.permute.xlu0 %3967
  %v3969 = vsel %vm32, %v3962, %v3964
  %v3970 = vsel %vm32, %v3964, %v3966
  %v3971 = vsel %vm32, %v3966, %v3968
  %v3977 = vmul.f32 %v3931, %v3962
  %v3978 = vmul.f32 %v3932, %v3969
  %v3979 = vmul.f32 %v3933, %v3970
  %v3980 = vmul.f32 %v3934, %v3971
  %v3981 = vmul.f32 %v3935, %v3968
  %v3982 = vmul.f32 %v3936, %v3962
  %v3983 = vmul.f32 %v3937, %v3969
  %v3984 = vmul.f32 %v3938, %v3970
  %v3985 = vmul.f32 %v3939, %v3971
  %v3986 = vmul.f32 %v3940, %v3968
  %3997 = vrot.lane.b32.xlu0 %v3977, 112
  %v3998 = vpop.permute.xlu0 %3997
  %3999 = vrot.lane.b32.xlu0 %v3978, 112
  %v4000 = vpop.permute.xlu0 %3999
  %4001 = vrot.lane.b32.xlu0 %v3979, 112
  %v4002 = vpop.permute.xlu0 %4001
  %4003 = vrot.lane.b32.xlu0 %v3980, 112
  %v4004 = vpop.permute.xlu0 %4003
  %4005 = vrot.lane.b32.xlu0 %v3981, 112
  %v4006 = vpop.permute.xlu0 %4005
  %4007 = vrot.lane.b32.xlu0 %v3982, 112
  %v4008 = vpop.permute.xlu0 %4007
  %4009 = vrot.lane.b32.xlu0 %v3983, 112
  %v4010 = vpop.permute.xlu0 %4009
  %4011 = vrot.lane.b32.xlu0 %v3984, 112
  %v4012 = vpop.permute.xlu0 %4011
  %4013 = vrot.lane.b32.xlu0 %v3985, 112
  %v4014 = vpop.permute.xlu0 %4013
  %4015 = vrot.lane.b32.xlu0 %v3986, 112
  %v4016 = vpop.permute.xlu0 %4015
  %v4017 = vsel %vm3756, %v3998, %v4000
  %v4018 = vsel %vm3756, %v4000, %v4002
  %v4019 = vsel %vm3756, %v4002, %v4004
  %v4020 = vsel %vm3756, %v4004, %v4006
  %v4021 = vsel %vm3756, %v4008, %v4010
  %v4022 = vsel %vm3756, %v4010, %v4012
  %v4023 = vsel %vm3756, %v4012, %v4014
  %v4024 = vsel %vm3756, %v4014, %v4016
  %4033 = vst [vmem:[#allocation3 + $0x140] sm:$0xff] %v4017
  %4034 = vst [vmem:[#allocation3 + $0x148] sm:$0xff] %v4018
  %4035 = vst [vmem:[#allocation3 + $0x150] sm:$0xff] %v4019
  %4036 = vst [vmem:[#allocation3 + $0x158] sm:$0xff] %v4020
  %4037 = vst [vmem:[#allocation3 + $0x160] sm:$0xff] %v4021
  %4038 = vst [vmem:[#allocation3 + $0x168] sm:$0xff] %v4022
  %4039 = vst [vmem:[#allocation3 + $0x170] sm:$0xff] %v4023
  %4040 = vst [vmem:[#allocation3 + $0x178] sm:$0xff] %v4024
  %v4041 = vld [vmem:[#allocation2 + $0x10] sm:$0xff]
  %v4042 = vld [vmem:[#allocation2 + $0x18] sm:$0xff]
  %v4043 = vld [vmem:[#allocation2 + $0x20] sm:$0xff]
  %v4044 = vld [vmem:[#allocation2 + $0x28] sm:$0xff]
  %v4045 = vld [vmem:[#allocation2 + $0x48] sm:$0xff]
  %v4046 = vld [vmem:[#allocation2 + $0x50] sm:$0xff]
  %v4047 = vld [vmem:[#allocation2 + $0x58] sm:$0xff]
  %v4048 = vld [vmem:[#allocation2 + $0x60] sm:$0xff]
  %v4049 = vlaneseq
  %v4050 = vshrl.u32 %v4049, 7
  %v4051 = vsub.s32 6, %v4050
  %v4052 = vrot.slane %v3512, %v4051
  %v4053 = vlaneseq
  %v4054 = vshrl.u32 %v4053, 7
  %v4055 = vsub.s32 6, %v4054
  %v4056 = vrot.slane %v3513, %v4055
  %v4057 = vlaneseq
  %v4058 = vshrl.u32 %v4057, 7
  %v4059 = vsub.s32 6, %v4058
  %v4060 = vrot.slane %v3514, %v4059
  %v4061 = vlaneseq
  %v4062 = vshrl.u32 %v4061, 7
  %v4063 = vsub.s32 6, %v4062
  %v4064 = vrot.slane %v3515, %v4063
  %v4065 = vmul.f32 %v4041, %v4052
  %v4066 = vmul.f32 %v4042, %v4056
  %v4067 = vmul.f32 %v4043, %v4060
  %v4068 = vmul.f32 %v4044, %v4064
  %v4069 = vmul.f32 %v4045, %v4052
  %v4070 = vmul.f32 %v4046, %v4056
  %v4071 = vmul.f32 %v4047, %v4060
  %v4072 = vmul.f32 %v4048, %v4064
  %4073 = vst [vmem:[#allocation3 + $0x180] sm:$0xff] %v4065
  %4074 = vst [vmem:[#allocation3 + $0x188] sm:$0xff] %v4066
  %4075 = vst [vmem:[#allocation3 + $0x190] sm:$0xff] %v4067
  %4076 = vst [vmem:[#allocation3 + $0x198] sm:$0xff] %v4068
  %4077 = vst [vmem:[#allocation3 + $0x1a0] sm:$0xff] %v4069
  %4078 = vst [vmem:[#allocation3 + $0x1a8] sm:$0xff] %v4070
  %4079 = vst [vmem:[#allocation3 + $0x1b0] sm:$0xff] %v4071
  %4080 = vst [vmem:[#allocation3 + $0x1b8] sm:$0xff] %v4072
  %v4081 = vld [vmem:[#allocation2 + $0x10] sm:$0xff]
  %v4082 = vld [vmem:[#allocation2 + $0x18] sm:$0xff]
  %v4083 = vld [vmem:[#allocation2 + $0x20] sm:$0xff]
  %v4084 = vld [vmem:[#allocation2 + $0x28] sm:$0xff]
  %v4085 = vld [vmem:[#allocation2 + $0x30] sm:$0xff]
  %v4086 = vld [vmem:[#allocation2 + $0x48] sm:$0xff]
  %v4087 = vld [vmem:[#allocation2 + $0x50] sm:$0xff]
  %v4088 = vld [vmem:[#allocation2 + $0x58] sm:$0xff]
  %v4089 = vld [vmem:[#allocation2 + $0x60] sm:$0xff]
  %v4090 = vld [vmem:[#allocation2 + $0x68] sm:$0xff]
  %v4091 = vlaneseq
  %v4092 = vshrl.u32 %v4091, 7
  %v4093 = vsub.s32 7, %v4092
  %v4094 = vrot.slane %v3512, %v4093
  %v4095 = vlaneseq
  %v4096 = vshrl.u32 %v4095, 7
  %v4097 = vsub.s32 7, %v4096
  %v4098 = vrot.slane %v3513, %v4097
  %v4099 = vlaneseq
  %v4100 = vshrl.u32 %v4099, 7
  %v4101 = vsub.s32 7, %v4100
  %v4102 = vrot.slane %v3514, %v4101
  %v4103 = vlaneseq
  %v4104 = vshrl.u32 %v4103, 7
  %v4105 = vsub.s32 7, %v4104
  %v4106 = vrot.slane %v3515, %v4105
  %4111 = vrot.lane.b32.xlu0 %v4094, 8
  %v4112 = vpop.permute.xlu0 %4111
  %4113 = vrot.lane.b32.xlu0 %v4098, 8
  %v4114 = vpop.permute.xlu0 %4113
  %4115 = vrot.lane.b32.xlu0 %v4102, 8
  %v4116 = vpop.permute.xlu0 %4115
  %4117 = vrot.lane.b32.xlu0 %v4106, 8
  %v4118 = vpop.permute.xlu0 %4117
  %v4119 = vsel %vm55, %v4112, %v4114
  %v4120 = vsel %vm55, %v4114, %v4116
  %v4121 = vsel %vm55, %v4116, %v4118
  %v4127 = vmul.f32 %v4081, %v4112
  %v4128 = vmul.f32 %v4082, %v4119
  %v4129 = vmul.f32 %v4083, %v4120
  %v4130 = vmul.f32 %v4084, %v4121
  %v4131 = vmul.f32 %v4085, %v4118
  %v4132 = vmul.f32 %v4086, %v4112
  %v4133 = vmul.f32 %v4087, %v4119
  %v4134 = vmul.f32 %v4088, %v4120
  %v4135 = vmul.f32 %v4089, %v4121
  %v4136 = vmul.f32 %v4090, %v4118
  %4147 = vrot.lane.b32.xlu0 %v4127, 120
  %v4148 = vpop.permute.xlu0 %4147
  %4149 = vrot.lane.b32.xlu0 %v4128, 120
  %v4150 = vpop.permute.xlu0 %4149
  %4151 = vrot.lane.b32.xlu0 %v4129, 120
  %v4152 = vpop.permute.xlu0 %4151
  %4153 = vrot.lane.b32.xlu0 %v4130, 120
  %v4154 = vpop.permute.xlu0 %4153
  %4155 = vrot.lane.b32.xlu0 %v4131, 120
  %v4156 = vpop.permute.xlu0 %4155
  %4157 = vrot.lane.b32.xlu0 %v4132, 120
  %v4158 = vpop.permute.xlu0 %4157
  %4159 = vrot.lane.b32.xlu0 %v4133, 120
  %v4160 = vpop.permute.xlu0 %4159
  %4161 = vrot.lane.b32.xlu0 %v4134, 120
  %v4162 = vpop.permute.xlu0 %4161
  %4163 = vrot.lane.b32.xlu0 %v4135, 120
  %v4164 = vpop.permute.xlu0 %4163
  %4165 = vrot.lane.b32.xlu0 %v4136, 120
  %v4166 = vpop.permute.xlu0 %4165
  %v4167 = vsel %vm187, %v4148, %v4150
  %v4168 = vsel %vm187, %v4150, %v4152
  %v4169 = vsel %vm187, %v4152, %v4154
  %v4170 = vsel %vm187, %v4154, %v4156
  %v4171 = vsel %vm187, %v4158, %v4160
  %v4172 = vsel %vm187, %v4160, %v4162
  %v4173 = vsel %vm187, %v4162, %v4164
  %v4174 = vsel %vm187, %v4164, %v4166
  %4183 = vst [vmem:[#allocation3 + $0x1c0] sm:$0xff] %v4167
  %4184 = vst [vmem:[#allocation3 + $0x1c8] sm:$0xff] %v4168
  %4185 = vst [vmem:[#allocation3 + $0x1d0] sm:$0xff] %v4169
  %4186 = vst [vmem:[#allocation3 + $0x1d8] sm:$0xff] %v4170
  %4187 = vst [vmem:[#allocation3 + $0x1e0] sm:$0xff] %v4171
  %4188 = vst [vmem:[#allocation3 + $0x1e8] sm:$0xff] %v4172
  %4189 = vst [vmem:[#allocation3 + $0x1f0] sm:$0xff] %v4173
  %4190 = vst [vmem:[#allocation3 + $0x1f8] sm:$0xff] %v4174
  %v4191 = vld [vmem:[#allocation2 + $0x10] sm:$0xff]
  %v4192 = vld [vmem:[#allocation2 + $0x18] sm:$0xff]
  %v4193 = vld [vmem:[#allocation2 + $0x20] sm:$0xff]
  %v4194 = vld [vmem:[#allocation2 + $0x28] sm:$0xff]
  %v4195 = vld [vmem:[#allocation2 + $0x30] sm:$0xff]
  %v4196 = vld [vmem:[#allocation2 + $0x48] sm:$0xff]
  %v4197 = vld [vmem:[#allocation2 + $0x50] sm:$0xff]
  %v4198 = vld [vmem:[#allocation2 + $0x58] sm:$0xff]
  %v4199 = vld [vmem:[#allocation2 + $0x60] sm:$0xff]
  %v4200 = vld [vmem:[#allocation2 + $0x68] sm:$0xff]
  %v4201 = vlaneseq
  %v4202 = vshrl.u32 %v4201, 7
  %v4203 = vsub.s32 0, %v4202
  %v4204 = vrot.slane %v3516, %v4203
  %v4205 = vlaneseq
  %v4206 = vshrl.u32 %v4205, 7
  %v4207 = vsub.s32 0, %v4206
  %v4208 = vrot.slane %v3517, %v4207
  %v4209 = vlaneseq
  %v4210 = vshrl.u32 %v4209, 7
  %v4211 = vsub.s32 0, %v4210
  %v4212 = vrot.slane %v3518, %v4211
  %v4213 = vlaneseq
  %v4214 = vshrl.u32 %v4213, 7
  %v4215 = vsub.s32 0, %v4214
  %v4216 = vrot.slane %v3519, %v4215
  %4221 = vrot.lane.b32.xlu0 %v4204, 16
  %v4222 = vpop.permute.xlu0 %4221
  %4223 = vrot.lane.b32.xlu0 %v4208, 16
  %v4224 = vpop.permute.xlu0 %4223
  %4225 = vrot.lane.b32.xlu0 %v4212, 16
  %v4226 = vpop.permute.xlu0 %4225
  %4227 = vrot.lane.b32.xlu0 %v4216, 16
  %v4228 = vpop.permute.xlu0 %4227
  %v4229 = vsel %vm32, %v4222, %v4224
  %v4230 = vsel %vm32, %v4224, %v4226
  %v4231 = vsel %vm32, %v4226, %v4228
  %v4237 = vmul.f32 %v4191, %v4222
  %v4238 = vmul.f32 %v4192, %v4229
  %v4239 = vmul.f32 %v4193, %v4230
  %v4240 = vmul.f32 %v4194, %v4231
  %v4241 = vmul.f32 %v4195, %v4228
  %v4242 = vmul.f32 %v4196, %v4222
  %v4243 = vmul.f32 %v4197, %v4229
  %v4244 = vmul.f32 %v4198, %v4230
  %v4245 = vmul.f32 %v4199, %v4231
  %v4246 = vmul.f32 %v4200, %v4228
  %4257 = vrot.lane.b32.xlu0 %v4237, 112
  %v4258 = vpop.permute.xlu0 %4257
  %4259 = vrot.lane.b32.xlu0 %v4238, 112
  %v4260 = vpop.permute.xlu0 %4259
  %4261 = vrot.lane.b32.xlu0 %v4239, 112
  %v4262 = vpop.permute.xlu0 %4261
  %4263 = vrot.lane.b32.xlu0 %v4240, 112
  %v4264 = vpop.permute.xlu0 %4263
  %4265 = vrot.lane.b32.xlu0 %v4241, 112
  %v4266 = vpop.permute.xlu0 %4265
  %4267 = vrot.lane.b32.xlu0 %v4242, 112
  %v4268 = vpop.permute.xlu0 %4267
  %4269 = vrot.lane.b32.xlu0 %v4243, 112
  %v4270 = vpop.permute.xlu0 %4269
  %4271 = vrot.lane.b32.xlu0 %v4244, 112
  %v4272 = vpop.permute.xlu0 %4271
  %4273 = vrot.lane.b32.xlu0 %v4245, 112
  %v4274 = vpop.permute.xlu0 %4273
  %4275 = vrot.lane.b32.xlu0 %v4246, 112
  %v4276 = vpop.permute.xlu0 %4275
  %v4277 = vsel %vm3756, %v4258, %v4260
  %v4278 = vsel %vm3756, %v4260, %v4262
  %v4279 = vsel %vm3756, %v4262, %v4264
  %v4280 = vsel %vm3756, %v4264, %v4266
  %v4281 = vsel %vm3756, %v4268, %v4270
  %v4282 = vsel %vm3756, %v4270, %v4272
  %v4283 = vsel %vm3756, %v4272, %v4274
  %v4284 = vsel %vm3756, %v4274, %v4276
  %4293 = vst [vmem:[#allocation3 + $0x200] sm:$0xff] %v4277
  %4294 = vst [vmem:[#allocation3 + $0x208] sm:$0xff] %v4278
  %4295 = vst [vmem:[#allocation3 + $0x210] sm:$0xff] %v4279
  %4296 = vst [vmem:[#allocation3 + $0x218] sm:$0xff] %v4280
  %4297 = vst [vmem:[#allocation3 + $0x220] sm:$0xff] %v4281
  %4298 = vst [vmem:[#allocation3 + $0x228] sm:$0xff] %v4282
  %4299 = vst [vmem:[#allocation3 + $0x230] sm:$0xff] %v4283
  %4300 = vst [vmem:[#allocation3 + $0x238] sm:$0xff] %v4284
  %s4301 = scalar_lea.vmem %s1, 192
  %v4302 = vld [vmem:[%s4301] sm:$0xff]
  %v4303 = vld [vmem:[%s4301 + $0x8] sm:$0xff]
  %v4304 = vld [vmem:[%s4301 + $0x10] sm:$0xff]
  %v4305 = vld [vmem:[%s4301 + $0x18] sm:$0xff]
  %v4306 = vld [vmem:[%s4301 + $0x20] sm:$0xff]
  %v4307 = vld [vmem:[%s4301 + $0x28] sm:$0xff]
  %v4308 = vld [vmem:[%s4301 + $0x30] sm:$0xff]
  %v4309 = vld [vmem:[%s4301 + $0x38] sm:$0xff]
  %v4310 = vld [vmem:[#allocation3] sm:$0xff]
  %v4311 = vld [vmem:[#allocation3 + $0x8] sm:$0xff]
  %v4312 = vld [vmem:[#allocation3 + $0x10] sm:$0xff]
  %v4313 = vld [vmem:[#allocation3 + $0x18] sm:$0xff]
  %v4314 = vld [vmem:[#allocation3 + $0x20] sm:$0xff]
  %v4315 = vld [vmem:[#allocation3 + $0x28] sm:$0xff]
  %v4316 = vld [vmem:[#allocation3 + $0x30] sm:$0xff]
  %v4317 = vld [vmem:[#allocation3 + $0x38] sm:$0xff]
  %v4318 = vld [vmem:[#allocation3 + $0x40] sm:$0xff]
  %v4319 = vld [vmem:[#allocation3 + $0x48] sm:$0xff]
  %v4320 = vld [vmem:[#allocation3 + $0x50] sm:$0xff]
  %v4321 = vld [vmem:[#allocation3 + $0x58] sm:$0xff]
  %v4322 = vld [vmem:[#allocation3 + $0x60] sm:$0xff]
  %v4323 = vld [vmem:[#allocation3 + $0x68] sm:$0xff]
  %v4324 = vld [vmem:[#allocation3 + $0x70] sm:$0xff]
  %v4325 = vld [vmem:[#allocation3 + $0x78] sm:$0xff]
  %v4326 = vld [vmem:[#allocation3 + $0x80] sm:$0xff]
  %v4327 = vld [vmem:[#allocation3 + $0x88] sm:$0xff]
  %v4328 = vld [vmem:[#allocation3 + $0x90] sm:$0xff]
  %v4329 = vld [vmem:[#allocation3 + $0x98] sm:$0xff]
  %v4330 = vld [vmem:[#allocation3 + $0xa0] sm:$0xff]
  %v4331 = vld [vmem:[#allocation3 + $0xa8] sm:$0xff]
  %v4332 = vld [vmem:[#allocation3 + $0xb0] sm:$0xff]
  %v4333 = vld [vmem:[#allocation3 + $0xb8] sm:$0xff]
  %v4334 = vld [vmem:[#allocation3 + $0xc0] sm:$0xff]
  %v4335 = vld [vmem:[#allocation3 + $0xc8] sm:$0xff]
  %v4336 = vld [vmem:[#allocation3 + $0xd0] sm:$0xff]
  %v4337 = vld [vmem:[#allocation3 + $0xd8] sm:$0xff]
  %v4338 = vld [vmem:[#allocation3 + $0xe0] sm:$0xff]
  %v4339 = vld [vmem:[#allocation3 + $0xe8] sm:$0xff]
  %v4340 = vld [vmem:[#allocation3 + $0xf0] sm:$0xff]
  %v4341 = vld [vmem:[#allocation3 + $0xf8] sm:$0xff]
  %v4342 = vld [vmem:[#allocation3 + $0x100] sm:$0xff]
  %v4343 = vld [vmem:[#allocation3 + $0x108] sm:$0xff]
  %v4344 = vld [vmem:[#allocation3 + $0x110] sm:$0xff]
  %v4345 = vld [vmem:[#allocation3 + $0x118] sm:$0xff]
  %v4346 = vld [vmem:[#allocation3 + $0x120] sm:$0xff]
  %v4347 = vld [vmem:[#allocation3 + $0x128] sm:$0xff]
  %v4348 = vld [vmem:[#allocation3 + $0x130] sm:$0xff]
  %v4349 = vld [vmem:[#allocation3 + $0x138] sm:$0xff]
  %v4350 = vld [vmem:[#allocation3 + $0x140] sm:$0xff]
  %v4351 = vld [vmem:[#allocation3 + $0x148] sm:$0xff]
  %v4352 = vld [vmem:[#allocation3 + $0x150] sm:$0xff]
  %v4353 = vld [vmem:[#allocation3 + $0x158] sm:$0xff]
  %v4354 = vld [vmem:[#allocation3 + $0x160] sm:$0xff]
  %v4355 = vld [vmem:[#allocation3 + $0x168] sm:$0xff]
  %v4356 = vld [vmem:[#allocation3 + $0x170] sm:$0xff]
  %v4357 = vld [vmem:[#allocation3 + $0x178] sm:$0xff]
  %v4358 = vld [vmem:[#allocation3 + $0x180] sm:$0xff]
  %v4359 = vld [vmem:[#allocation3 + $0x188] sm:$0xff]
  %v4360 = vld [vmem:[#allocation3 + $0x190] sm:$0xff]
  %v4361 = vld [vmem:[#allocation3 + $0x198] sm:$0xff]
  %v4362 = vld [vmem:[#allocation3 + $0x1a0] sm:$0xff]
  %v4363 = vld [vmem:[#allocation3 + $0x1a8] sm:$0xff]
  %v4364 = vld [vmem:[#allocation3 + $0x1b0] sm:$0xff]
  %v4365 = vld [vmem:[#allocation3 + $0x1b8] sm:$0xff]
  %v4366 = vld [vmem:[#allocation3 + $0x1c0] sm:$0xff]
  %v4367 = vld [vmem:[#allocation3 + $0x1c8] sm:$0xff]
  %v4368 = vld [vmem:[#allocation3 + $0x1d0] sm:$0xff]
  %v4369 = vld [vmem:[#allocation3 + $0x1d8] sm:$0xff]
  %v4370 = vld [vmem:[#allocation3 + $0x1e0] sm:$0xff]
  %v4371 = vld [vmem:[#allocation3 + $0x1e8] sm:$0xff]
  %v4372 = vld [vmem:[#allocation3 + $0x1f0] sm:$0xff]
  %v4373 = vld [vmem:[#allocation3 + $0x1f8] sm:$0xff]
  %v4374 = vld [vmem:[#allocation3 + $0x200] sm:$0xff]
  %v4375 = vld [vmem:[#allocation3 + $0x208] sm:$0xff]
  %v4376 = vld [vmem:[#allocation3 + $0x210] sm:$0xff]
  %v4377 = vld [vmem:[#allocation3 + $0x218] sm:$0xff]
  %v4378 = vld [vmem:[#allocation3 + $0x220] sm:$0xff]
  %v4379 = vld [vmem:[#allocation3 + $0x228] sm:$0xff]
  %v4380 = vld [vmem:[#allocation3 + $0x230] sm:$0xff]
  %v4381 = vld [vmem:[#allocation3 + $0x238] sm:$0xff]
  %v4383 = vsel %vm32, %v4303, 0
  %v4386 = vsel %vm32, %v4305, 0
  %v4389 = vsel %vm32, %v4307, 0
  %v4392 = vsel %vm32, %v4309, 0
  %4394 = vmatprep.subr.mxu0 %v4371
  %4395 = vmatpush1.msra.mxu0 %v4370
  %4396 = vmatprep.subr.mxu0 %v4367
  %4397 = vmatpush1.msra.mxu0 %v4366
  %4398 = vmatprep.subr.mxu0 %v4363
  %4399 = vmatpush1.msra.mxu0 %v4362
  %4400 = vmatprep.subr.mxu0 %v4359
  %4401 = vmatpush1.msra.mxu0 %v4358
  %4402 = vmatprep.subr.mxu0 %v4355
  %4403 = vmatpush1.msra.mxu0 %v4354
  %4404 = vmatprep.subr.mxu0 %v4351
  %4405 = vmatpush1.msra.mxu0 %v4350
  %4406 = vmatprep.subr.mxu0 %v4347
  %4407 = vmatpush1.msra.mxu0 %v4346
  %4408 = vmatprep.subr.mxu0 %v4343
  %4409 = vmatpush1.msra.mxu0 %v4342
  %4410 = vmatprep.subr.mxu0 %v4339
  %4411 = vmatpush1.msra.mxu0 %v4338
  %4412 = vmatprep.subr.mxu0 %v4335
  %4413 = vmatpush1.msra.mxu0 %v4334
  %4414 = vmatprep.subr.mxu0 %v4331
  %4415 = vmatpush1.msra.mxu0 %v4330
  %4416 = vmatprep.subr.mxu0 %v4327
  %4417 = vmatpush1.msra.mxu0 %v4326
  %4418 = vmatprep.subr.mxu0 %v4323
  %4419 = vmatpush1.msra.mxu0 %v4322
  %4420 = vmatprep.subr.mxu0 %v4319
  %4421 = vmatpush1.msra.mxu0 %v4318
  %4422 = vmatprep.subr.mxu0 %v4315
  %4423 = vmatpush1.msra.mxu0 %v4314
  %4424 = vmatprep.subr.mxu0 %v4311
  %4425 = vmatpush1.msra.mxu0 %v4310
  %4426 = vmatprep.subr.mxu0 0.0
  %4427 = vmatpush2.msra.mxu0 0.0
  %4428 = vmatprep.subr.mxu0 0.0
  %4429 = vmatpush2.msra.mxu0 0.0
  %4430 = vmatprep.subr.mxu0 0.0
  %4431 = vmatpush2.msra.mxu0 0.0
  %4432 = vmatprep.subr.mxu0 0.0
  %4433 = vmatpush2.msra.mxu0 0.0
  %4434 = vmatprep.subr.mxu0 0.0
  %4435 = vmatpush2.msra.mxu0 0.0
  %4436 = vmatprep.subr.mxu0 0.0
  %4437 = vmatpush2.msra.mxu0 0.0
  %4438 = vmatprep.subr.mxu0 0.0
  %4439 = vmatpush2.msra.mxu0 0.0
  %4440 = vmatprep.subr.mxu0 0.0
  %4441 = vmatpush2.msra.mxu0 0.0
  %4442 = vmatprep.subr.mxu0 0.0
  %4443 = vmatpush2.msra.mxu0 0.0
  %4444 = vmatprep.subr.mxu0 0.0
  %4445 = vmatpush2.msra.mxu0 0.0
  %4446 = vmatprep.subr.mxu0 0.0
  %4447 = vmatpush2.msra.mxu0 0.0
  %4448 = vmatprep.subr.mxu0 0.0
  %4449 = vmatpush2.msra.mxu0 0.0
  %4450 = vmatprep.subr.mxu0 0.0
  %4451 = vmatpush2.msra.mxu0 0.0
  %4452 = vmatprep.subr.mxu0 0.0
  %4453 = vmatpush2.msra.mxu0 0.0
  %4454 = vmatprep.subr.mxu0 %v4379
  %4455 = vmatpush2.msra.mxu0 %v4378
  %4456 = vmatprep.subr.mxu0 %v4375
  %4457 = vmatpush2.msra.mxu0 %v4374
  %4458 = vmatprep.mubr.f32.mxu0 %v4383
  %4459 = vmatmul.mubr.f32.gmra.mxu0 %v4302
  %v4460 = vpop.f32.mrf.mxu0
  %v4461 = vadd.f32 0.0, %v4460
  %v4462 = vpop.f32.mrf.mxu0
  %v4463 = vadd.f32 0.0, %v4462
  %4464 = vmatprep.mubr.f32.mxu0 %v4386
  %4465 = vmatmul.mubr.f32.gmra.mxu0 %v4304
  %v4466 = vpop.f32.mrf.mxu0
  %v4467 = vadd.f32 0.0, %v4466
  %v4468 = vpop.f32.mrf.mxu0
  %v4469 = vadd.f32 0.0, %v4468
  %4470 = vmatprep.mubr.f32.mxu0 %v4389
  %4471 = vmatmul.mubr.f32.gmra.mxu0 %v4306
  %v4472 = vpop.f32.mrf.mxu0
  %v4473 = vadd.f32 0.0, %v4472
  %v4474 = vpop.f32.mrf.mxu0
  %v4475 = vadd.f32 0.0, %v4474
  %4476 = vmatprep.mubr.f32.mxu0 %v4392
  %4477 = vmatmul.mubr.f32.gmra.mxu0 %v4308
  %v4478 = vpop.f32.mrf.mxu0
  %v4479 = vadd.f32 0.0, %v4478
  %v4480 = vpop.f32.mrf.mxu0
  %v4481 = vadd.f32 0.0, %v4480
  %4482 = vdwg.mxu0
  %4483 = vmatprep.subr.mxu0 %v4373
  %4484 = vmatpush1.msra.mxu0 %v4372
  %4485 = vmatprep.subr.mxu0 %v4369
  %4486 = vmatpush1.msra.mxu0 %v4368
  %4487 = vmatprep.subr.mxu0 %v4365
  %4488 = vmatpush1.msra.mxu0 %v4364
  %4489 = vmatprep.subr.mxu0 %v4361
  %4490 = vmatpush1.msra.mxu0 %v4360
  %4491 = vmatprep.subr.mxu0 %v4357
  %4492 = vmatpush1.msra.mxu0 %v4356
  %4493 = vmatprep.subr.mxu0 %v4353
  %4494 = vmatpush1.msra.mxu0 %v4352
  %4495 = vmatprep.subr.mxu0 %v4349
  %4496 = vmatpush1.msra.mxu0 %v4348
  %4497 = vmatprep.subr.mxu0 %v4345
  %4498 = vmatpush1.msra.mxu0 %v4344
  %4499 = vmatprep.subr.mxu0 %v4341
  %4500 = vmatpush1.msra.mxu0 %v4340
  %4501 = vmatprep.subr.mxu0 %v4337
  %4502 = vmatpush1.msra.mxu0 %v4336
  %4503 = vmatprep.subr.mxu0 %v4333
  %4504 = vmatpush1.msra.mxu0 %v4332
  %4505 = vmatprep.subr.mxu0 %v4329
  %4506 = vmatpush1.msra.mxu0 %v4328
  %4507 = vmatprep.subr.mxu0 %v4325
  %4508 = vmatpush1.msra.mxu0 %v4324
  %4509 = vmatprep.subr.mxu0 %v4321
  %4510 = vmatpush1.msra.mxu0 %v4320
  %4511 = vmatprep.subr.mxu0 %v4317
  %4512 = vmatpush1.msra.mxu0 %v4316
  %4513 = vmatprep.subr.mxu0 %v4313
  %4514 = vmatpush1.msra.mxu0 %v4312
  %4515 = vmatprep.subr.mxu0 0.0
  %4516 = vmatpush2.msra.mxu0 0.0
  %4517 = vmatprep.subr.mxu0 0.0
  %4518 = vmatpush2.msra.mxu0 0.0
  %4519 = vmatprep.subr.mxu0 0.0
  %4520 = vmatpush2.msra.mxu0 0.0
  %4521 = vmatprep.subr.mxu0 0.0
  %4522 = vmatpush2.msra.mxu0 0.0
  %4523 = vmatprep.subr.mxu0 0.0
  %4524 = vmatpush2.msra.mxu0 0.0
  %4525 = vmatprep.subr.mxu0 0.0
  %4526 = vmatpush2.msra.mxu0 0.0
  %4527 = vmatprep.subr.mxu0 0.0
  %4528 = vmatpush2.msra.mxu0 0.0
  %4529 = vmatprep.subr.mxu0 0.0
  %4530 = vmatpush2.msra.mxu0 0.0
  %4531 = vmatprep.subr.mxu0 0.0
  %4532 = vmatpush2.msra.mxu0 0.0
  %4533 = vmatprep.subr.mxu0 0.0
  %4534 = vmatpush2.msra.mxu0 0.0
  %4535 = vmatprep.subr.mxu0 0.0
  %4536 = vmatpush2.msra.mxu0 0.0
  %4537 = vmatprep.subr.mxu0 0.0
  %4538 = vmatpush2.msra.mxu0 0.0
  %4539 = vmatprep.subr.mxu0 0.0
  %4540 = vmatpush2.msra.mxu0 0.0
  %4541 = vmatprep.subr.mxu0 0.0
  %4542 = vmatpush2.msra.mxu0 0.0
  %4543 = vmatprep.subr.mxu0 %v4381
  %4544 = vmatpush2.msra.mxu0 %v4380
  %4545 = vmatprep.subr.mxu0 %v4377
  %4546 = vmatpush2.msra.mxu0 %v4376
  %4547 = vmatprep.mubr.f32.mxu0 %v4383
  %4548 = vmatmul.mubr.f32.gmra.mxu0 %v4302
  %v4549 = vpop.f32.mrf.mxu0
  %v4550 = vadd.f32 0.0, %v4549
  %v4551 = vpop.f32.mrf.mxu0
  %v4552 = vadd.f32 0.0, %v4551
  %4553 = vmatprep.mubr.f32.mxu0 %v4386
  %4554 = vmatmul.mubr.f32.gmra.mxu0 %v4304
  %v4555 = vpop.f32.mrf.mxu0
  %v4556 = vadd.f32 0.0, %v4555
  %v4557 = vpop.f32.mrf.mxu0
  %v4558 = vadd.f32 0.0, %v4557
  %4559 = vmatprep.mubr.f32.mxu0 %v4389
  %4560 = vmatmul.mubr.f32.gmra.mxu0 %v4306
  %v4561 = vpop.f32.mrf.mxu0
  %v4562 = vadd.f32 0.0, %v4561
  %v4563 = vpop.f32.mrf.mxu0
  %v4564 = vadd.f32 0.0, %v4563
  %4565 = vmatprep.mubr.f32.mxu0 %v4392
  %4566 = vmatmul.mubr.f32.gmra.mxu0 %v4308
  %v4567 = vpop.f32.mrf.mxu0
  %v4568 = vadd.f32 0.0, %v4567
  %v4569 = vpop.f32.mrf.mxu0
  %v4570 = vadd.f32 0.0, %v4569
  %4571 = vdwg.mxu0
  %v4572 = vlaneseq
  %v4573 = vshrl.u32 %v4572, 7
  %v4574 = vsub.s32 1, %v4573
  %v4575 = vrot.slane %v3516, %v4574
  %v4576 = vlaneseq
  %v4577 = vshrl.u32 %v4576, 7
  %v4578 = vsub.s32 1, %v4577
  %v4579 = vrot.slane %v3517, %v4578
  %v4580 = vlaneseq
  %v4581 = vshrl.u32 %v4580, 7
  %v4582 = vsub.s32 1, %v4581
  %v4583 = vrot.slane %v3518, %v4582
  %v4584 = vlaneseq
  %v4585 = vshrl.u32 %v4584, 7
  %v4586 = vsub.s32 1, %v4585
  %v4587 = vrot.slane %v3519, %v4586
  %v4588 = vmul.f32 %v4461, %v4575
  %v4589 = vmul.f32 %v4463, %v4579
  %v4590 = vmul.f32 %v4550, %v4583
  %v4591 = vmul.f32 %v4552, %v4587
  %v4592 = vmul.f32 %v4467, %v4575
  %v4593 = vmul.f32 %v4469, %v4579
  %v4594 = vmul.f32 %v4556, %v4583
  %v4595 = vmul.f32 %v4558, %v4587
  %v4596 = vmul.f32 %v4473, %v4575
  %v4597 = vmul.f32 %v4475, %v4579
  %v4598 = vmul.f32 %v4562, %v4583
  %v4599 = vmul.f32 %v4564, %v4587
  %v4600 = vmul.f32 %v4479, %v4575
  %v4601 = vmul.f32 %v4481, %v4579
  %v4602 = vmul.f32 %v4568, %v4583
  %v4603 = vmul.f32 %v4570, %v4587
  %v4604 = vadd.f32 %v4588, %v4589
  %v4605 = vadd.f32 %v4604, %v4590
  %v4606 = vadd.f32 %v4605, %v4591
  %4607 = vadd.xlane.f32.xlu0 %v4606
  %v4608 = vpop.xlane.xlu0 %4607
  %v4609 = vadd.f32 %v4592, %v4593
  %v4610 = vadd.f32 %v4609, %v4594
  %v4611 = vadd.f32 %v4610, %v4595
  %4612 = vadd.xlane.f32.xlu0 %v4611
  %v4613 = vpop.xlane.xlu0 %4612
  %v4614 = vadd.f32 %v4596, %v4597
  %v4615 = vadd.f32 %v4614, %v4598
  %v4616 = vadd.f32 %v4615, %v4599
  %4617 = vadd.xlane.f32.xlu0 %v4616
  %v4618 = vpop.xlane.xlu0 %4617
  %v4619 = vadd.f32 %v4600, %v4601
  %v4620 = vadd.f32 %v4619, %v4602
  %v4621 = vadd.f32 %v4620, %v4603
  %4622 = vadd.xlane.f32.xlu0 %v4621
  %v4623 = vpop.xlane.xlu0 %4622
  %v4624 = vmul.f32 %v4608, 0.125
  %v4625 = vmul.f32 %v4613, 0.125
  %v4626 = vmul.f32 %v4618, 0.125
  %v4627 = vmul.f32 %v4623, 0.125
  %v4628 = vmul.f32 %v4588, %v4461
  %v4629 = vmul.f32 %v4589, %v4463
  %v4630 = vmul.f32 %v4590, %v4550
  %v4631 = vmul.f32 %v4591, %v4552
  %v4632 = vmul.f32 %v4592, %v4467
  %v4633 = vmul.f32 %v4593, %v4469
  %v4634 = vmul.f32 %v4594, %v4556
  %v4635 = vmul.f32 %v4595, %v4558
  %v4636 = vmul.f32 %v4596, %v4473
  %v4637 = vmul.f32 %v4597, %v4475
  %v4638 = vmul.f32 %v4598, %v4562
  %v4639 = vmul.f32 %v4599, %v4564
  %v4640 = vmul.f32 %v4600, %v4479
  %v4641 = vmul.f32 %v4601, %v4481
  %v4642 = vmul.f32 %v4602, %v4568
  %v4643 = vmul.f32 %v4603, %v4570
  %v4644 = vadd.f32 %v4628, %v4629
  %v4645 = vadd.f32 %v4644, %v4630
  %v4646 = vadd.f32 %v4645, %v4631
  %4647 = vadd.xlane.f32.xlu0 %v4646
  %v4648 = vpop.xlane.xlu0 %4647
  %v4649 = vadd.f32 %v4632, %v4633
  %v4650 = vadd.f32 %v4649, %v4634
  %v4651 = vadd.f32 %v4650, %v4635
  %4652 = vadd.xlane.f32.xlu0 %v4651
  %v4653 = vpop.xlane.xlu0 %4652
  %v4654 = vadd.f32 %v4636, %v4637
  %v4655 = vadd.f32 %v4654, %v4638
  %v4656 = vadd.f32 %v4655, %v4639
  %4657 = vadd.xlane.f32.xlu0 %v4656
  %v4658 = vpop.xlane.xlu0 %4657
  %v4659 = vadd.f32 %v4640, %v4641
  %v4660 = vadd.f32 %v4659, %v4642
  %v4661 = vadd.f32 %v4660, %v4643
  %4662 = vadd.xlane.f32.xlu0 %v4661
  %v4663 = vpop.xlane.xlu0 %4662
  %v4664 = vmul.f32 %v4648, 0.125
  %v4665 = vmul.f32 %v4653, 0.125
  %v4666 = vmul.f32 %v4658, 0.125
  %v4667 = vmul.f32 %v4663, 0.125
  %v4668 = vmul.f32 %v4624, %v4624
  %v4669 = vmul.f32 %v4625, %v4625
  %v4670 = vmul.f32 %v4626, %v4626
  %v4671 = vmul.f32 %v4627, %v4627
  %v4672 = vsub.f32 %v4664, %v4668
  %v4673 = vsub.f32 %v4665, %v4669
  %v4674 = vsub.f32 %v4666, %v4670
  %v4675 = vsub.f32 %v4667, %v4671
  %v4676 = vld [vmem:[%s3 + $0x1c] sm:$0xff]
  %v4677 = vld [vmem:[%s3 + $0x24] sm:$0xff]
  %v4678 = vld [vmem:[%s3 + $0x2c] sm:$0xff]
  %v4679 = vld [vmem:[%s3 + $0x34] sm:$0xff]
  %v4680 = vadd.f32 %v4672, 1e-05
  %v4681 = vadd.f32 %v4673, 1e-05
  %v4682 = vadd.f32 %v4674, 1e-05
  %v4683 = vadd.f32 %v4675, 1e-05
  %v4684 = vrsqrt.pop %v4680
  %v4685 = vrsqrt.pop %v4681
  %v4686 = vrsqrt.pop %v4682
  %v4687 = vrsqrt.pop %v4683
  %v4688 = vmul.f32 %v4676, %v4684
  %v4689 = vmul.f32 %v4677, %v4685
  %v4690 = vmul.f32 %v4678, %v4686
  %v4691 = vmul.f32 %v4679, %v4687
  %v4692 = vmul.f32 %v4688, %v4624
  %v4693 = vmul.f32 %v4689, %v4625
  %v4694 = vmul.f32 %v4690, %v4626
  %v4695 = vmul.f32 %v4691, %v4627
  %4700 = vrot.lane.b32.xlu0 %v4692, 1
  %v4701 = vpop.permute.xlu0 %4700
  %4702 = vrot.lane.b32.xlu0 %v4693, 1
  %v4703 = vpop.permute.xlu0 %4702
  %4704 = vrot.lane.b32.xlu0 %v4694, 1
  %v4705 = vpop.permute.xlu0 %4704
  %4706 = vrot.lane.b32.xlu0 %v4695, 1
  %v4707 = vpop.permute.xlu0 %4706
  %v4712 = vsub.f32 %v4676, %v4701
  %v4713 = vsub.f32 %v4677, %v4703
  %v4714 = vsub.f32 %v4678, %v4705
  %v4715 = vsub.f32 %v4679, %v4707
  %4717 = vset.pattern.permute.xlu0 0
  %4718 = vperm.xlu0 %4717, %v4688
  %v4719 = vpop.permute.xlu0 %4718
  %4722 = vset.pattern.permute.xlu0 0
  %4723 = vperm.xlu0 %4722, %v4689
  %v4724 = vpop.permute.xlu0 %4723
  %4727 = vset.pattern.permute.xlu0 0
  %4728 = vperm.xlu0 %4727, %v4690
  %v4729 = vpop.permute.xlu0 %4728
  %4732 = vset.pattern.permute.xlu0 0
  %4733 = vperm.xlu0 %4732, %v4691
  %v4734 = vpop.permute.xlu0 %4733
  %v4736 = vmul.f32 %v4719, %v4461
  %v4737 = vmul.f32 %v4719, %v4463
  %v4738 = vmul.f32 %v4719, %v4550
  %v4739 = vmul.f32 %v4719, %v4552
  %v4740 = vmul.f32 %v4724, %v4467
  %v4741 = vmul.f32 %v4724, %v4469
  %v4742 = vmul.f32 %v4724, %v4556
  %v4743 = vmul.f32 %v4724, %v4558
  %v4744 = vmul.f32 %v4729, %v4473
  %v4745 = vmul.f32 %v4729, %v4475
  %v4746 = vmul.f32 %v4729, %v4562
  %v4747 = vmul.f32 %v4729, %v4564
  %v4748 = vmul.f32 %v4734, %v4479
  %v4749 = vmul.f32 %v4734, %v4481
  %v4750 = vmul.f32 %v4734, %v4568
  %v4751 = vmul.f32 %v4734, %v4570
  %4753 = vset.pattern.permute.xlu0 1
  %4754 = vperm.xlu0 %4753, %v4712
  %v4755 = vpop.permute.xlu0 %4754
  %4758 = vset.pattern.permute.xlu0 1
  %4759 = vperm.xlu0 %4758, %v4713
  %v4760 = vpop.permute.xlu0 %4759
  %4763 = vset.pattern.permute.xlu0 1
  %4764 = vperm.xlu0 %4763, %v4714
  %v4765 = vpop.permute.xlu0 %4764
  %4768 = vset.pattern.permute.xlu0 1
  %4769 = vperm.xlu0 %4768, %v4715
  %v4770 = vpop.permute.xlu0 %4769
  %v4772 = vadd.f32 %v4736, %v4755
  %v4773 = vadd.f32 %v4737, %v4755
  %v4774 = vadd.f32 %v4738, %v4755
  %v4775 = vadd.f32 %v4739, %v4755
  %v4776 = vadd.f32 %v4740, %v4760
  %v4777 = vadd.f32 %v4741, %v4760
  %v4778 = vadd.f32 %v4742, %v4760
  %v4779 = vadd.f32 %v4743, %v4760
  %v4780 = vadd.f32 %v4744, %v4765
  %v4781 = vadd.f32 %v4745, %v4765
  %v4782 = vadd.f32 %v4746, %v4765
  %v4783 = vadd.f32 %v4747, %v4765
  %v4784 = vadd.f32 %v4748, %v4770
  %v4785 = vadd.f32 %v4749, %v4770
  %v4786 = vadd.f32 %v4750, %v4770
  %v4787 = vadd.f32 %v4751, %v4770
  %v4788 = vmax.f32 %v4772, 0.0
  %v4789 = vmax.f32 %v4773, 0.0
  %v4790 = vmax.f32 %v4774, 0.0
  %v4791 = vmax.f32 %v4775, 0.0
  %v4792 = vmax.f32 %v4776, 0.0
  %v4793 = vmax.f32 %v4777, 0.0
  %v4794 = vmax.f32 %v4778, 0.0
  %v4795 = vmax.f32 %v4779, 0.0
  %v4796 = vmax.f32 %v4780, 0.0
  %v4797 = vmax.f32 %v4781, 0.0
  %v4798 = vmax.f32 %v4782, 0.0
  %v4799 = vmax.f32 %v4783, 0.0
  %v4800 = vmax.f32 %v4784, 0.0
  %v4801 = vmax.f32 %v4785, 0.0
  %v4802 = vmax.f32 %v4786, 0.0
  %v4803 = vmax.f32 %v4787, 0.0
  %v4804 = vld [vmem:[%s4] sm:$0xff]
  %v4805 = vld [vmem:[%s4 + $0x8] sm:$0xff]
  %v4806 = vld [vmem:[%s4 + $0x10] sm:$0xff]
  %v4807 = vld [vmem:[%s4 + $0x18] sm:$0xff]
  %v4808 = vld [vmem:[%s4 + $0x20] sm:$0xff]
  %v4809 = vld [vmem:[%s4 + $0x28] sm:$0xff]
  %v4810 = vld [vmem:[%s4 + $0x30] sm:$0xff]
  %v4811 = vld [vmem:[%s4 + $0x38] sm:$0xff]
  %v4812 = vld [vmem:[%s4 + $0x40] sm:$0xff]
  %v4813 = vld [vmem:[%s4 + $0x48] sm:$0xff]
  %v4814 = vld [vmem:[%s4 + $0x50] sm:$0xff]
  %v4815 = vld [vmem:[%s4 + $0x58] sm:$0xff]
  %v4816 = vld [vmem:[%s4 + $0x60] sm:$0xff]
  %v4817 = vld [vmem:[%s4 + $0x68] sm:$0xff]
  %v4818 = vld [vmem:[%s4 + $0x70] sm:$0xff]
  %v4819 = vld [vmem:[%s4 + $0x78] sm:$0xff]
  %v4820 = vld [vmem:[%s4 + $0x80] sm:$0xff]
  %v4821 = vld [vmem:[%s4 + $0x88] sm:$0xff]
  %v4822 = vld [vmem:[%s4 + $0x90] sm:$0xff]
  %v4823 = vld [vmem:[%s4 + $0x98] sm:$0xff]
  %v4824 = vld [vmem:[%s4 + $0xa0] sm:$0xff]
  %v4825 = vld [vmem:[%s4 + $0xa8] sm:$0xff]
  %v4826 = vld [vmem:[%s4 + $0xb0] sm:$0xff]
  %v4827 = vld [vmem:[%s4 + $0xb8] sm:$0xff]
  %v4828 = vld [vmem:[%s4 + $0xc0] sm:$0xff]
  %v4829 = vld [vmem:[%s4 + $0xc8] sm:$0xff]
  %v4830 = vld [vmem:[%s4 + $0xd0] sm:$0xff]
  %v4831 = vld [vmem:[%s4 + $0xd8] sm:$0xff]
  %v4832 = vld [vmem:[%s4 + $0xe0] sm:$0xff]
  %v4833 = vld [vmem:[%s4 + $0xe8] sm:$0xff]
  %v4834 = vld [vmem:[%s4 + $0xf0] sm:$0xff]
  %v4835 = vld [vmem:[%s4 + $0xf8] sm:$0xff]
  %v4836 = vld [vmem:[%s4 + $0x100] sm:$0xff]
  %v4837 = vld [vmem:[%s4 + $0x108] sm:$0xff]
  %v4838 = vld [vmem:[%s4 + $0x110] sm:$0xff]
  %v4839 = vld [vmem:[%s4 + $0x118] sm:$0xff]
  %v4840 = vld [vmem:[%s4 + $0x120] sm:$0xff]
  %v4841 = vld [vmem:[%s4 + $0x128] sm:$0xff]
  %v4842 = vld [vmem:[%s4 + $0x130] sm:$0xff]
  %v4843 = vld [vmem:[%s4 + $0x138] sm:$0xff]
  %v4844 = vld [vmem:[%s4 + $0x140] sm:$0xff]
  %v4845 = vld [vmem:[%s4 + $0x148] sm:$0xff]
  %v4846 = vld [vmem:[%s4 + $0x150] sm:$0xff]
  %v4847 = vld [vmem:[%s4 + $0x158] sm:$0xff]
  %v4848 = vld [vmem:[%s4 + $0x160] sm:$0xff]
  %v4849 = vld [vmem:[%s4 + $0x168] sm:$0xff]
  %v4850 = vld [vmem:[%s4 + $0x170] sm:$0xff]
  %v4851 = vld [vmem:[%s4 + $0x178] sm:$0xff]
  %v4852 = vld [vmem:[%s4 + $0x180] sm:$0xff]
  %v4853 = vld [vmem:[%s4 + $0x188] sm:$0xff]
  %v4854 = vld [vmem:[%s4 + $0x190] sm:$0xff]
  %v4855 = vld [vmem:[%s4 + $0x198] sm:$0xff]
  %v4856 = vld [vmem:[%s4 + $0x1a0] sm:$0xff]
  %v4857 = vld [vmem:[%s4 + $0x1a8] sm:$0xff]
  %v4858 = vld [vmem:[%s4 + $0x1b0] sm:$0xff]
  %v4859 = vld [vmem:[%s4 + $0x1b8] sm:$0xff]
  %v4860 = vld [vmem:[%s4 + $0x1c0] sm:$0xff]
  %v4861 = vld [vmem:[%s4 + $0x1c8] sm:$0xff]
  %v4862 = vld [vmem:[%s4 + $0x1d0] sm:$0xff]
  %v4863 = vld [vmem:[%s4 + $0x1d8] sm:$0xff]
  %v4864 = vld [vmem:[%s4 + $0x1e0] sm:$0xff]
  %v4865 = vld [vmem:[%s4 + $0x1e8] sm:$0xff]
  %v4866 = vld [vmem:[%s4 + $0x1f0] sm:$0xff]
  %v4867 = vld [vmem:[%s4 + $0x1f8] sm:$0xff]
  %4868 = vmatprep.subr.mxu0 0.0
  %4869 = vmatpush1.msra.mxu0 %v4819
  %4870 = vmatprep.subr.mxu0 0.0
  %4871 = vmatpush1.msra.mxu0 %v4818
  %4872 = vmatprep.subr.mxu0 0.0
  %4873 = vmatpush1.msra.mxu0 %v4817
  %4874 = vmatprep.subr.mxu0 0.0
  %4875 = vmatpush1.msra.mxu0 %v4816
  %4876 = vmatprep.subr.mxu0 0.0
  %4877 = vmatpush1.msra.mxu0 %v4815
  %4878 = vmatprep.subr.mxu0 0.0
  %4879 = vmatpush1.msra.mxu0 %v4814
  %4880 = vmatprep.subr.mxu0 0.0
  %4881 = vmatpush1.msra.mxu0 %v4813
  %4882 = vmatprep.subr.mxu0 0.0
  %4883 = vmatpush1.msra.mxu0 %v4812
  %4884 = vmatprep.subr.mxu0 0.0
  %4885 = vmatpush1.msra.mxu0 %v4811
  %4886 = vmatprep.subr.mxu0 0.0
  %4887 = vmatpush1.msra.mxu0 %v4810
  %4888 = vmatprep.subr.mxu0 0.0
  %4889 = vmatpush1.msra.mxu0 %v4809
  %4890 = vmatprep.subr.mxu0 0.0
  %4891 = vmatpush1.msra.mxu0 %v4808
  %4892 = vmatprep.subr.mxu0 0.0
  %4893 = vmatpush1.msra.mxu0 %v4807
  %4894 = vmatprep.subr.mxu0 0.0
  %4895 = vmatpush1.msra.mxu0 %v4806
  %4896 = vmatprep.subr.mxu0 0.0
  %4897 = vmatpush1.msra.mxu0 %v4805
  %4898 = vmatprep.subr.mxu0 0.0
  %4899 = vmatpush1.msra.mxu0 %v4804
  %4900 = vmatprep.subr.mxu0 0.0
  %4901 = vmatpush2.msra.mxu0 %v4835
  %4902 = vmatprep.subr.mxu0 0.0
  %4903 = vmatpush2.msra.mxu0 %v4834
  %4904 = vmatprep.subr.mxu0 0.0
  %4905 = vmatpush2.msra.mxu0 %v4833
  %4906 = vmatprep.subr.mxu0 0.0
  %4907 = vmatpush2.msra.mxu0 %v4832
  %4908 = vmatprep.subr.mxu0 0.0
  %4909 = vmatpush2.msra.mxu0 %v4831
  %4910 = vmatprep.subr.mxu0 0.0
  %4911 = vmatpush2.msra.mxu0 %v4830
  %4912 = vmatprep.subr.mxu0 0.0
  %4913 = vmatpush2.msra.mxu0 %v4829
  %4914 = vmatprep.subr.mxu0 0.0
  %4915 = vmatpush2.msra.mxu0 %v4828
  %4916 = vmatprep.subr.mxu0 0.0
  %4917 = vmatpush2.msra.mxu0 %v4827
  %4918 = vmatprep.subr.mxu0 0.0
  %4919 = vmatpush2.msra.mxu0 %v4826
  %4920 = vmatprep.subr.mxu0 0.0
  %4921 = vmatpush2.msra.mxu0 %v4825
  %4922 = vmatprep.subr.mxu0 0.0
  %4923 = vmatpush2.msra.mxu0 %v4824
  %4924 = vmatprep.subr.mxu0 0.0
  %4925 = vmatpush2.msra.mxu0 %v4823
  %4926 = vmatprep.subr.mxu0 0.0
  %4927 = vmatpush2.msra.mxu0 %v4822
  %4928 = vmatprep.subr.mxu0 0.0
  %4929 = vmatpush2.msra.mxu0 %v4821
  %4930 = vmatprep.subr.mxu0 0.0
  %4931 = vmatpush2.msra.mxu0 %v4820
  %4932 = vmatprep.mubr.f32.mxu0 %v4789
  %4933 = vmatmul.mubr.f32.gmra.mxu0 %v4788
  %v4934 = vpop.f32.mrf.mxu0
  %v4935 = vadd.f32 0.0, %v4934
  %v4936 = vpop.f32.mrf.mxu0
  %4937 = vmatprep.mubr.f32.mxu0 %v4793
  %4938 = vmatmul.mubr.f32.gmra.mxu0 %v4792
  %v4939 = vpop.f32.mrf.mxu0
  %v4940 = vadd.f32 0.0, %v4939
  %v4941 = vpop.f32.mrf.mxu0
  %4942 = vmatprep.mubr.f32.mxu0 %v4797
  %4943 = vmatmul.mubr.f32.gmra.mxu0 %v4796
  %v4944 = vpop.f32.mrf.mxu0
  %v4945 = vadd.f32 0.0, %v4944
  %v4946 = vpop.f32.mrf.mxu0
  %4947 = vmatprep.mubr.f32.mxu0 %v4801
  %4948 = vmatmul.mubr.f32.gmra.mxu0 %v4800
  %v4949 = vpop.f32.mrf.mxu0
  %v4950 = vadd.f32 0.0, %v4949
  %v4951 = vpop.f32.mrf.mxu0
  %4952 = vdwg.mxu0
  %4953 = vmatprep.subr.mxu0 0.0
  %4954 = vmatpush1.msra.mxu0 %v4851
  %4955 = vmatprep.subr.mxu0 0.0
  %4956 = vmatpush1.msra.mxu0 %v4850
  %4957 = vmatprep.subr.mxu0 0.0
  %4958 = vmatpush1.msra.mxu0 %v4849
  %4959 = vmatprep.subr.mxu0 0.0
  %4960 = vmatpush1.msra.mxu0 %v4848
  %4961 = vmatprep.subr.mxu0 0.0
  %4962 = vmatpush1.msra.mxu0 %v4847
  %4963 = vmatprep.subr.mxu0 0.0
  %4964 = vmatpush1.msra.mxu0 %v4846
  %4965 = vmatprep.subr.mxu0 0.0
  %4966 = vmatpush1.msra.mxu0 %v4845
  %4967 = vmatprep.subr.mxu0 0.0
  %4968 = vmatpush1.msra.mxu0 %v4844
  %4969 = vmatprep.subr.mxu0 0.0
  %4970 = vmatpush1.msra.mxu0 %v4843
  %4971 = vmatprep.subr.mxu0 0.0
  %4972 = vmatpush1.msra.mxu0 %v4842
  %4973 = vmatprep.subr.mxu0 0.0
  %4974 = vmatpush1.msra.mxu0 %v4841
  %4975 = vmatprep.subr.mxu0 0.0
  %4976 = vmatpush1.msra.mxu0 %v4840
  %4977 = vmatprep.subr.mxu0 0.0
  %4978 = vmatpush1.msra.mxu0 %v4839
  %4979 = vmatprep.subr.mxu0 0.0
  %4980 = vmatpush1.msra.mxu0 %v4838
  %4981 = vmatprep.subr.mxu0 0.0
  %4982 = vmatpush1.msra.mxu0 %v4837
  %4983 = vmatprep.subr.mxu0 0.0
  %4984 = vmatpush1.msra.mxu0 %v4836
  %4985 = vmatprep.subr.mxu0 0.0
  %4986 = vmatpush2.msra.mxu0 %v4867
  %4987 = vmatprep.subr.mxu0 0.0
  %4988 = vmatpush2.msra.mxu0 %v4866
  %4989 = vmatprep.subr.mxu0 0.0
  %4990 = vmatpush2.msra.mxu0 %v4865
  %4991 = vmatprep.subr.mxu0 0.0
  %4992 = vmatpush2.msra.mxu0 %v4864
  %4993 = vmatprep.subr.mxu0 0.0
  %4994 = vmatpush2.msra.mxu0 %v4863
  %4995 = vmatprep.subr.mxu0 0.0
  %4996 = vmatpush2.msra.mxu0 %v4862
  %4997 = vmatprep.subr.mxu0 0.0
  %4998 = vmatpush2.msra.mxu0 %v4861
  %4999 = vmatprep.subr.mxu0 0.0
  %5000 = vmatpush2.msra.mxu0 %v4860
  %5001 = vmatprep.subr.mxu0 0.0
  %5002 = vmatpush2.msra.mxu0 %v4859
  %5003 = vmatprep.subr.mxu0 0.0
  %5004 = vmatpush2.msra.mxu0 %v4858
  %5005 = vmatprep.subr.mxu0 0.0
  %5006 = vmatpush2.msra.mxu0 %v4857
  %5007 = vmatprep.subr.mxu0 0.0
  %5008 = vmatpush2.msra.mxu0 %v4856
  %5009 = vmatprep.subr.mxu0 0.0
  %5010 = vmatpush2.msra.mxu0 %v4855
  %5011 = vmatprep.subr.mxu0 0.0
  %5012 = vmatpush2.msra.mxu0 %v4854
  %5013 = vmatprep.subr.mxu0 0.0
  %5014 = vmatpush2.msra.mxu0 %v4853
  %5015 = vmatprep.subr.mxu0 0.0
  %5016 = vmatpush2.msra.mxu0 %v4852
  %5017 = vmatprep.mubr.f32.mxu0 %v4791
  %5018 = vmatmul.mubr.f32.gmra.mxu0 %v4790
  %v5019 = vpop.f32.mrf.mxu0
  %v5020 = vadd.f32 %v4935, %v5019
  %v5021 = vpop.f32.mrf.mxu0
  %5022 = vmatprep.mubr.f32.mxu0 %v4795
  %5023 = vmatmul.mubr.f32.gmra.mxu0 %v4794
  %v5024 = vpop.f32.mrf.mxu0
  %v5025 = vadd.f32 %v4940, %v5024
  %v5026 = vpop.f32.mrf.mxu0
  %5027 = vmatprep.mubr.f32.mxu0 %v4799
  %5028 = vmatmul.mubr.f32.gmra.mxu0 %v4798
  %v5029 = vpop.f32.mrf.mxu0
  %v5030 = vadd.f32 %v4945, %v5029
  %v5031 = vpop.f32.mrf.mxu0
  %5032 = vmatprep.mubr.f32.mxu0 %v4803
  %5033 = vmatmul.mubr.f32.gmra.mxu0 %v4802
  %v5034 = vpop.f32.mrf.mxu0
  %v5035 = vadd.f32 %v4950, %v5034
  %v5036 = vpop.f32.mrf.mxu0
  %5037 = vdwg.mxu0
  %v5038 = vld [vmem:[%s5] sm:$0xff]
  %v5039 = vld [vmem:[%s5 + $0x8] sm:$0x3]
  %v5040 = vld [vmem:[%s6] sm:$0xff]
  %v5041 = vld [vmem:[%s6 + $0x8] sm:$0x3]
  %5043 = vset.pattern.permute.xlu0 0
  %5044 = vperm.xlu0 %5043, %v5040
  %v5045 = vpop.permute.xlu0 %5044
  %5048 = vset.pattern.permute.xlu0 0
  %5049 = vperm.xlu0 %5048, %v5041
  %v5050 = vpop.permute.xlu0 %5049
  %vm5052 = vcmask 261120
  %v5054 = vsel %vm5052, %v5038, 0
  %v5057 = vsel %vm5052, %v5039, 0
  %5059 = vmatprep.subr.mxu0 0.0
  %5060 = vmatpush1.msra.mxu0 0.0
  %5061 = vmatprep.subr.mxu0 0.0
  %5062 = vmatpush1.msra.mxu0 0.0
  %5063 = vmatprep.subr.mxu0 0.0
  %5064 = vmatpush1.msra.mxu0 0.0
  %5065 = vmatprep.subr.mxu0 0.0
  %5066 = vmatpush1.msra.mxu0 0.0
  %5067 = vmatprep.subr.mxu0 0.0
  %5068 = vmatpush1.msra.mxu0 0.0
  %5069 = vmatprep.subr.mxu0 0.0
  %5070 = vmatpush1.msra.mxu0 0.0
  %5071 = vmatprep.subr.mxu0 0.0
  %5072 = vmatpush1.msra.mxu0 0.0
  %5073 = vmatprep.subr.mxu0 0.0
  %5074 = vmatpush1.msra.mxu0 0.0
  %5075 = vmatprep.subr.mxu0 0.0
  %5076 = vmatpush1.msra.mxu0 0.0
  %5077 = vmatprep.subr.mxu0 0.0
  %5078 = vmatpush1.msra.mxu0 0.0
  %5079 = vmatprep.subr.mxu0 0.0
  %5080 = vmatpush1.msra.mxu0 0.0
  %5081 = vmatprep.subr.mxu0 0.0
  %5082 = vmatpush1.msra.mxu0 0.0
  %5083 = vmatprep.subr.mxu0 0.0
  %5084 = vmatpush1.msra.mxu0 %v5035
  %5085 = vmatprep.subr.mxu0 0.0
  %5086 = vmatpush1.msra.mxu0 %v5030
  %5087 = vmatprep.subr.mxu0 0.0
  %5088 = vmatpush1.msra.mxu0 %v5025
  %5089 = vmatprep.subr.mxu0 0.0
  %5090 = vmatpush1.msra.mxu0 %v5020
  %5091 = vmatprep.subr.mxu0 0.0
  %5092 = vmatpush2.msra.mxu0 0.0
  %5093 = vmatprep.subr.mxu0 0.0
  %5094 = vmatpush2.msra.mxu0 0.0
  %5095 = vmatprep.subr.mxu0 0.0
  %5096 = vmatpush2.msra.mxu0 0.0
  %5097 = vmatprep.subr.mxu0 0.0
  %5098 = vmatpush2.msra.mxu0 0.0
  %5099 = vmatprep.subr.mxu0 0.0
  %5100 = vmatpush2.msra.mxu0 0.0
  %5101 = vmatprep.subr.mxu0 0.0
  %5102 = vmatpush2.msra.mxu0 0.0
  %5103 = vmatprep.subr.mxu0 0.0
  %5104 = vmatpush2.msra.mxu0 0.0
  %5105 = vmatprep.subr.mxu0 0.0
  %5106 = vmatpush2.msra.mxu0 0.0
  %5107 = vmatprep.subr.mxu0 0.0
  %5108 = vmatpush2.msra.mxu0 0.0
  %5109 = vmatprep.subr.mxu0 0.0
  %5110 = vmatpush2.msra.mxu0 0.0
  %5111 = vmatprep.subr.mxu0 0.0
  %5112 = vmatpush2.msra.mxu0 0.0
  %5113 = vmatprep.subr.mxu0 0.0
  %5114 = vmatpush2.msra.mxu0 0.0
  %5115 = vmatprep.subr.mxu0 0.0
  %5116 = vmatpush2.msra.mxu0 0.0
  %5117 = vmatprep.subr.mxu0 0.0
  %5118 = vmatpush2.msra.mxu0 0.0
  %5119 = vmatprep.subr.mxu0 0.0
  %5120 = vmatpush2.msra.mxu0 0.0
  %5121 = vmatprep.subr.mxu0 0.0
  %5122 = vmatpush2.msra.mxu0 0.0
  %5123 = vmatprep.mubr.f32.mxu0 0.0
  %5124 = vmatmul.mubr.f32.gmra.mxu0 %v5054
  %v5125 = vpop.f32.mrf.mxu0
  %v5126 = vadd.f32 %v5045, %v5125
  %v5127 = vpop.f32.mrf.mxu0
  %5128 = vmatprep.mubr.f32.mxu0 0.0
  %5129 = vmatmul.mubr.f32.gmra.mxu0 %v5057
  %v5130 = vpop.f32.mrf.mxu0
  %v5131 = vadd.f32 %v5050, %v5130
  %v5132 = vpop.f32.mrf.mxu0
  %5133 = vdwg.mxu0
  %vm5134 = vcmask 15360
  %5135 = vst.msk [vmem:[%s7] sm:$0xff] %vm5134, %v5126
  %vm5136 = vcmask 9216
  %5137 = vst.msk [vmem:[%s7 + $0x8] sm:$0x3] %vm5136, %v5131
  // Predicated region
  $region30: #{cnn_cifar_forward.1} parent=0 // pred_check
    _
  $region31: #{cnn_cifar_forward.1} parent=0 // pred_check_branch
    %5139 = sbr.rel (0) target = $region33
  $region32: #{cnn_cifar_forward.1} parent=0 // pred_region
    _
  $region33: #{cnn_cifar_forward.1} parent=0 // pred_fallthru
    _
  // Predicated region
  $region34: #{cnn_cifar_forward.1} parent=0 // pred_check
    _
  $region35: #{cnn_cifar_forward.1} parent=0 // pred_check_branch
    %5141 = sbr.rel (0) target = $region37
  $region36: #{cnn_cifar_forward.1} parent=0 // pred_region
    _
  $region37: #{cnn_cifar_forward.1} parent=0 // pred_fallthru
    _

</llo_original>
